<compile_context>
chip_gen: v7x
topology: tpu7x:2x2x1
jax: 0.10.0
libtpu: 0.0.40
codegen_flags: <defaults>
</compile_context>

<pallas_src>
import jax
import jax.numpy as jnp
from jax.experimental import pallas as pl
from jax.experimental.pallas import tpu as pltpu

KERNEL_SIZES = (3, 4, 5)
LANE, SUB = 128, 8


def _round_up(x, m):
    return (x + m - 1) // m * m


def _batch_spec(shape, tb):
    nd = len(shape)
    return pl.BlockSpec((tb,) + tuple(shape[1:]), lambda i: (i,) + (0,) * (nd - 1))


def _const_spec(shape):
    nd = len(shape)
    return pl.BlockSpec(tuple(shape), lambda i: (0,) * nd)


def _make_kernel(seq_len, kernel_sizes):
    """Builds the kernel body with the true sequence length baked in statically."""

    def kernel(x_ref, w3_ref, b3_ref, w4_ref, b4_ref, w5_ref, b5_ref,
               wf_ref, rb_ref, out_ref):
        tb, _, ep = x_ref.shape                      # (TB, LP, EP) bf16 block
        conv_refs = ((w3_ref, b3_ref), (w4_ref, b4_ref), (w5_ref, b5_ref))
        pooled = []
        for K, (w_ref, b_ref) in zip(kernel_sizes, conv_refs):
            F = w_ref.shape[-1]
            lout = seq_len - K + 1
            loutp = _round_up(lout, SUB)
            # K shifted-slice matmuls, single f32 accumulator (MRB-friendly on v7x).
            acc = None
            for k in range(K):
                xk = x_ref[:, k:k + loutp, :].reshape(tb * loutp, ep)     # bf16
                part = jnp.dot(xk, w_ref[k], preferred_element_type=jnp.float32)
                acc = part if acc is None else acc + part                 # f32
            acc = acc.reshape(tb, loutp, F)
            if loutp > lout:
                # Mask padded time rows (they mix in zero-padded x rows) before max.
                row = jax.lax.broadcasted_iota(jnp.int32, (tb, loutp, F), 1)
                acc = jnp.where(row < lout, acc, -jnp.inf)
            # Bias + ReLU AFTER the time max (commutes with max; Lp-fold less VPU work).
            pooled.append(jnp.maximum(jnp.max(acc, axis=1) + b_ref[...], 0.0))  # (TB, F)

        feat = jnp.concatenate(pooled, axis=1)                            # (TB, 3F) f32
        # fc1 folded into fc2; user/topic/bias contributions arrive as per-row bias.
        # TODO(synk): nn.Dropout(0.5) is identity at inference time; not applied here.
        out_ref[...] = (jnp.dot(feat.astype(jnp.bfloat16), wf_ref[...],
                                preferred_element_type=jnp.float32)
                        + rb_ref[...])                                    # (TB, NCP) f32

    return kernel


def textcnn_forward(emb, params, ue, te, *, block_b=128):
    w3, b3, w4, b4, w5, b5, w1, b1, w2, b2 = params
    B, L, E = emb.shape
    F = w3.shape[-1]
    FC1 = w1.shape[1]
    UT = ue.shape[1]
    NC = w2.shape[1]
    CF = len(KERNEL_SIZES) * F

    f32, bf16 = jnp.float32, jnp.bfloat16

    EP = _round_up(E, LANE)
    NCP = _round_up(NC, LANE)
    # LP must cover the largest shifted window k + round_up(Lout, 8).
    need = max((K - 1) + _round_up(L - K + 1, SUB) for K in KERNEL_SIZES)
    LP = _round_up(max(L, need), SUB)

    TB = _round_up(max(SUB, min(block_b, _round_up(B, SUB))), SUB)
    BP = _round_up(B, TB)

    # Raw embedding block: zero-pad batch, time and lane (contraction) dims; bf16.
    xpad = jnp.zeros((BP, LP, EP), bf16).at[:B, :L, :E].set(emb.astype(bf16))

    # Conv weights (K, E, F) zero-padded along E to EP, bf16; biases (1, F) f32.
    def pad_conv_w(w):
        K = w.shape[0]
        return jnp.zeros((K, EP, F), f32).at[:, :E, :].set(w).astype(bf16)

    w3p, w4p, w5p = pad_conv_w(w3), pad_conv_w(w4), pad_conv_w(w5)
    b3p = b3.reshape(1, F).astype(f32)
    b4p = b4.reshape(1, F).astype(f32)
    b5p = b5.reshape(1, F).astype(f32)

    # Fold fc1 into fc2 (no nonlinearity between them; dropout = identity).
    w2_u = w2[:UT]
    w2_h = w2[UT:UT + FC1]
    w2_t = w2[UT + FC1:]
    wfold = w1 @ w2_h                                                  # (3F, NC) f32
    bias_fold = b1.reshape(1, FC1) @ w2_h + b2.reshape(1, NC)          # (1, NC)  f32
    rowb = ue @ w2_u + te @ w2_t + bias_fold                           # (B, NC)  f32

    wfp = jnp.zeros((CF, NCP), f32).at[:, :NC].set(wfold).astype(bf16)
    rowbp = jnp.zeros((BP, NCP), f32).at[:B, :NC].set(rowb)

    kernel = _make_kernel(L, KERNEL_SIZES)

    in_specs = [
        _batch_spec(xpad.shape, TB),
        _const_spec(w3p.shape), _const_spec(b3p.shape),
        _const_spec(w4p.shape), _const_spec(b4p.shape),
        _const_spec(w5p.shape), _const_spec(b5p.shape),
        _const_spec(wfp.shape),
        _batch_spec(rowbp.shape, TB),
    ]

    out = pl.pallas_call(
        kernel,
        out_shape=jax.ShapeDtypeStruct((BP, NCP), f32),
        grid=(BP // TB,),
        in_specs=in_specs,
        out_specs=pl.BlockSpec((TB, NCP), lambda i: (i, 0)),
        compiler_params=pltpu.CompilerParams(
            dimension_semantics=("parallel",),
            # 48 MiB: well above the v5e 16 MiB scoped default, headroom on v7x's
            # 64 MiB physical VMEM; footprint at TB=128 is far below this.
            vmem_limit_bytes=48 * 1024 * 1024),
    )(xpad, w3p, b3p, w4p, b4p, w5p, b5p, wfp, rowbp)
    return out[:B, :NC]


def reference_forward(emb, params, ue, te):
    """Pure-JAX f32 reference of the PyTorch forward (dropout = identity)."""
    w3, b3, w4, b4, w5, b5, w1, b1, w2, b2 = params
    L = emb.shape[1]
    pooled = []
    for K, (w, b) in zip(KERNEL_SIZES, ((w3, b3), (w4, b4), (w5, b5))):
        Lout = L - K + 1
        acc = sum(jnp.einsum('ble,ef->blf', emb[:, k:k + Lout, :], w[k])
                  for k in range(K))
        acc = jnp.maximum(acc + b[:, None, :], 0.0)
        pooled.append(jnp.max(acc, axis=1))
    feat = jnp.concatenate(pooled, axis=1)
    h = feat @ w1 + b1
    cat = jnp.concatenate([ue, h, te], axis=1)
    return cat @ w2 + b2


if __name__ == "__main__":
    # Small, shape-consistent configuration.
    B = 2                 # batch
    L = 16                # sequence_length
    E = 64                # embedding_dim (small stand-in for 300)
    F = 128               # num_kernel
    NUM_CLASSES = 2
    VOCAB = 50
    N_USERS, N_TOPICS, UT_DIM = 10, 7, 100   # 100 + 100 user/topic dims -> "200" in fc_layers2
    FC1_OUT = 100

    key = jax.random.PRNGKey(0)
    keys = jax.random.split(key, 16)

    # Frozen embedding tables (deterministic synthetic "word2vec"/user/topic weights).
    word2vec_W = jax.random.normal(keys[0], (VOCAB + 1, E), jnp.float32) * 0.1
    user_embeddings = jax.random.normal(keys[1], (N_USERS, UT_DIM), jnp.float32) * 0.1
    topic_embeddings = jax.random.normal(keys[2], (N_TOPICS, UT_DIM), jnp.float32) * 0.1

    # Conv weights (K, E, F) + biases (1, F).
    w3 = jax.random.normal(keys[3], (3, E, F), jnp.float32) * 0.1
    b3 = jax.random.normal(keys[4], (1, F), jnp.float32) * 0.1
    w4 = jax.random.normal(keys[5], (4, E, F), jnp.float32) * 0.1
    b4 = jax.random.normal(keys[6], (1, F), jnp.float32) * 0.1
    w5 = jax.random.normal(keys[7], (5, E, F), jnp.float32) * 0.1
    b5 = jax.random.normal(keys[8], (1, F), jnp.float32) * 0.1

    # fc_layers1: (3*F -> 100), fc_layers2: (200 + 100 -> num_classes)
    w1 = jax.random.normal(keys[9], (len(KERNEL_SIZES) * F, FC1_OUT), jnp.float32) * 0.05
    b1 = jax.random.normal(keys[10], (1, FC1_OUT), jnp.float32) * 0.05
    w2 = jax.random.normal(keys[11], (2 * UT_DIM + FC1_OUT, NUM_CLASSES), jnp.float32) * 0.05
    b2 = jax.random.normal(keys[12], (1, NUM_CLASSES), jnp.float32) * 0.05

    # Integer inputs (token ids, user ids, topic ids).
    x = jax.random.randint(keys[13], (B, L), 0, VOCAB + 1)
    user = jax.random.randint(keys[14], (B,), 0, N_USERS)
    topic = jax.random.randint(keys[15], (B,), 0, N_TOPICS)

    # Glue: embedding gathers stay in plain JAX.
    emb = jnp.take(word2vec_W, x, axis=0)            # (B, L, E)
    ue = jnp.take(user_embeddings, user, axis=0)     # (B, 100)
    te = jnp.take(topic_embeddings, topic, axis=0)   # (B, 100)

    params = (w3, b3, w4, b4, w5, b5, w1, b1, w2, b2)
    out = jax.jit(textcnn_forward)(emb, params, ue, te)
    jax.block_until_ready(out)

    assert out.shape == (B, NUM_CLASSES) and out.dtype == jnp.float32
    ref = reference_forward(emb, params, ue, te)
    assert bool(jnp.all(jnp.isfinite(out)))
    assert bool(jnp.allclose(out, ref, atol=5e-2, rtol=5e-2)), \
        f"max abs diff {float(jnp.max(jnp.abs(out - ref)))}"
    print("KERNEL_OK")
</pallas_src>

<mosaic_0001>
module attributes {stable_mosaic.version = 11 : i64} {
  func.func @kernel(%arg0: i32, %arg1: memref<8x24x128xbf16, #tpu.memory_space<vmem>>, %arg2: memref<3x128x128xbf16, #tpu.memory_space<vmem>>, %arg3: memref<1x128xf32, #tpu.memory_space<vmem>>, %arg4: memref<4x128x128xbf16, #tpu.memory_space<vmem>>, %arg5: memref<1x128xf32, #tpu.memory_space<vmem>>, %arg6: memref<5x128x128xbf16, #tpu.memory_space<vmem>>, %arg7: memref<1x128xf32, #tpu.memory_space<vmem>>, %arg8: memref<384x128xbf16, #tpu.memory_space<vmem>>, %arg9: memref<8x128xf32, #tpu.memory_space<vmem>>, %arg10: memref<8x128xf32, #tpu.memory_space<vmem>>) attributes {dimension_semantics = [#tpu.dimension_semantics<parallel>], iteration_bounds = array<i64: 1>, scalar_prefetch = 0 : i64, scratch_operands = 0 : i64, tpu.core_type = #tpu.core_type<tc>, window_params = [{transform_indices = @transform_0, window_bounds = array<i64: 8, 24, 128>}, {pipeline_mode = #tpu.pipeline_mode<synchronous>, transform_indices = @transform_1, window_bounds = array<i64: 3, 128, 128>}, {pipeline_mode = #tpu.pipeline_mode<synchronous>, transform_indices = @transform_2, window_bounds = array<i64: 1, 128>}, {pipeline_mode = #tpu.pipeline_mode<synchronous>, transform_indices = @transform_3, window_bounds = array<i64: 4, 128, 128>}, {pipeline_mode = #tpu.pipeline_mode<synchronous>, transform_indices = @transform_4, window_bounds = array<i64: 1, 128>}, {pipeline_mode = #tpu.pipeline_mode<synchronous>, transform_indices = @transform_5, window_bounds = array<i64: 5, 128, 128>}, {pipeline_mode = #tpu.pipeline_mode<synchronous>, transform_indices = @transform_6, window_bounds = array<i64: 1, 128>}, {pipeline_mode = #tpu.pipeline_mode<synchronous>, transform_indices = @transform_7, window_bounds = array<i64: 384, 128>}, {transform_indices = @transform_8, window_bounds = array<i64: 8, 128>}, {transform_indices = @transform_9, window_bounds = array<i64: 8, 128>}]} {
    %c0 = arith.constant 0 : index
    %c0_0 = arith.constant 0 : index
    %c0_1 = arith.constant 0 : index
    %0 = vector.load %arg1[%c0, %c0_0, %c0_1] : memref<8x24x128xbf16, #tpu.memory_space<vmem>>, vector<8x16x128xbf16>
    %1 = vector.shape_cast %0 : vector<8x16x128xbf16> to vector<128x128xbf16>
    %c0_2 = arith.constant 0 : index
    %c0_3 = arith.constant 0 : index
    %c0_4 = arith.constant 0 : index
    %2 = vector.load %arg2[%c0_2, %c0_3, %c0_4] : memref<3x128x128xbf16, #tpu.memory_space<vmem>>, vector<1x128x128xbf16>
    %3 = vector.shape_cast %2 : vector<1x128x128xbf16> to vector<128x128xbf16>
    %cst = arith.constant dense<0.000000e+00> : vector<128x128xf32>
    %4 = tpu.matmul %1, %3, %cst {dimension_numbers = #tpu.dot_dimension_numbers<[1], [0], [0], [1], [0, 0, 1, 1], [], []>} : vector<128x128xbf16>, vector<128x128xbf16>, vector<128x128xf32> -> vector<128x128xf32>
    %c0_5 = arith.constant 0 : index
    %c1 = arith.constant 1 : index
    %c0_6 = arith.constant 0 : index
    %5 = vector.load %arg1[%c0_5, %c1, %c0_6] : memref<8x24x128xbf16, #tpu.memory_space<vmem>>, vector<8x16x128xbf16>
    %6 = vector.shape_cast %5 : vector<8x16x128xbf16> to vector<128x128xbf16>
    %c1_7 = arith.constant 1 : index
    %c0_8 = arith.constant 0 : index
    %c0_9 = arith.constant 0 : index
    %7 = vector.load %arg2[%c1_7, %c0_8, %c0_9] : memref<3x128x128xbf16, #tpu.memory_space<vmem>>, vector<1x128x128xbf16>
    %8 = vector.shape_cast %7 : vector<1x128x128xbf16> to vector<128x128xbf16>
    %cst_10 = arith.constant dense<0.000000e+00> : vector<128x128xf32>
    %9 = tpu.matmul %6, %8, %cst_10 {dimension_numbers = #tpu.dot_dimension_numbers<[1], [0], [0], [1], [0, 0, 1, 1], [], []>} : vector<128x128xbf16>, vector<128x128xbf16>, vector<128x128xf32> -> vector<128x128xf32>
    %10 = arith.addf %4, %9 : vector<128x128xf32>
    %c0_11 = arith.constant 0 : index
    %c2 = arith.constant 2 : index
    %c0_12 = arith.constant 0 : index
    %11 = vector.load %arg1[%c0_11, %c2, %c0_12] : memref<8x24x128xbf16, #tpu.memory_space<vmem>>, vector<8x16x128xbf16>
    %12 = vector.shape_cast %11 : vector<8x16x128xbf16> to vector<128x128xbf16>
    %c2_13 = arith.constant 2 : index
    %c0_14 = arith.constant 0 : index
    %c0_15 = arith.constant 0 : index
    %13 = vector.load %arg2[%c2_13, %c0_14, %c0_15] : memref<3x128x128xbf16, #tpu.memory_space<vmem>>, vector<1x128x128xbf16>
    %14 = vector.shape_cast %13 : vector<1x128x128xbf16> to vector<128x128xbf16>
    %cst_16 = arith.constant dense<0.000000e+00> : vector<128x128xf32>
    %15 = tpu.matmul %12, %14, %cst_16 {dimension_numbers = #tpu.dot_dimension_numbers<[1], [0], [0], [1], [0, 0, 1, 1], [], []>} : vector<128x128xbf16>, vector<128x128xbf16>, vector<128x128xf32> -> vector<128x128xf32>
    %16 = arith.addf %10, %15 : vector<128x128xf32>
    %17 = vector.shape_cast %16 : vector<128x128xf32> to vector<8x16x128xf32>
    %18 = tpu.iota {dimensions = array<i32: 1>} : vector<8x16x128xi32>
    %c14_i32 = arith.constant 14 : i32
    %19 = vector.broadcast %c14_i32 : i32 to vector<8x16x128xi32>
    %20 = arith.cmpi slt, %18, %19 : vector<8x16x128xi32>
    %cst_17 = arith.constant 0xFF800000 : f32
    %21 = vector.broadcast %cst_17 : f32 to vector<8x16x128xf32>
    %22 = arith.select %20, %17, %21 : vector<8x16x128xi1>, vector<8x16x128xf32>
    %cst_18 = arith.constant dense<0xFF800000> : vector<8x128xf32>
    %23 = vector.multi_reduction <maximumf>, %22, %cst_18 [1] : vector<8x16x128xf32> to vector<8x128xf32>
    %c0_19 = arith.constant 0 : index
    %c0_20 = arith.constant 0 : index
    %24 = vector.load %arg3[%c0_19, %c0_20] : memref<1x128xf32, #tpu.memory_space<vmem>>, vector<1x128xf32>
    %25 = vector.broadcast %24 : vector<1x128xf32> to vector<8x128xf32>
    %26 = arith.addf %23, %25 : vector<8x128xf32>
    %cst_21 = arith.constant 0.000000e+00 : f32
    %27 = vector.broadcast %cst_21 : f32 to vector<8x128xf32>
    %28 = arith.maximumf %26, %27 : vector<8x128xf32>
    %c0_22 = arith.constant 0 : index
    %c0_23 = arith.constant 0 : index
    %c0_24 = arith.constant 0 : index
    %29 = vector.load %arg1[%c0_22, %c0_23, %c0_24] : memref<8x24x128xbf16, #tpu.memory_space<vmem>>, vector<8x16x128xbf16>
    %30 = vector.shape_cast %29 : vector<8x16x128xbf16> to vector<128x128xbf16>
    %c0_25 = arith.constant 0 : index
    %c0_26 = arith.constant 0 : index
    %c0_27 = arith.constant 0 : index
    %31 = vector.load %arg4[%c0_25, %c0_26, %c0_27] : memref<4x128x128xbf16, #tpu.memory_space<vmem>>, vector<1x128x128xbf16>
    %32 = vector.shape_cast %31 : vector<1x128x128xbf16> to vector<128x128xbf16>
    %cst_28 = arith.constant dense<0.000000e+00> : vector<128x128xf32>
    %33 = tpu.matmul %30, %32, %cst_28 {dimension_numbers = #tpu.dot_dimension_numbers<[1], [0], [0], [1], [0, 0, 1, 1], [], []>} : vector<128x128xbf16>, vector<128x128xbf16>, vector<128x128xf32> -> vector<128x128xf32>
    %c0_29 = arith.constant 0 : index
    %c1_30 = arith.constant 1 : index
    %c0_31 = arith.constant 0 : index
    %34 = vector.load %arg1[%c0_29, %c1_30, %c0_31] : memref<8x24x128xbf16, #tpu.memory_space<vmem>>, vector<8x16x128xbf16>
    %35 = vector.shape_cast %34 : vector<8x16x128xbf16> to vector<128x128xbf16>
    %c1_32 = arith.constant 1 : index
    %c0_33 = arith.constant 0 : index
    %c0_34 = arith.constant 0 : index
    %36 = vector.load %arg4[%c1_32, %c0_33, %c0_34] : memref<4x128x128xbf16, #tpu.memory_space<vmem>>, vector<1x128x128xbf16>
    %37 = vector.shape_cast %36 : vector<1x128x128xbf16> to vector<128x128xbf16>
    %cst_35 = arith.constant dense<0.000000e+00> : vector<128x128xf32>
    %38 = tpu.matmul %35, %37, %cst_35 {dimension_numbers = #tpu.dot_dimension_numbers<[1], [0], [0], [1], [0, 0, 1, 1], [], []>} : vector<128x128xbf16>, vector<128x128xbf16>, vector<128x128xf32> -> vector<128x128xf32>
    %39 = arith.addf %33, %38 : vector<128x128xf32>
    %c0_36 = arith.constant 0 : index
    %c2_37 = arith.constant 2 : index
    %c0_38 = arith.constant 0 : index
    %40 = vector.load %arg1[%c0_36, %c2_37, %c0_38] : memref<8x24x128xbf16, #tpu.memory_space<vmem>>, vector<8x16x128xbf16>
    %41 = vector.shape_cast %40 : vector<8x16x128xbf16> to vector<128x128xbf16>
    %c2_39 = arith.constant 2 : index
    %c0_40 = arith.constant 0 : index
    %c0_41 = arith.constant 0 : index
    %42 = vector.load %arg4[%c2_39, %c0_40, %c0_41] : memref<4x128x128xbf16, #tpu.memory_space<vmem>>, vector<1x128x128xbf16>
    %43 = vector.shape_cast %42 : vector<1x128x128xbf16> to vector<128x128xbf16>
    %cst_42 = arith.constant dense<0.000000e+00> : vector<128x128xf32>
    %44 = tpu.matmul %41, %43, %cst_42 {dimension_numbers = #tpu.dot_dimension_numbers<[1], [0], [0], [1], [0, 0, 1, 1], [], []>} : vector<128x128xbf16>, vector<128x128xbf16>, vector<128x128xf32> -> vector<128x128xf32>
    %45 = arith.addf %39, %44 : vector<128x128xf32>
    %c0_43 = arith.constant 0 : index
    %c3 = arith.constant 3 : index
    %c0_44 = arith.constant 0 : index
    %46 = vector.load %arg1[%c0_43, %c3, %c0_44] : memref<8x24x128xbf16, #tpu.memory_space<vmem>>, vector<8x16x128xbf16>
    %47 = vector.shape_cast %46 : vector<8x16x128xbf16> to vector<128x128xbf16>
    %c3_45 = arith.constant 3 : index
    %c0_46 = arith.constant 0 : index
    %c0_47 = arith.constant 0 : index
    %48 = vector.load %arg4[%c3_45, %c0_46, %c0_47] : memref<4x128x128xbf16, #tpu.memory_space<vmem>>, vector<1x128x128xbf16>
    %49 = vector.shape_cast %48 : vector<1x128x128xbf16> to vector<128x128xbf16>
    %cst_48 = arith.constant dense<0.000000e+00> : vector<128x128xf32>
    %50 = tpu.matmul %47, %49, %cst_48 {dimension_numbers = #tpu.dot_dimension_numbers<[1], [0], [0], [1], [0, 0, 1, 1], [], []>} : vector<128x128xbf16>, vector<128x128xbf16>, vector<128x128xf32> -> vector<128x128xf32>
    %51 = arith.addf %45, %50 : vector<128x128xf32>
    %52 = vector.shape_cast %51 : vector<128x128xf32> to vector<8x16x128xf32>
    %53 = tpu.iota {dimensions = array<i32: 1>} : vector<8x16x128xi32>
    %c13_i32 = arith.constant 13 : i32
    %54 = vector.broadcast %c13_i32 : i32 to vector<8x16x128xi32>
    %55 = arith.cmpi slt, %53, %54 : vector<8x16x128xi32>
    %cst_49 = arith.constant 0xFF800000 : f32
    %56 = vector.broadcast %cst_49 : f32 to vector<8x16x128xf32>
    %57 = arith.select %55, %52, %56 : vector<8x16x128xi1>, vector<8x16x128xf32>
    %cst_50 = arith.constant dense<0xFF800000> : vector<8x128xf32>
    %58 = vector.multi_reduction <maximumf>, %57, %cst_50 [1] : vector<8x16x128xf32> to vector<8x128xf32>
    %c0_51 = arith.constant 0 : index
    %c0_52 = arith.constant 0 : index
    %59 = vector.load %arg5[%c0_51, %c0_52] : memref<1x128xf32, #tpu.memory_space<vmem>>, vector<1x128xf32>
    %60 = vector.broadcast %59 : vector<1x128xf32> to vector<8x128xf32>
    %61 = arith.addf %58, %60 : vector<8x128xf32>
    %cst_53 = arith.constant 0.000000e+00 : f32
    %62 = vector.broadcast %cst_53 : f32 to vector<8x128xf32>
    %63 = arith.maximumf %61, %62 : vector<8x128xf32>
    %c0_54 = arith.constant 0 : index
    %c0_55 = arith.constant 0 : index
    %c0_56 = arith.constant 0 : index
    %64 = vector.load %arg1[%c0_54, %c0_55, %c0_56] : memref<8x24x128xbf16, #tpu.memory_space<vmem>>, vector<8x16x128xbf16>
    %65 = vector.shape_cast %64 : vector<8x16x128xbf16> to vector<128x128xbf16>
    %c0_57 = arith.constant 0 : index
    %c0_58 = arith.constant 0 : index
    %c0_59 = arith.constant 0 : index
    %66 = vector.load %arg6[%c0_57, %c0_58, %c0_59] : memref<5x128x128xbf16, #tpu.memory_space<vmem>>, vector<1x128x128xbf16>
    %67 = vector.shape_cast %66 : vector<1x128x128xbf16> to vector<128x128xbf16>
    %cst_60 = arith.constant dense<0.000000e+00> : vector<128x128xf32>
    %68 = tpu.matmul %65, %67, %cst_60 {dimension_numbers = #tpu.dot_dimension_numbers<[1], [0], [0], [1], [0, 0, 1, 1], [], []>} : vector<128x128xbf16>, vector<128x128xbf16>, vector<128x128xf32> -> vector<128x128xf32>
    %c0_61 = arith.constant 0 : index
    %c1_62 = arith.constant 1 : index
    %c0_63 = arith.constant 0 : index
    %69 = vector.load %arg1[%c0_61, %c1_62, %c0_63] : memref<8x24x128xbf16, #tpu.memory_space<vmem>>, vector<8x16x128xbf16>
    %70 = vector.shape_cast %69 : vector<8x16x128xbf16> to vector<128x128xbf16>
    %c1_64 = arith.constant 1 : index
    %c0_65 = arith.constant 0 : index
    %c0_66 = arith.constant 0 : index
    %71 = vector.load %arg6[%c1_64, %c0_65, %c0_66] : memref<5x128x128xbf16, #tpu.memory_space<vmem>>, vector<1x128x128xbf16>
    %72 = vector.shape_cast %71 : vector<1x128x128xbf16> to vector<128x128xbf16>
    %cst_67 = arith.constant dense<0.000000e+00> : vector<128x128xf32>
    %73 = tpu.matmul %70, %72, %cst_67 {dimension_numbers = #tpu.dot_dimension_numbers<[1], [0], [0], [1], [0, 0, 1, 1], [], []>} : vector<128x128xbf16>, vector<128x128xbf16>, vector<128x128xf32> -> vector<128x128xf32>
    %74 = arith.addf %68, %73 : vector<128x128xf32>
    %c0_68 = arith.constant 0 : index
    %c2_69 = arith.constant 2 : index
    %c0_70 = arith.constant 0 : index
    %75 = vector.load %arg1[%c0_68, %c2_69, %c0_70] : memref<8x24x128xbf16, #tpu.memory_space<vmem>>, vector<8x16x128xbf16>
    %76 = vector.shape_cast %75 : vector<8x16x128xbf16> to vector<128x128xbf16>
    %c2_71 = arith.constant 2 : index
    %c0_72 = arith.constant 0 : index
    %c0_73 = arith.constant 0 : index
    %77 = vector.load %arg6[%c2_71, %c0_72, %c0_73] : memref<5x128x128xbf16, #tpu.memory_space<vmem>>, vector<1x128x128xbf16>
    %78 = vector.shape_cast %77 : vector<1x128x128xbf16> to vector<128x128xbf16>
    %cst_74 = arith.constant dense<0.000000e+00> : vector<128x128xf32>
    %79 = tpu.matmul %76, %78, %cst_74 {dimension_numbers = #tpu.dot_dimension_numbers<[1], [0], [0], [1], [0, 0, 1, 1], [], []>} : vector<128x128xbf16>, vector<128x128xbf16>, vector<128x128xf32> -> vector<128x128xf32>
    %80 = arith.addf %74, %79 : vector<128x128xf32>
    %c0_75 = arith.constant 0 : index
    %c3_76 = arith.constant 3 : index
    %c0_77 = arith.constant 0 : index
    %81 = vector.load %arg1[%c0_75, %c3_76, %c0_77] : memref<8x24x128xbf16, #tpu.memory_space<vmem>>, vector<8x16x128xbf16>
    %82 = vector.shape_cast %81 : vector<8x16x128xbf16> to vector<128x128xbf16>
    %c3_78 = arith.constant 3 : index
    %c0_79 = arith.constant 0 : index
    %c0_80 = arith.constant 0 : index
    %83 = vector.load %arg6[%c3_78, %c0_79, %c0_80] : memref<5x128x128xbf16, #tpu.memory_space<vmem>>, vector<1x128x128xbf16>
    %84 = vector.shape_cast %83 : vector<1x128x128xbf16> to vector<128x128xbf16>
    %cst_81 = arith.constant dense<0.000000e+00> : vector<128x128xf32>
    %85 = tpu.matmul %82, %84, %cst_81 {dimension_numbers = #tpu.dot_dimension_numbers<[1], [0], [0], [1], [0, 0, 1, 1], [], []>} : vector<128x128xbf16>, vector<128x128xbf16>, vector<128x128xf32> -> vector<128x128xf32>
    %86 = arith.addf %80, %85 : vector<128x128xf32>
    %c0_82 = arith.constant 0 : index
    %c4 = arith.constant 4 : index
    %c0_83 = arith.constant 0 : index
    %87 = vector.load %arg1[%c0_82, %c4, %c0_83] : memref<8x24x128xbf16, #tpu.memory_space<vmem>>, vector<8x16x128xbf16>
    %88 = vector.shape_cast %87 : vector<8x16x128xbf16> to vector<128x128xbf16>
    %c4_84 = arith.constant 4 : index
    %c0_85 = arith.constant 0 : index
    %c0_86 = arith.constant 0 : index
    %89 = vector.load %arg6[%c4_84, %c0_85, %c0_86] : memref<5x128x128xbf16, #tpu.memory_space<vmem>>, vector<1x128x128xbf16>
    %90 = vector.shape_cast %89 : vector<1x128x128xbf16> to vector<128x128xbf16>
    %cst_87 = arith.constant dense<0.000000e+00> : vector<128x128xf32>
    %91 = tpu.matmul %88, %90, %cst_87 {dimension_numbers = #tpu.dot_dimension_numbers<[1], [0], [0], [1], [0, 0, 1, 1], [], []>} : vector<128x128xbf16>, vector<128x128xbf16>, vector<128x128xf32> -> vector<128x128xf32>
    %92 = arith.addf %86, %91 : vector<128x128xf32>
    %93 = vector.shape_cast %92 : vector<128x128xf32> to vector<8x16x128xf32>
    %94 = tpu.iota {dimensions = array<i32: 1>} : vector<8x16x128xi32>
    %c12_i32 = arith.constant 12 : i32
    %95 = vector.broadcast %c12_i32 : i32 to vector<8x16x128xi32>
    %96 = arith.cmpi slt, %94, %95 : vector<8x16x128xi32>
    %cst_88 = arith.constant 0xFF800000 : f32
    %97 = vector.broadcast %cst_88 : f32 to vector<8x16x128xf32>
    %98 = arith.select %96, %93, %97 : vector<8x16x128xi1>, vector<8x16x128xf32>
    %cst_89 = arith.constant dense<0xFF800000> : vector<8x128xf32>
    %99 = vector.multi_reduction <maximumf>, %98, %cst_89 [1] : vector<8x16x128xf32> to vector<8x128xf32>
    %c0_90 = arith.constant 0 : index
    %c0_91 = arith.constant 0 : index
    %100 = vector.load %arg7[%c0_90, %c0_91] : memref<1x128xf32, #tpu.memory_space<vmem>>, vector<1x128xf32>
    %101 = vector.broadcast %100 : vector<1x128xf32> to vector<8x128xf32>
    %102 = arith.addf %99, %101 : vector<8x128xf32>
    %cst_92 = arith.constant 0.000000e+00 : f32
    %103 = vector.broadcast %cst_92 : f32 to vector<8x128xf32>
    %104 = arith.maximumf %102, %103 : vector<8x128xf32>
    %105 = tpu.concatenate %28, %63, %104 in 1 : vector<8x128xf32>, vector<8x128xf32>, vector<8x128xf32> -> vector<8x384xf32>
    %106 = arith.truncf %105 : vector<8x384xf32> to vector<8x384xbf16>
    %c0_93 = arith.constant 0 : index
    %c0_94 = arith.constant 0 : index
    %107 = vector.load %arg8[%c0_93, %c0_94] : memref<384x128xbf16, #tpu.memory_space<vmem>>, vector<384x128xbf16>
    %cst_95 = arith.constant dense<0.000000e+00> : vector<8x128xf32>
    %108 = tpu.matmul %106, %107, %cst_95 {dimension_numbers = #tpu.dot_dimension_numbers<[1], [0], [0], [1], [0, 0, 1, 1], [], []>} : vector<8x384xbf16>, vector<384x128xbf16>, vector<8x128xf32> -> vector<8x128xf32>
    %c0_96 = arith.constant 0 : index
    %c0_97 = arith.constant 0 : index
    %109 = vector.load %arg9[%c0_96, %c0_97] : memref<8x128xf32, #tpu.memory_space<vmem>>, vector<8x128xf32>
    %110 = arith.addf %108, %109 : vector<8x128xf32>
    %c0_98 = arith.constant 0 : index
    %c0_99 = arith.constant 0 : index
    %111 = vector.load %arg10[%c0_98, %c0_99] : memref<8x128xf32, #tpu.memory_space<vmem>>, vector<8x128xf32>
    tpu.vector_store %arg10[%c0_98, %c0_99], %110 {strides = array<i32>} : memref<8x128xf32, #tpu.memory_space<vmem>>, vector<8x128xf32>,
    return
  }
  func.func @transform_0(%arg0: i32) -> (i32, i32, i32) {
    %c0_i32 = arith.constant 0 : i32
    %c0_i32_0 = arith.constant 0 : i32
    %c0_i32_1 = arith.constant 0 : i32
    return %arg0, %c0_i32, %c0_i32_0 : i32, i32, i32
  }
  func.func @transform_1(%arg0: i32) -> (i32, i32, i32) {
    %c0_i32 = arith.constant 0 : i32
    %c0_i32_0 = arith.constant 0 : i32
    %c0_i32_1 = arith.constant 0 : i32
    %c0_i32_2 = arith.constant 0 : i32
    return %c0_i32, %c0_i32_0, %c0_i32_1 : i32, i32, i32
  }
  func.func @transform_2(%arg0: i32) -> (i32, i32) {
    %c0_i32 = arith.constant 0 : i32
    %c0_i32_0 = arith.constant 0 : i32
    %c0_i32_1 = arith.constant 0 : i32
    return %c0_i32, %c0_i32_0 : i32, i32
  }
  func.func @transform_3(%arg0: i32) -> (i32, i32, i32) {
    %c0_i32 = arith.constant 0 : i32
    %c0_i32_0 = arith.constant 0 : i32
    %c0_i32_1 = arith.constant 0 : i32
    %c0_i32_2 = arith.constant 0 : i32
    return %c0_i32, %c0_i32_0, %c0_i32_1 : i32, i32, i32
  }
  func.func @transform_4(%arg0: i32) -> (i32, i32) {
    %c0_i32 = arith.constant 0 : i32
    %c0_i32_0 = arith.constant 0 : i32
    %c0_i32_1 = arith.constant 0 : i32
    return %c0_i32, %c0_i32_0 : i32, i32
  }
  func.func @transform_5(%arg0: i32) -> (i32, i32, i32) {
    %c0_i32 = arith.constant 0 : i32
    %c0_i32_0 = arith.constant 0 : i32
    %c0_i32_1 = arith.constant 0 : i32
    %c0_i32_2 = arith.constant 0 : i32
    return %c0_i32, %c0_i32_0, %c0_i32_1 : i32, i32, i32
  }
  func.func @transform_6(%arg0: i32) -> (i32, i32) {
    %c0_i32 = arith.constant 0 : i32
    %c0_i32_0 = arith.constant 0 : i32
    %c0_i32_1 = arith.constant 0 : i32
    return %c0_i32, %c0_i32_0 : i32, i32
  }
  func.func @transform_7(%arg0: i32) -> (i32, i32) {
    %c0_i32 = arith.constant 0 : i32
    %c0_i32_0 = arith.constant 0 : i32
    %c0_i32_1 = arith.constant 0 : i32
    return %c0_i32, %c0_i32_0 : i32, i32
  }
  func.func @transform_8(%arg0: i32) -> (i32, i32) {
    %c0_i32 = arith.constant 0 : i32
    %c0_i32_0 = arith.constant 0 : i32
    return %arg0, %c0_i32 : i32, i32
  }
  func.func @transform_9(%arg0: i32) -> (i32, i32) {
    %c0_i32 = arith.constant 0 : i32
    %c0_i32_0 = arith.constant 0 : i32
    return %arg0, %c0_i32 : i32, i32
  }
}

</mosaic_0001>

<llo_original>
// kernel: textcnn_forward.1
$region0: #{textcnn_forward.1}
  #allocation0 [shape = 'u32[]', space=smem, size = 0x4, offset = 0x4, fixed_abs, tag = 'smem constant byte address 0x4 - core index']
  #allocation1 [shape = 'u32[144,128]{1,0:T(1,128)}', space=vmem, size = 0x12000, scoped, tag = 'internal scratch']
  %s0 = inlined_call_operand.vmem [shape: bf16[8,24,128], index: 0, kind: input, shape index: {}]
  %s1 = inlined_call_operand.vmem [shape: bf16[3,128,128], index: 1, kind: input, shape index: {}]
  %s2 = inlined_call_operand.vmem [shape: f32[1,128], index: 2, kind: input, shape index: {}]
  %s3 = inlined_call_operand.vmem [shape: bf16[4,128,128], index: 3, kind: input, shape index: {}]
  %s4 = inlined_call_operand.vmem [shape: f32[1,128], index: 4, kind: input, shape index: {}]
  %s5 = inlined_call_operand.vmem [shape: bf16[5,128,128], index: 5, kind: input, shape index: {}]
  %s6 = inlined_call_operand.vmem [shape: f32[1,128], index: 6, kind: input, shape index: {}]
  %s7 = inlined_call_operand.vmem [shape: bf16[384,128], index: 7, kind: input, shape index: {}]
  %s8 = inlined_call_operand.vmem [shape: f32[8,128], index: 8, kind: input, shape index: {}]
  %s9 = inlined_call_operand.vmem [shape: f32[8,128], index: 9, kind: output, shape index: {}]
  %s10 = sld [smem:[#allocation0]]
  $region46: #{textcnn_forward.1} parent=0
    _
  %s12 = ssub.s32 1, %s10
  %s13 = scalar_select 0, %s12, %s10
  // Predicated region
  $region2: #{textcnn_forward.1} parent=0 // pred_check
    _
  $region3: #{textcnn_forward.1} parent=0 // pred_check_branch
    %15 = sbr.rel (0) target = $region5
  $region4: #{textcnn_forward.1} parent=0 // pred_region
    _
  $region5: #{textcnn_forward.1} parent=0 // pred_fallthru
    _
  // Predicated region
  $region6: #{textcnn_forward.1} parent=0 // pred_check
    _
  $region7: #{textcnn_forward.1} parent=0 // pred_check_branch
    %17 = sbr.rel (0) target = $region9
  $region8: #{textcnn_forward.1} parent=0 // pred_region
    _
  $region9: #{textcnn_forward.1} parent=0 // pred_fallthru
    _
  // Predicated region
  $region10: #{textcnn_forward.1} parent=0 // pred_check
    _
  $region11: #{textcnn_forward.1} parent=0 // pred_check_branch
    %19 = sbr.rel (0) target = $region13
  $region12: #{textcnn_forward.1} parent=0 // pred_region
    _
  $region13: #{textcnn_forward.1} parent=0 // pred_fallthru
    _
  // Predicated region
  $region14: #{textcnn_forward.1} parent=0 // pred_check
    _
  $region15: #{textcnn_forward.1} parent=0 // pred_check_branch
    %21 = sbr.rel (0) target = $region17
  $region16: #{textcnn_forward.1} parent=0 // pred_region
    _
  $region17: #{textcnn_forward.1} parent=0 // pred_fallthru
    _
  // Predicated region
  $region18: #{textcnn_forward.1} parent=0 // pred_check
    _
  $region19: #{textcnn_forward.1} parent=0 // pred_check_branch
    %23 = sbr.rel (0) target = $region21
  $region20: #{textcnn_forward.1} parent=0 // pred_region
    _
  $region21: #{textcnn_forward.1} parent=0 // pred_fallthru
    _
  // Predicated region
  $region22: #{textcnn_forward.1} parent=0 // pred_check
    _
  $region23: #{textcnn_forward.1} parent=0 // pred_check_branch
    %25 = sbr.rel (0) target = $region25
  $region24: #{textcnn_forward.1} parent=0 // pred_region
    _
  $region25: #{textcnn_forward.1} parent=0 // pred_fallthru
    _
  // Predicated region
  $region26: #{textcnn_forward.1} parent=0 // pred_check
    _
  $region27: #{textcnn_forward.1} parent=0 // pred_check_branch
    %27 = sbr.rel (0) target = $region29
  $region28: #{textcnn_forward.1} parent=0 // pred_region
    _
  $region29: #{textcnn_forward.1} parent=0 // pred_fallthru
    _
  // Predicated region
  $region30: #{textcnn_forward.1} parent=0 // pred_check
    _
  $region31: #{textcnn_forward.1} parent=0 // pred_check_branch
    %29 = sbr.rel (0) target = $region33
  $region32: #{textcnn_forward.1} parent=0 // pred_region
    _
  $region33: #{textcnn_forward.1} parent=0 // pred_fallthru
    _
  // Predicated region
  $region34: #{textcnn_forward.1} parent=0 // pred_check
    _
  $region35: #{textcnn_forward.1} parent=0 // pred_check_branch
    %31 = sbr.rel (0) target = $region37
  $region36: #{textcnn_forward.1} parent=0 // pred_region
    _
  $region37: #{textcnn_forward.1} parent=0 // pred_fallthru
    _
  %v33 = vld [vmem:[%s0] sm:$0xf]
  %v34 = vld [vmem:[%s0 + $0x4] sm:$0xf]
  %v35 = vld [vmem:[%s0 + $0xc] sm:$0xf]
  %v36 = vld [vmem:[%s0 + $0x10] sm:$0xf]
  %v37 = vld [vmem:[%s0 + $0x18] sm:$0xf]
  %v38 = vld [vmem:[%s0 + $0x1c] sm:$0xf]
  %v39 = vld [vmem:[%s0 + $0x24] sm:$0xf]
  %v40 = vld [vmem:[%s0 + $0x28] sm:$0xf]
  %v41 = vld [vmem:[%s0 + $0x30] sm:$0xf]
  %v42 = vld [vmem:[%s0 + $0x34] sm:$0xf]
  %v43 = vld [vmem:[%s0 + $0x3c] sm:$0xf]
  %v44 = vld [vmem:[%s0 + $0x40] sm:$0xf]
  %v45 = vld [vmem:[%s0 + $0x48] sm:$0xf]
  %v46 = vld [vmem:[%s0 + $0x4c] sm:$0xf]
  %v47 = vld [vmem:[%s0 + $0x54] sm:$0xf]
  %v48 = vld [vmem:[%s0 + $0x58] sm:$0xf]
  %v49 = vld [vmem:[%s1] sm:$0xf]
  %v50 = vld [vmem:[%s1 + $0x4] sm:$0xf]
  %v51 = vld [vmem:[%s1 + $0x8] sm:$0xf]
  %v52 = vld [vmem:[%s1 + $0xc] sm:$0xf]
  %v53 = vld [vmem:[%s1 + $0x10] sm:$0xf]
  %v54 = vld [vmem:[%s1 + $0x14] sm:$0xf]
  %v55 = vld [vmem:[%s1 + $0x18] sm:$0xf]
  %v56 = vld [vmem:[%s1 + $0x1c] sm:$0xf]
  %v57 = vld [vmem:[%s1 + $0x20] sm:$0xf]
  %v58 = vld [vmem:[%s1 + $0x24] sm:$0xf]
  %v59 = vld [vmem:[%s1 + $0x28] sm:$0xf]
  %v60 = vld [vmem:[%s1 + $0x2c] sm:$0xf]
  %v61 = vld [vmem:[%s1 + $0x30] sm:$0xf]
  %v62 = vld [vmem:[%s1 + $0x34] sm:$0xf]
  %v63 = vld [vmem:[%s1 + $0x38] sm:$0xf]
  %v64 = vld [vmem:[%s1 + $0x3c] sm:$0xf]
  %v65 = vld [vmem:[%s0] sm:$0xf]
  %v66 = vld [vmem:[%s0 + $0x4] sm:$0xf]
  %v67 = vld [vmem:[%s0 + $0x8] sm:$0x1]
  %v68 = vld [vmem:[%s0 + $0xc] sm:$0xf]
  %v69 = vld [vmem:[%s0 + $0x10] sm:$0xf]
  %v70 = vld [vmem:[%s0 + $0x14] sm:$0x1]
  %v71 = vld [vmem:[%s0 + $0x18] sm:$0xf]
  %v72 = vld [vmem:[%s0 + $0x1c] sm:$0xf]
  %v73 = vld [vmem:[%s0 + $0x20] sm:$0x1]
  %v74 = vld [vmem:[%s0 + $0x24] sm:$0xf]
  %v75 = vld [vmem:[%s0 + $0x28] sm:$0xf]
  %v76 = vld [vmem:[%s0 + $0x2c] sm:$0x1]
  %v77 = vld [vmem:[%s0 + $0x30] sm:$0xf]
  %v78 = vld [vmem:[%s0 + $0x34] sm:$0xf]
  %v79 = vld [vmem:[%s0 + $0x38] sm:$0x1]
  %v80 = vld [vmem:[%s0 + $0x3c] sm:$0xf]
  %v81 = vld [vmem:[%s0 + $0x40] sm:$0xf]
  %v82 = vld [vmem:[%s0 + $0x44] sm:$0x1]
  %v83 = vld [vmem:[%s0 + $0x48] sm:$0xf]
  %v84 = vld [vmem:[%s0 + $0x4c] sm:$0xf]
  %v85 = vld [vmem:[%s0 + $0x50] sm:$0x1]
  %v86 = vld [vmem:[%s0 + $0x54] sm:$0xf]
  %v87 = vld [vmem:[%s0 + $0x58] sm:$0xf]
  %v88 = vld [vmem:[%s0 + $0x5c] sm:$0x1]
  %vm89 = vsmask.f32 3328
  %vm90 = vsmask.f32 7440
  %vm91 = vmor %vm89, %vm90
  %v93 = vshrl.u32 %v65, 16
  %v95 = vrot.slane %v93, 4
  %v96 = vshll.u32 %v65, 16
  %v98 = vrot.slane %v96, 5
  %v99 = vor.u32 %v95, %v98
  %v100 = vrot.slane %v99, 4
  %v102 = vshll.u32 %v66, 16
  %v104 = vrot.slane %v102, 5
  %v105 = vsel %vm91, %v100, %v104
  %v106 = vshrl.u32 %v66, 16
  %v108 = vrot.slane %v106, 4
  %v109 = vor.u32 %v108, %v104
  %v110 = vrot.slane %v109, 4
  %v112 = vshll.u32 %v67, 16
  %v114 = vrot.slane %v112, 5
  %v115 = vsel %vm91, %v110, %v114
  %v117 = vshrl.u32 %v68, 16
  %v119 = vrot.slane %v117, 4
  %v120 = vshll.u32 %v68, 16
  %v122 = vrot.slane %v120, 5
  %v123 = vor.u32 %v119, %v122
  %v124 = vrot.slane %v123, 4
  %v126 = vshll.u32 %v69, 16
  %v128 = vrot.slane %v126, 5
  %v129 = vsel %vm91, %v124, %v128
  %v130 = vshrl.u32 %v69, 16
  %v132 = vrot.slane %v130, 4
  %v133 = vor.u32 %v132, %v128
  %v134 = vrot.slane %v133, 4
  %v136 = vshll.u32 %v70, 16
  %v138 = vrot.slane %v136, 5
  %v139 = vsel %vm91, %v134, %v138
  %v141 = vshrl.u32 %v71, 16
  %v143 = vrot.slane %v141, 4
  %v144 = vshll.u32 %v71, 16
  %v146 = vrot.slane %v144, 5
  %v147 = vor.u32 %v143, %v146
  %v148 = vrot.slane %v147, 4
  %v150 = vshll.u32 %v72, 16
  %v152 = vrot.slane %v150, 5
  %v153 = vsel %vm91, %v148, %v152
  %v154 = vshrl.u32 %v72, 16
  %v156 = vrot.slane %v154, 4
  %v157 = vor.u32 %v156, %v152
  %v158 = vrot.slane %v157, 4
  %v160 = vshll.u32 %v73, 16
  %v162 = vrot.slane %v160, 5
  %v163 = vsel %vm91, %v158, %v162
  %v165 = vshrl.u32 %v74, 16
  %v167 = vrot.slane %v165, 4
  %v168 = vshll.u32 %v74, 16
  %v170 = vrot.slane %v168, 5
  %v171 = vor.u32 %v167, %v170
  %v172 = vrot.slane %v171, 4
  %v174 = vshll.u32 %v75, 16
  %v176 = vrot.slane %v174, 5
  %v177 = vsel %vm91, %v172, %v176
  %v178 = vshrl.u32 %v75, 16
  %v180 = vrot.slane %v178, 4
  %v181 = vor.u32 %v180, %v176
  %v182 = vrot.slane %v181, 4
  %v184 = vshll.u32 %v76, 16
  %v186 = vrot.slane %v184, 5
  %v187 = vsel %vm91, %v182, %v186
  %v189 = vshrl.u32 %v77, 16
  %v191 = vrot.slane %v189, 4
  %v192 = vshll.u32 %v77, 16
  %v194 = vrot.slane %v192, 5
  %v195 = vor.u32 %v191, %v194
  %v196 = vrot.slane %v195, 4
  %v198 = vshll.u32 %v78, 16
  %v200 = vrot.slane %v198, 5
  %v201 = vsel %vm91, %v196, %v200
  %v202 = vshrl.u32 %v78, 16
  %v204 = vrot.slane %v202, 4
  %v205 = vor.u32 %v204, %v200
  %v206 = vrot.slane %v205, 4
  %v208 = vshll.u32 %v79, 16
  %v210 = vrot.slane %v208, 5
  %v211 = vsel %vm91, %v206, %v210
  %v213 = vshrl.u32 %v80, 16
  %v215 = vrot.slane %v213, 4
  %v216 = vshll.u32 %v80, 16
  %v218 = vrot.slane %v216, 5
  %v219 = vor.u32 %v215, %v218
  %v220 = vrot.slane %v219, 4
  %v222 = vshll.u32 %v81, 16
  %v224 = vrot.slane %v222, 5
  %v225 = vsel %vm91, %v220, %v224
  %v226 = vshrl.u32 %v81, 16
  %v228 = vrot.slane %v226, 4
  %v229 = vor.u32 %v228, %v224
  %v230 = vrot.slane %v229, 4
  %v232 = vshll.u32 %v82, 16
  %v234 = vrot.slane %v232, 5
  %v235 = vsel %vm91, %v230, %v234
  %v237 = vshrl.u32 %v83, 16
  %v239 = vrot.slane %v237, 4
  %v240 = vshll.u32 %v83, 16
  %v242 = vrot.slane %v240, 5
  %v243 = vor.u32 %v239, %v242
  %v244 = vrot.slane %v243, 4
  %v246 = vshll.u32 %v84, 16
  %v248 = vrot.slane %v246, 5
  %v249 = vsel %vm91, %v244, %v248
  %v250 = vshrl.u32 %v84, 16
  %v252 = vrot.slane %v250, 4
  %v253 = vor.u32 %v252, %v248
  %v254 = vrot.slane %v253, 4
  %v256 = vshll.u32 %v85, 16
  %v258 = vrot.slane %v256, 5
  %v259 = vsel %vm91, %v254, %v258
  %v261 = vshrl.u32 %v86, 16
  %v263 = vrot.slane %v261, 4
  %v264 = vshll.u32 %v86, 16
  %v266 = vrot.slane %v264, 5
  %v267 = vor.u32 %v263, %v266
  %v268 = vrot.slane %v267, 4
  %v270 = vshll.u32 %v87, 16
  %v272 = vrot.slane %v270, 5
  %v273 = vsel %vm91, %v268, %v272
  %v274 = vshrl.u32 %v87, 16
  %v276 = vrot.slane %v274, 4
  %v277 = vor.u32 %v276, %v272
  %v278 = vrot.slane %v277, 4
  %v280 = vshll.u32 %v88, 16
  %v282 = vrot.slane %v280, 5
  %v283 = vsel %vm91, %v278, %v282
  %s284 = scalar_lea.vmem %s1, 64
  %v285 = vld [vmem:[%s284] sm:$0xf]
  %v286 = vld [vmem:[%s284 + $0x4] sm:$0xf]
  %v287 = vld [vmem:[%s284 + $0x8] sm:$0xf]
  %v288 = vld [vmem:[%s284 + $0xc] sm:$0xf]
  %v289 = vld [vmem:[%s284 + $0x10] sm:$0xf]
  %v290 = vld [vmem:[%s284 + $0x14] sm:$0xf]
  %v291 = vld [vmem:[%s284 + $0x18] sm:$0xf]
  %v292 = vld [vmem:[%s284 + $0x1c] sm:$0xf]
  %v293 = vld [vmem:[%s284 + $0x20] sm:$0xf]
  %v294 = vld [vmem:[%s284 + $0x24] sm:$0xf]
  %v295 = vld [vmem:[%s284 + $0x28] sm:$0xf]
  %v296 = vld [vmem:[%s284 + $0x2c] sm:$0xf]
  %v297 = vld [vmem:[%s284 + $0x30] sm:$0xf]
  %v298 = vld [vmem:[%s284 + $0x34] sm:$0xf]
  %v299 = vld [vmem:[%s284 + $0x38] sm:$0xf]
  %v300 = vld [vmem:[%s284 + $0x3c] sm:$0xf]
  %v301 = vunpack.c.l.b16 %v105
  %v302 = vunpack.c.l.b16 %v115
  %v303 = vunpack.c.l.b16 %v129
  %v304 = vunpack.c.l.b16 %v139
  %v305 = vunpack.c.l.b16 %v153
  %v306 = vunpack.c.l.b16 %v163
  %v307 = vunpack.c.l.b16 %v177
  %v308 = vunpack.c.l.b16 %v187
  %v309 = vunpack.c.l.b16 %v201
  %v310 = vunpack.c.l.b16 %v211
  %v311 = vunpack.c.l.b16 %v225
  %v312 = vunpack.c.l.b16 %v235
  %v313 = vunpack.c.l.b16 %v249
  %v314 = vunpack.c.l.b16 %v259
  %v315 = vunpack.c.l.b16 %v273
  %v316 = vunpack.c.l.b16 %v283
  %v317 = vpack.c.b16 %v302, %v301
  %v318 = vpack.c.b16 %v304, %v303
  %v319 = vpack.c.b16 %v306, %v305
  %v320 = vpack.c.b16 %v308, %v307
  %v321 = vpack.c.b16 %v310, %v309
  %v322 = vpack.c.b16 %v312, %v311
  %v323 = vpack.c.b16 %v314, %v313
  %v324 = vpack.c.b16 %v316, %v315
  %v349 = vunpack.c.l.b16 %v285
  %v350 = vunpack.c.l.b16 %v286
  %v351 = vunpack.c.l.b16 %v287
  %v352 = vunpack.c.l.b16 %v288
  %v353 = vunpack.c.l.b16 %v289
  %v354 = vunpack.c.l.b16 %v290
  %v355 = vunpack.c.l.b16 %v291
  %v356 = vunpack.c.l.b16 %v292
  %v357 = vunpack.c.l.b16 %v293
  %v358 = vunpack.c.l.b16 %v294
  %v359 = vunpack.c.l.b16 %v295
  %v360 = vunpack.c.l.b16 %v296
  %v361 = vunpack.c.l.b16 %v297
  %v362 = vunpack.c.l.b16 %v298
  %v363 = vunpack.c.l.b16 %v299
  %v364 = vunpack.c.l.b16 %v300
  %v365 = vpack.c.b16 %v350, %v349
  %v366 = vpack.c.b16 %v352, %v351
  %v367 = vpack.c.b16 %v354, %v353
  %v368 = vpack.c.b16 %v356, %v355
  %v369 = vpack.c.b16 %v358, %v357
  %v370 = vpack.c.b16 %v360, %v359
  %v371 = vpack.c.b16 %v362, %v361
  %v372 = vpack.c.b16 %v364, %v363
  %381 = vmatprep.subr.bf16.mxu0 0
  %382 = vmatpush1.bf16.msra.mxu0 %v365
  %383 = vmatprep.subr.bf16.mxu0 0
  %384 = vmatpush1.bf16.msra.mxu0 %v366
  %385 = vmatprep.subr.bf16.mxu0 0
  %386 = vmatpush1.bf16.msra.mxu0 %v367
  %387 = vmatprep.subr.bf16.mxu0 0
  %388 = vmatpush1.bf16.msra.mxu0 %v368
  %389 = vmatprep.subr.bf16.mxu0 0
  %390 = vmatpush1.bf16.msra.mxu0 %v369
  %391 = vmatprep.subr.bf16.mxu0 0
  %392 = vmatpush1.bf16.msra.mxu0 %v370
  %393 = vmatprep.subr.bf16.mxu0 0
  %394 = vmatpush1.bf16.msra.mxu0 %v371
  %395 = vmatprep.subr.bf16.mxu0 0
  %396 = vmatpush1.bf16.msra.mxu0 %v372
  %397 = vmatprep.subr.bf16.mxu0 0
  %398 = vmatpush1.bf16.msra.mxu0 0
  %399 = vmatprep.subr.bf16.mxu0 0
  %400 = vmatpush1.bf16.msra.mxu0 0
  %401 = vmatprep.subr.bf16.mxu0 0
  %402 = vmatpush1.bf16.msra.mxu0 0
  %403 = vmatprep.subr.bf16.mxu0 0
  %404 = vmatpush1.bf16.msra.mxu0 0
  %405 = vmatprep.subr.bf16.mxu0 0
  %406 = vmatpush1.bf16.msra.mxu0 0
  %407 = vmatprep.subr.bf16.mxu0 0
  %408 = vmatpush1.bf16.msra.mxu0 0
  %409 = vmatprep.subr.bf16.mxu0 0
  %410 = vmatpush1.bf16.msra.mxu0 0
  %411 = vmatprep.subr.bf16.mxu0 0
  %412 = vmatpush1.bf16.msra.mxu0 0
  %413 = vmatprep.mubr.bf16.mxu0 0
  %414 = vmatmul.mubr.bf16.gmra.mrb[0].mxu0 %v317
  %v415 = vpop.f32.mrb[0].mxu0
  %v416 = vadd.f32 0.0, %v415
  %v417 = vpop.f32.mrb[0].mxu0
  %v418 = vpop.f32.mrb[0].mxu0
  %v419 = vadd.f32 0.0, %v418
  %v420 = vpop.f32.mrb[0].mxu0
  %421 = vmatprep.mubr.bf16.mxu0 0
  %422 = vmatmul.mubr.bf16.gmra.mrb[0].mxu0 %v318
  %v423 = vpop.f32.mrb[0].mxu0
  %v424 = vadd.f32 0.0, %v423
  %v425 = vpop.f32.mrb[0].mxu0
  %v426 = vpop.f32.mrb[0].mxu0
  %v427 = vadd.f32 0.0, %v426
  %v428 = vpop.f32.mrb[0].mxu0
  %429 = vmatprep.mubr.bf16.mxu0 0
  %430 = vmatmul.mubr.bf16.gmra.mrb[0].mxu0 %v319
  %v431 = vpop.f32.mrb[0].mxu0
  %v432 = vadd.f32 0.0, %v431
  %v433 = vpop.f32.mrb[0].mxu0
  %v434 = vpop.f32.mrb[0].mxu0
  %v435 = vadd.f32 0.0, %v434
  %v436 = vpop.f32.mrb[0].mxu0
  %437 = vmatprep.mubr.bf16.mxu0 0
  %438 = vmatmul.mubr.bf16.gmra.mrb[0].mxu0 %v320
  %v439 = vpop.f32.mrb[0].mxu0
  %v440 = vadd.f32 0.0, %v439
  %v441 = vpop.f32.mrb[0].mxu0
  %v442 = vpop.f32.mrb[0].mxu0
  %v443 = vadd.f32 0.0, %v442
  %v444 = vpop.f32.mrb[0].mxu0
  %445 = vmatprep.mubr.bf16.mxu0 0
  %446 = vmatmul.mubr.bf16.gmra.mrb[0].mxu0 %v321
  %v447 = vpop.f32.mrb[0].mxu0
  %v448 = vadd.f32 0.0, %v447
  %v449 = vpop.f32.mrb[0].mxu0
  %v450 = vpop.f32.mrb[0].mxu0
  %v451 = vadd.f32 0.0, %v450
  %v452 = vpop.f32.mrb[0].mxu0
  %453 = vmatprep.mubr.bf16.mxu0 0
  %454 = vmatmul.mubr.bf16.gmra.mrb[0].mxu0 %v322
  %v455 = vpop.f32.mrb[0].mxu0
  %v456 = vadd.f32 0.0, %v455
  %v457 = vpop.f32.mrb[0].mxu0
  %v458 = vpop.f32.mrb[0].mxu0
  %v459 = vadd.f32 0.0, %v458
  %v460 = vpop.f32.mrb[0].mxu0
  %461 = vmatprep.mubr.bf16.mxu0 0
  %462 = vmatmul.mubr.bf16.gmra.mrb[0].mxu0 %v323
  %v463 = vpop.f32.mrb[0].mxu0
  %v464 = vadd.f32 0.0, %v463
  %v465 = vpop.f32.mrb[0].mxu0
  %v466 = vpop.f32.mrb[0].mxu0
  %v467 = vadd.f32 0.0, %v466
  %v468 = vpop.f32.mrb[0].mxu0
  %469 = vmatprep.mubr.bf16.mxu0 0
  %470 = vmatmul.mubr.bf16.gmra.mrb[0].mxu0 %v324
  %v471 = vpop.f32.mrb[0].mxu0
  %v472 = vadd.f32 0.0, %v471
  %v473 = vpop.f32.mrb[0].mxu0
  %v474 = vpop.f32.mrb[0].mxu0
  %v475 = vadd.f32 0.0, %v474
  %v476 = vpop.f32.mrb[0].mxu0
  %477 = vdwg.mxu0
  %v494 = vunpack.c.l.b16 %v33
  %v495 = vunpack.c.l.b16 %v34
  %v496 = vunpack.c.l.b16 %v35
  %v497 = vunpack.c.l.b16 %v36
  %v498 = vunpack.c.l.b16 %v37
  %v499 = vunpack.c.l.b16 %v38
  %v500 = vunpack.c.l.b16 %v39
  %v501 = vunpack.c.l.b16 %v40
  %v502 = vunpack.c.l.b16 %v41
  %v503 = vunpack.c.l.b16 %v42
  %v504 = vunpack.c.l.b16 %v43
  %v505 = vunpack.c.l.b16 %v44
  %v506 = vunpack.c.l.b16 %v45
  %v507 = vunpack.c.l.b16 %v46
  %v508 = vunpack.c.l.b16 %v47
  %v509 = vunpack.c.l.b16 %v48
  %v510 = vpack.c.b16 %v495, %v494
  %v511 = vpack.c.b16 %v497, %v496
  %v512 = vpack.c.b16 %v499, %v498
  %v513 = vpack.c.b16 %v501, %v500
  %v514 = vpack.c.b16 %v503, %v502
  %v515 = vpack.c.b16 %v505, %v504
  %v516 = vpack.c.b16 %v507, %v506
  %v517 = vpack.c.b16 %v509, %v508
  %v542 = vunpack.c.l.b16 %v49
  %v543 = vunpack.c.l.b16 %v50
  %v544 = vunpack.c.l.b16 %v51
  %v545 = vunpack.c.l.b16 %v52
  %v546 = vunpack.c.l.b16 %v53
  %v547 = vunpack.c.l.b16 %v54
  %v548 = vunpack.c.l.b16 %v55
  %v549 = vunpack.c.l.b16 %v56
  %v550 = vunpack.c.l.b16 %v57
  %v551 = vunpack.c.l.b16 %v58
  %v552 = vunpack.c.l.b16 %v59
  %v553 = vunpack.c.l.b16 %v60
  %v554 = vunpack.c.l.b16 %v61
  %v555 = vunpack.c.l.b16 %v62
  %v556 = vunpack.c.l.b16 %v63
  %v557 = vunpack.c.l.b16 %v64
  %v558 = vpack.c.b16 %v543, %v542
  %v559 = vpack.c.b16 %v545, %v544
  %v560 = vpack.c.b16 %v547, %v546
  %v561 = vpack.c.b16 %v549, %v548
  %v562 = vpack.c.b16 %v551, %v550
  %v563 = vpack.c.b16 %v553, %v552
  %v564 = vpack.c.b16 %v555, %v554
  %v565 = vpack.c.b16 %v557, %v556
  %574 = vmatprep.subr.bf16.mxu0 0
  %575 = vmatpush1.bf16.msra.mxu0 %v558
  %576 = vmatprep.subr.bf16.mxu0 0
  %577 = vmatpush1.bf16.msra.mxu0 %v559
  %578 = vmatprep.subr.bf16.mxu0 0
  %579 = vmatpush1.bf16.msra.mxu0 %v560
  %580 = vmatprep.subr.bf16.mxu0 0
  %581 = vmatpush1.bf16.msra.mxu0 %v561
  %582 = vmatprep.subr.bf16.mxu0 0
  %583 = vmatpush1.bf16.msra.mxu0 %v562
  %584 = vmatprep.subr.bf16.mxu0 0
  %585 = vmatpush1.bf16.msra.mxu0 %v563
  %586 = vmatprep.subr.bf16.mxu0 0
  %587 = vmatpush1.bf16.msra.mxu0 %v564
  %588 = vmatprep.subr.bf16.mxu0 0
  %589 = vmatpush1.bf16.msra.mxu0 %v565
  %590 = vmatprep.subr.bf16.mxu0 0
  %591 = vmatpush1.bf16.msra.mxu0 0
  %592 = vmatprep.subr.bf16.mxu0 0
  %593 = vmatpush1.bf16.msra.mxu0 0
  %594 = vmatprep.subr.bf16.mxu0 0
  %595 = vmatpush1.bf16.msra.mxu0 0
  %596 = vmatprep.subr.bf16.mxu0 0
  %597 = vmatpush1.bf16.msra.mxu0 0
  %598 = vmatprep.subr.bf16.mxu0 0
  %599 = vmatpush1.bf16.msra.mxu0 0
  %600 = vmatprep.subr.bf16.mxu0 0
  %601 = vmatpush1.bf16.msra.mxu0 0
  %602 = vmatprep.subr.bf16.mxu0 0
  %603 = vmatpush1.bf16.msra.mxu0 0
  %604 = vmatprep.subr.bf16.mxu0 0
  %605 = vmatpush1.bf16.msra.mxu0 0
  %606 = vmatprep.mubr.bf16.mxu0 0
  %607 = vmatmul.mubr.bf16.gmra.mrb[0].mxu0 %v510
  %v608 = vpop.f32.mrb[0].mxu0
  %v609 = vadd.f32 %v416, %v608
  %v610 = vpop.f32.mrb[0].mxu0
  %v611 = vpop.f32.mrb[0].mxu0
  %v612 = vadd.f32 %v419, %v611
  %v613 = vpop.f32.mrb[0].mxu0
  %614 = vmatprep.mubr.bf16.mxu0 0
  %615 = vmatmul.mubr.bf16.gmra.mrb[0].mxu0 %v511
  %v616 = vpop.f32.mrb[0].mxu0
  %v617 = vadd.f32 %v424, %v616
  %v618 = vpop.f32.mrb[0].mxu0
  %v619 = vpop.f32.mrb[0].mxu0
  %v620 = vadd.f32 %v427, %v619
  %v621 = vpop.f32.mrb[0].mxu0
  %622 = vmatprep.mubr.bf16.mxu0 0
  %623 = vmatmul.mubr.bf16.gmra.mrb[0].mxu0 %v512
  %v624 = vpop.f32.mrb[0].mxu0
  %v625 = vadd.f32 %v432, %v624
  %v626 = vpop.f32.mrb[0].mxu0
  %v627 = vpop.f32.mrb[0].mxu0
  %v628 = vadd.f32 %v435, %v627
  %v629 = vpop.f32.mrb[0].mxu0
  %630 = vmatprep.mubr.bf16.mxu0 0
  %631 = vmatmul.mubr.bf16.gmra.mrb[0].mxu0 %v513
  %v632 = vpop.f32.mrb[0].mxu0
  %v633 = vadd.f32 %v440, %v632
  %v634 = vpop.f32.mrb[0].mxu0
  %v635 = vpop.f32.mrb[0].mxu0
  %v636 = vadd.f32 %v443, %v635
  %v637 = vpop.f32.mrb[0].mxu0
  %638 = vmatprep.mubr.bf16.mxu0 0
  %639 = vmatmul.mubr.bf16.gmra.mrb[0].mxu0 %v514
  %v640 = vpop.f32.mrb[0].mxu0
  %v641 = vadd.f32 %v448, %v640
  %v642 = vpop.f32.mrb[0].mxu0
  %v643 = vpop.f32.mrb[0].mxu0
  %v644 = vadd.f32 %v451, %v643
  %v645 = vpop.f32.mrb[0].mxu0
  %646 = vmatprep.mubr.bf16.mxu0 0
  %647 = vmatmul.mubr.bf16.gmra.mrb[0].mxu0 %v515
  %v648 = vpop.f32.mrb[0].mxu0
  %v649 = vadd.f32 %v456, %v648
  %v650 = vpop.f32.mrb[0].mxu0
  %v651 = vpop.f32.mrb[0].mxu0
  %v652 = vadd.f32 %v459, %v651
  %v653 = vpop.f32.mrb[0].mxu0
  %654 = vmatprep.mubr.bf16.mxu0 0
  %655 = vmatmul.mubr.bf16.gmra.mrb[0].mxu0 %v516
  %v656 = vpop.f32.mrb[0].mxu0
  %v657 = vadd.f32 %v464, %v656
  %v658 = vpop.f32.mrb[0].mxu0
  %v659 = vpop.f32.mrb[0].mxu0
  %v660 = vadd.f32 %v467, %v659
  %v661 = vpop.f32.mrb[0].mxu0
  %662 = vmatprep.mubr.bf16.mxu0 0
  %663 = vmatmul.mubr.bf16.gmra.mrb[0].mxu0 %v517
  %v664 = vpop.f32.mrb[0].mxu0
  %v665 = vadd.f32 %v472, %v664
  %v666 = vpop.f32.mrb[0].mxu0
  %v667 = vpop.f32.mrb[0].mxu0
  %v668 = vadd.f32 %v475, %v667
  %v669 = vpop.f32.mrb[0].mxu0
  %670 = vdwg.mxu0
  %v671 = vld [vmem:[%s0] sm:$0xe]
  %v672 = vld [vmem:[%s0 + $0xc] sm:$0xe]
  %v673 = vld [vmem:[%s0 + $0x18] sm:$0xe]
  %v674 = vld [vmem:[%s0 + $0x24] sm:$0xe]
  %v675 = vld [vmem:[%s0 + $0x30] sm:$0xe]
  %v676 = vld [vmem:[%s0 + $0x3c] sm:$0xe]
  %v677 = vld [vmem:[%s0 + $0x48] sm:$0xe]
  %v678 = vld [vmem:[%s0 + $0x54] sm:$0xe]
  %vm703 = vcmask 1042432
  %vm704 = vcmask 1046532
  %vm705 = vmor %vm703, %vm704
  %v706 = vrot.slane %v671, 5
  %v707 = vrot.slane %v706, 4
  %v708 = vrot.slane %v66, 5
  %v709 = vsel %vm705, %v707, %v708
  %v710 = vrot.slane %v708, 4
  %v711 = vrot.slane %v67, 5
  %v712 = vsel %vm705, %v710, %v711
  %v713 = vrot.slane %v672, 5
  %v714 = vrot.slane %v713, 4
  %v715 = vrot.slane %v69, 5
  %v716 = vsel %vm705, %v714, %v715
  %v717 = vrot.slane %v715, 4
  %v718 = vrot.slane %v70, 5
  %v719 = vsel %vm705, %v717, %v718
  %v720 = vrot.slane %v673, 5
  %v721 = vrot.slane %v720, 4
  %v722 = vrot.slane %v72, 5
  %v723 = vsel %vm705, %v721, %v722
  %v724 = vrot.slane %v722, 4
  %v725 = vrot.slane %v73, 5
  %v726 = vsel %vm705, %v724, %v725
  %v727 = vrot.slane %v674, 5
  %v728 = vrot.slane %v727, 4
  %v729 = vrot.slane %v75, 5
  %v730 = vsel %vm705, %v728, %v729
  %v731 = vrot.slane %v729, 4
  %v732 = vrot.slane %v76, 5
  %v733 = vsel %vm705, %v731, %v732
  %v734 = vrot.slane %v675, 5
  %v735 = vrot.slane %v734, 4
  %v736 = vrot.slane %v78, 5
  %v737 = vsel %vm705, %v735, %v736
  %v738 = vrot.slane %v736, 4
  %v739 = vrot.slane %v79, 5
  %v740 = vsel %vm705, %v738, %v739
  %v741 = vrot.slane %v676, 5
  %v742 = vrot.slane %v741, 4
  %v743 = vrot.slane %v81, 5
  %v744 = vsel %vm705, %v742, %v743
  %v745 = vrot.slane %v743, 4
  %v746 = vrot.slane %v82, 5
  %v747 = vsel %vm705, %v745, %v746
  %v748 = vrot.slane %v677, 5
  %v749 = vrot.slane %v748, 4
  %v750 = vrot.slane %v84, 5
  %v751 = vsel %vm705, %v749, %v750
  %v752 = vrot.slane %v750, 4
  %v753 = vrot.slane %v85, 5
  %v754 = vsel %vm705, %v752, %v753
  %v755 = vrot.slane %v678, 5
  %v756 = vrot.slane %v755, 4
  %v757 = vrot.slane %v87, 5
  %v758 = vsel %vm705, %v756, %v757
  %v759 = vrot.slane %v757, 4
  %v760 = vrot.slane %v88, 5
  %v761 = vsel %vm705, %v759, %v760
  %s762 = scalar_lea.vmem %s1, 128
  %v763 = vld [vmem:[%s762] sm:$0xf]
  %v764 = vld [vmem:[%s762 + $0x4] sm:$0xf]
  %v765 = vld [vmem:[%s762 + $0x8] sm:$0xf]
  %v766 = vld [vmem:[%s762 + $0xc] sm:$0xf]
  %v767 = vld [vmem:[%s762 + $0x10] sm:$0xf]
  %v768 = vld [vmem:[%s762 + $0x14] sm:$0xf]
  %v769 = vld [vmem:[%s762 + $0x18] sm:$0xf]
  %v770 = vld [vmem:[%s762 + $0x1c] sm:$0xf]
  %v771 = vld [vmem:[%s762 + $0x20] sm:$0xf]
  %v772 = vld [vmem:[%s762 + $0x24] sm:$0xf]
  %v773 = vld [vmem:[%s762 + $0x28] sm:$0xf]
  %v774 = vld [vmem:[%s762 + $0x2c] sm:$0xf]
  %v775 = vld [vmem:[%s762 + $0x30] sm:$0xf]
  %v776 = vld [vmem:[%s762 + $0x34] sm:$0xf]
  %v777 = vld [vmem:[%s762 + $0x38] sm:$0xf]
  %v778 = vld [vmem:[%s762 + $0x3c] sm:$0xf]
  %v779 = vunpack.c.l.b16 %v709
  %v780 = vunpack.c.l.b16 %v712
  %v781 = vunpack.c.l.b16 %v716
  %v782 = vunpack.c.l.b16 %v719
  %v783 = vunpack.c.l.b16 %v723
  %v784 = vunpack.c.l.b16 %v726
  %v785 = vunpack.c.l.b16 %v730
  %v786 = vunpack.c.l.b16 %v733
  %v787 = vunpack.c.l.b16 %v737
  %v788 = vunpack.c.l.b16 %v740
  %v789 = vunpack.c.l.b16 %v744
  %v790 = vunpack.c.l.b16 %v747
  %v791 = vunpack.c.l.b16 %v751
  %v792 = vunpack.c.l.b16 %v754
  %v793 = vunpack.c.l.b16 %v758
  %v794 = vunpack.c.l.b16 %v761
  %v795 = vpack.c.b16 %v780, %v779
  %v796 = vpack.c.b16 %v782, %v781
  %v797 = vpack.c.b16 %v784, %v783
  %v798 = vpack.c.b16 %v786, %v785
  %v799 = vpack.c.b16 %v788, %v787
  %v800 = vpack.c.b16 %v790, %v789
  %v801 = vpack.c.b16 %v792, %v791
  %v802 = vpack.c.b16 %v794, %v793
  %v827 = vunpack.c.l.b16 %v763
  %v828 = vunpack.c.l.b16 %v764
  %v829 = vunpack.c.l.b16 %v765
  %v830 = vunpack.c.l.b16 %v766
  %v831 = vunpack.c.l.b16 %v767
  %v832 = vunpack.c.l.b16 %v768
  %v833 = vunpack.c.l.b16 %v769
  %v834 = vunpack.c.l.b16 %v770
  %v835 = vunpack.c.l.b16 %v771
  %v836 = vunpack.c.l.b16 %v772
  %v837 = vunpack.c.l.b16 %v773
  %v838 = vunpack.c.l.b16 %v774
  %v839 = vunpack.c.l.b16 %v775
  %v840 = vunpack.c.l.b16 %v776
  %v841 = vunpack.c.l.b16 %v777
  %v842 = vunpack.c.l.b16 %v778
  %v843 = vpack.c.b16 %v828, %v827
  %v844 = vpack.c.b16 %v830, %v829
  %v845 = vpack.c.b16 %v832, %v831
  %v846 = vpack.c.b16 %v834, %v833
  %v847 = vpack.c.b16 %v836, %v835
  %v848 = vpack.c.b16 %v838, %v837
  %v849 = vpack.c.b16 %v840, %v839
  %v850 = vpack.c.b16 %v842, %v841
  %859 = vmatprep.subr.bf16.mxu0 0
  %860 = vmatpush1.bf16.msra.mxu0 %v843
  %861 = vmatprep.subr.bf16.mxu0 0
  %862 = vmatpush1.bf16.msra.mxu0 %v844
  %863 = vmatprep.subr.bf16.mxu0 0
  %864 = vmatpush1.bf16.msra.mxu0 %v845
  %865 = vmatprep.subr.bf16.mxu0 0
  %866 = vmatpush1.bf16.msra.mxu0 %v846
  %867 = vmatprep.subr.bf16.mxu0 0
  %868 = vmatpush1.bf16.msra.mxu0 %v847
  %869 = vmatprep.subr.bf16.mxu0 0
  %870 = vmatpush1.bf16.msra.mxu0 %v848
  %871 = vmatprep.subr.bf16.mxu0 0
  %872 = vmatpush1.bf16.msra.mxu0 %v849
  %873 = vmatprep.subr.bf16.mxu0 0
  %874 = vmatpush1.bf16.msra.mxu0 %v850
  %875 = vmatprep.subr.bf16.mxu0 0
  %876 = vmatpush1.bf16.msra.mxu0 0
  %877 = vmatprep.subr.bf16.mxu0 0
  %878 = vmatpush1.bf16.msra.mxu0 0
  %879 = vmatprep.subr.bf16.mxu0 0
  %880 = vmatpush1.bf16.msra.mxu0 0
  %881 = vmatprep.subr.bf16.mxu0 0
  %882 = vmatpush1.bf16.msra.mxu0 0
  %883 = vmatprep.subr.bf16.mxu0 0
  %884 = vmatpush1.bf16.msra.mxu0 0
  %885 = vmatprep.subr.bf16.mxu0 0
  %886 = vmatpush1.bf16.msra.mxu0 0
  %887 = vmatprep.subr.bf16.mxu0 0
  %888 = vmatpush1.bf16.msra.mxu0 0
  %889 = vmatprep.subr.bf16.mxu0 0
  %890 = vmatpush1.bf16.msra.mxu0 0
  %891 = vmatprep.mubr.bf16.mxu0 0
  %892 = vmatmul.mubr.bf16.gmra.mrb[0].mxu0 %v795
  %v893 = vpop.f32.mrb[0].mxu0
  %v894 = vadd.f32 0.0, %v893
  %v895 = vpop.f32.mrb[0].mxu0
  %v896 = vpop.f32.mrb[0].mxu0
  %v897 = vadd.f32 0.0, %v896
  %v898 = vpop.f32.mrb[0].mxu0
  %899 = vmatprep.mubr.bf16.mxu0 0
  %900 = vmatmul.mubr.bf16.gmra.mrb[0].mxu0 %v796
  %v901 = vpop.f32.mrb[0].mxu0
  %v902 = vadd.f32 0.0, %v901
  %v903 = vpop.f32.mrb[0].mxu0
  %v904 = vpop.f32.mrb[0].mxu0
  %v905 = vadd.f32 0.0, %v904
  %v906 = vpop.f32.mrb[0].mxu0
  %907 = vmatprep.mubr.bf16.mxu0 0
  %908 = vmatmul.mubr.bf16.gmra.mrb[0].mxu0 %v797
  %v909 = vpop.f32.mrb[0].mxu0
  %v910 = vadd.f32 0.0, %v909
  %v911 = vpop.f32.mrb[0].mxu0
  %v912 = vpop.f32.mrb[0].mxu0
  %v913 = vadd.f32 0.0, %v912
  %v914 = vpop.f32.mrb[0].mxu0
  %915 = vmatprep.mubr.bf16.mxu0 0
  %916 = vmatmul.mubr.bf16.gmra.mrb[0].mxu0 %v798
  %v917 = vpop.f32.mrb[0].mxu0
  %v918 = vadd.f32 0.0, %v917
  %v919 = vpop.f32.mrb[0].mxu0
  %v920 = vpop.f32.mrb[0].mxu0
  %v921 = vadd.f32 0.0, %v920
  %v922 = vpop.f32.mrb[0].mxu0
  %923 = vmatprep.mubr.bf16.mxu0 0
  %924 = vmatmul.mubr.bf16.gmra.mrb[0].mxu0 %v799
  %v925 = vpop.f32.mrb[0].mxu0
  %v926 = vadd.f32 0.0, %v925
  %v927 = vpop.f32.mrb[0].mxu0
  %v928 = vpop.f32.mrb[0].mxu0
  %v929 = vadd.f32 0.0, %v928
  %v930 = vpop.f32.mrb[0].mxu0
  %931 = vmatprep.mubr.bf16.mxu0 0
  %932 = vmatmul.mubr.bf16.gmra.mrb[0].mxu0 %v800
  %v933 = vpop.f32.mrb[0].mxu0
  %v934 = vadd.f32 0.0, %v933
  %v935 = vpop.f32.mrb[0].mxu0
  %v936 = vpop.f32.mrb[0].mxu0
  %v937 = vadd.f32 0.0, %v936
  %v938 = vpop.f32.mrb[0].mxu0
  %939 = vmatprep.mubr.bf16.mxu0 0
  %940 = vmatmul.mubr.bf16.gmra.mrb[0].mxu0 %v801
  %v941 = vpop.f32.mrb[0].mxu0
  %v942 = vadd.f32 0.0, %v941
  %v943 = vpop.f32.mrb[0].mxu0
  %v944 = vpop.f32.mrb[0].mxu0
  %v945 = vadd.f32 0.0, %v944
  %v946 = vpop.f32.mrb[0].mxu0
  %947 = vmatprep.mubr.bf16.mxu0 0
  %948 = vmatmul.mubr.bf16.gmra.mrb[0].mxu0 %v802
  %v949 = vpop.f32.mrb[0].mxu0
  %v950 = vadd.f32 0.0, %v949
  %v951 = vpop.f32.mrb[0].mxu0
  %v952 = vpop.f32.mrb[0].mxu0
  %v953 = vadd.f32 0.0, %v952
  %v954 = vpop.f32.mrb[0].mxu0
  %955 = vdwg.mxu0
  %v956 = vadd.f32 %v609, %v894
  %v957 = vadd.f32 %v612, %v897
  %v958 = vadd.f32 %v617, %v902
  %v959 = vadd.f32 %v620, %v905
  %v960 = vadd.f32 %v625, %v910
  %v961 = vadd.f32 %v628, %v913
  %v962 = vadd.f32 %v633, %v918
  %v963 = vadd.f32 %v636, %v921
  %v964 = vadd.f32 %v641, %v926
  %v965 = vadd.f32 %v644, %v929
  %v966 = vadd.f32 %v649, %v934
  %v967 = vadd.f32 %v652, %v937
  %v968 = vadd.f32 %v657, %v942
  %v969 = vadd.f32 %v660, %v945
  %v970 = vadd.f32 %v665, %v950
  %v971 = vadd.f32 %v668, %v953
  %v972 = vlaneseq
  %v973 = vshrl.u32 %v972, 7
  %v974 = vadd.s32 %v973, 8
  %vm975 = vcmp.lt.s32.totalorder %v973, 14
  %vm976 = vcmp.lt.s32.totalorder %v974, 14
  %v977 = vsel %vm975, %v956, -inf
  %v978 = vsel %vm976, %v957, -inf
  %v979 = vsel %vm975, %v958, -inf
  %v980 = vsel %vm976, %v959, -inf
  %v981 = vsel %vm975, %v960, -inf
  %v982 = vsel %vm976, %v961, -inf
  %v983 = vsel %vm975, %v962, -inf
  %v984 = vsel %vm976, %v963, -inf
  %v985 = vsel %vm975, %v964, -inf
  %v986 = vsel %vm976, %v965, -inf
  %v987 = vsel %vm975, %v966, -inf
  %v988 = vsel %vm976, %v967, -inf
  %v989 = vsel %vm975, %v968, -inf
  %v990 = vsel %vm976, %v969, -inf
  %v991 = vsel %vm975, %v970, -inf
  %v992 = vsel %vm976, %v971, -inf
  %v993 = vmax.f32 %v977, %v978
  %v994 = vrot.slane %v993, 4
  %v995 = vmax.f32 %v993, %v994
  %v996 = vrot.slane %v995, 2
  %v997 = vmax.f32 %v995, %v996
  %v998 = vrot.slane %v997, 1
  %v999 = vmax.f32 %v997, %v998
  %v1000 = vmax.f32 %v979, %v980
  %v1001 = vrot.slane %v1000, 4
  %v1002 = vmax.f32 %v1000, %v1001
  %v1003 = vrot.slane %v1002, 2
  %v1004 = vmax.f32 %v1002, %v1003
  %v1005 = vrot.slane %v1004, 1
  %v1006 = vmax.f32 %v1004, %v1005
  %v1007 = vmax.f32 %v981, %v982
  %v1008 = vrot.slane %v1007, 4
  %v1009 = vmax.f32 %v1007, %v1008
  %v1010 = vrot.slane %v1009, 2
  %v1011 = vmax.f32 %v1009, %v1010
  %v1012 = vrot.slane %v1011, 1
  %v1013 = vmax.f32 %v1011, %v1012
  %v1014 = vmax.f32 %v983, %v984
  %v1015 = vrot.slane %v1014, 4
  %v1016 = vmax.f32 %v1014, %v1015
  %v1017 = vrot.slane %v1016, 2
  %v1018 = vmax.f32 %v1016, %v1017
  %v1019 = vrot.slane %v1018, 1
  %v1020 = vmax.f32 %v1018, %v1019
  %v1021 = vmax.f32 %v985, %v986
  %v1022 = vrot.slane %v1021, 4
  %v1023 = vmax.f32 %v1021, %v1022
  %v1024 = vrot.slane %v1023, 2
  %v1025 = vmax.f32 %v1023, %v1024
  %v1026 = vrot.slane %v1025, 1
  %v1027 = vmax.f32 %v1025, %v1026
  %v1028 = vmax.f32 %v987, %v988
  %v1029 = vrot.slane %v1028, 4
  %v1030 = vmax.f32 %v1028, %v1029
  %v1031 = vrot.slane %v1030, 2
  %v1032 = vmax.f32 %v1030, %v1031
  %v1033 = vrot.slane %v1032, 1
  %v1034 = vmax.f32 %v1032, %v1033
  %v1035 = vmax.f32 %v989, %v990
  %v1036 = vrot.slane %v1035, 4
  %v1037 = vmax.f32 %v1035, %v1036
  %v1038 = vrot.slane %v1037, 2
  %v1039 = vmax.f32 %v1037, %v1038
  %v1040 = vrot.slane %v1039, 1
  %v1041 = vmax.f32 %v1039, %v1040
  %v1042 = vmax.f32 %v991, %v992
  %v1043 = vrot.slane %v1042, 4
  %v1044 = vmax.f32 %v1042, %v1043
  %v1045 = vrot.slane %v1044, 2
  %v1046 = vmax.f32 %v1044, %v1045
  %v1047 = vrot.slane %v1046, 1
  %v1048 = vmax.f32 %v1046, %v1047
  %v1049 = vld [vmem:[%s2] sm:$0x1]
  %v1051 = vlaneseq
  %v1052 = vshrl.u32 %v1051, 7
  %v1053 = vsub.s32 0, %v1052
  %v1054 = vrot.slane %v1049, %v1053
  %v1056 = vadd.f32 %v999, %v1054
  %v1057 = vadd.f32 %v1006, %v1054
  %v1058 = vadd.f32 %v1013, %v1054
  %v1059 = vadd.f32 %v1020, %v1054
  %v1060 = vadd.f32 %v1027, %v1054
  %v1061 = vadd.f32 %v1034, %v1054
  %v1062 = vadd.f32 %v1041, %v1054
  %v1063 = vadd.f32 %v1048, %v1054
  %v1064 = vmax.f32 %v1056, 0.0
  %v1065 = vmax.f32 %v1057, 0.0
  %v1066 = vmax.f32 %v1058, 0.0
  %v1067 = vmax.f32 %v1059, 0.0
  %v1068 = vmax.f32 %v1060, 0.0
  %v1069 = vmax.f32 %v1061, 0.0
  %v1070 = vmax.f32 %v1062, 0.0
  %v1071 = vmax.f32 %v1063, 0.0
  %v1072 = vld [vmem:[%s3] sm:$0xf]
  %v1073 = vld [vmem:[%s3 + $0x4] sm:$0xf]
  %v1074 = vld [vmem:[%s3 + $0x8] sm:$0xf]
  %v1075 = vld [vmem:[%s3 + $0xc] sm:$0xf]
  %v1076 = vld [vmem:[%s3 + $0x10] sm:$0xf]
  %v1077 = vld [vmem:[%s3 + $0x14] sm:$0xf]
  %v1078 = vld [vmem:[%s3 + $0x18] sm:$0xf]
  %v1079 = vld [vmem:[%s3 + $0x1c] sm:$0xf]
  %v1080 = vld [vmem:[%s3 + $0x20] sm:$0xf]
  %v1081 = vld [vmem:[%s3 + $0x24] sm:$0xf]
  %v1082 = vld [vmem:[%s3 + $0x28] sm:$0xf]
  %v1083 = vld [vmem:[%s3 + $0x2c] sm:$0xf]
  %v1084 = vld [vmem:[%s3 + $0x30] sm:$0xf]
  %v1085 = vld [vmem:[%s3 + $0x34] sm:$0xf]
  %v1086 = vld [vmem:[%s3 + $0x38] sm:$0xf]
  %v1087 = vld [vmem:[%s3 + $0x3c] sm:$0xf]
  %s1088 = scalar_lea.vmem %s3, 64
  %v1089 = vld [vmem:[%s1088] sm:$0xf]
  %v1090 = vld [vmem:[%s1088 + $0x4] sm:$0xf]
  %v1091 = vld [vmem:[%s1088 + $0x8] sm:$0xf]
  %v1092 = vld [vmem:[%s1088 + $0xc] sm:$0xf]
  %v1093 = vld [vmem:[%s1088 + $0x10] sm:$0xf]
  %v1094 = vld [vmem:[%s1088 + $0x14] sm:$0xf]
  %v1095 = vld [vmem:[%s1088 + $0x18] sm:$0xf]
  %v1096 = vld [vmem:[%s1088 + $0x1c] sm:$0xf]
  %v1097 = vld [vmem:[%s1088 + $0x20] sm:$0xf]
  %v1098 = vld [vmem:[%s1088 + $0x24] sm:$0xf]
  %v1099 = vld [vmem:[%s1088 + $0x28] sm:$0xf]
  %v1100 = vld [vmem:[%s1088 + $0x2c] sm:$0xf]
  %v1101 = vld [vmem:[%s1088 + $0x30] sm:$0xf]
  %v1102 = vld [vmem:[%s1088 + $0x34] sm:$0xf]
  %v1103 = vld [vmem:[%s1088 + $0x38] sm:$0xf]
  %v1104 = vld [vmem:[%s1088 + $0x3c] sm:$0xf]
  %v1121 = vunpack.c.l.b16 %v1089
  %v1122 = vunpack.c.l.b16 %v1090
  %v1123 = vunpack.c.l.b16 %v1091
  %v1124 = vunpack.c.l.b16 %v1092
  %v1125 = vunpack.c.l.b16 %v1093
  %v1126 = vunpack.c.l.b16 %v1094
  %v1127 = vunpack.c.l.b16 %v1095
  %v1128 = vunpack.c.l.b16 %v1096
  %v1129 = vunpack.c.l.b16 %v1097
  %v1130 = vunpack.c.l.b16 %v1098
  %v1131 = vunpack.c.l.b16 %v1099
  %v1132 = vunpack.c.l.b16 %v1100
  %v1133 = vunpack.c.l.b16 %v1101
  %v1134 = vunpack.c.l.b16 %v1102
  %v1135 = vunpack.c.l.b16 %v1103
  %v1136 = vunpack.c.l.b16 %v1104
  %v1137 = vpack.c.b16 %v1122, %v1121
  %v1138 = vpack.c.b16 %v1124, %v1123
  %v1139 = vpack.c.b16 %v1126, %v1125
  %v1140 = vpack.c.b16 %v1128, %v1127
  %v1141 = vpack.c.b16 %v1130, %v1129
  %v1142 = vpack.c.b16 %v1132, %v1131
  %v1143 = vpack.c.b16 %v1134, %v1133
  %v1144 = vpack.c.b16 %v1136, %v1135
  %1153 = vmatprep.subr.bf16.mxu0 0
  %1154 = vmatpush1.bf16.msra.mxu0 %v1137
  %1155 = vmatprep.subr.bf16.mxu0 0
  %1156 = vmatpush1.bf16.msra.mxu0 %v1138
  %1157 = vmatprep.subr.bf16.mxu0 0
  %1158 = vmatpush1.bf16.msra.mxu0 %v1139
  %1159 = vmatprep.subr.bf16.mxu0 0
  %1160 = vmatpush1.bf16.msra.mxu0 %v1140
  %1161 = vmatprep.subr.bf16.mxu0 0
  %1162 = vmatpush1.bf16.msra.mxu0 %v1141
  %1163 = vmatprep.subr.bf16.mxu0 0
  %1164 = vmatpush1.bf16.msra.mxu0 %v1142
  %1165 = vmatprep.subr.bf16.mxu0 0
  %1166 = vmatpush1.bf16.msra.mxu0 %v1143
  %1167 = vmatprep.subr.bf16.mxu0 0
  %1168 = vmatpush1.bf16.msra.mxu0 %v1144
  %1169 = vmatprep.subr.bf16.mxu0 0
  %1170 = vmatpush1.bf16.msra.mxu0 0
  %1171 = vmatprep.subr.bf16.mxu0 0
  %1172 = vmatpush1.bf16.msra.mxu0 0
  %1173 = vmatprep.subr.bf16.mxu0 0
  %1174 = vmatpush1.bf16.msra.mxu0 0
  %1175 = vmatprep.subr.bf16.mxu0 0
  %1176 = vmatpush1.bf16.msra.mxu0 0
  %1177 = vmatprep.subr.bf16.mxu0 0
  %1178 = vmatpush1.bf16.msra.mxu0 0
  %1179 = vmatprep.subr.bf16.mxu0 0
  %1180 = vmatpush1.bf16.msra.mxu0 0
  %1181 = vmatprep.subr.bf16.mxu0 0
  %1182 = vmatpush1.bf16.msra.mxu0 0
  %1183 = vmatprep.subr.bf16.mxu0 0
  %1184 = vmatpush1.bf16.msra.mxu0 0
  %1185 = vmatprep.mubr.bf16.mxu0 0
  %1186 = vmatmul.mubr.bf16.gmra.mrb[0].mxu0 %v317
  %v1187 = vpop.f32.mrb[0].mxu0
  %v1188 = vadd.f32 0.0, %v1187
  %v1189 = vpop.f32.mrb[0].mxu0
  %v1190 = vpop.f32.mrb[0].mxu0
  %v1191 = vadd.f32 0.0, %v1190
  %v1192 = vpop.f32.mrb[0].mxu0
  %1193 = vmatprep.mubr.bf16.mxu0 0
  %1194 = vmatmul.mubr.bf16.gmra.mrb[0].mxu0 %v318
  %v1195 = vpop.f32.mrb[0].mxu0
  %v1196 = vadd.f32 0.0, %v1195
  %v1197 = vpop.f32.mrb[0].mxu0
  %v1198 = vpop.f32.mrb[0].mxu0
  %v1199 = vadd.f32 0.0, %v1198
  %v1200 = vpop.f32.mrb[0].mxu0
  %1201 = vmatprep.mubr.bf16.mxu0 0
  %1202 = vmatmul.mubr.bf16.gmra.mrb[0].mxu0 %v319
  %v1203 = vpop.f32.mrb[0].mxu0
  %v1204 = vadd.f32 0.0, %v1203
  %v1205 = vpop.f32.mrb[0].mxu0
  %v1206 = vpop.f32.mrb[0].mxu0
  %v1207 = vadd.f32 0.0, %v1206
  %v1208 = vpop.f32.mrb[0].mxu0
  %1209 = vmatprep.mubr.bf16.mxu0 0
  %1210 = vmatmul.mubr.bf16.gmra.mrb[0].mxu0 %v320
  %v1211 = vpop.f32.mrb[0].mxu0
  %v1212 = vadd.f32 0.0, %v1211
  %v1213 = vpop.f32.mrb[0].mxu0
  %v1214 = vpop.f32.mrb[0].mxu0
  %v1215 = vadd.f32 0.0, %v1214
  %v1216 = vpop.f32.mrb[0].mxu0
  %1217 = vmatprep.mubr.bf16.mxu0 0
  %1218 = vmatmul.mubr.bf16.gmra.mrb[0].mxu0 %v321
  %v1219 = vpop.f32.mrb[0].mxu0
  %v1220 = vadd.f32 0.0, %v1219
  %v1221 = vpop.f32.mrb[0].mxu0
  %v1222 = vpop.f32.mrb[0].mxu0
  %v1223 = vadd.f32 0.0, %v1222
  %v1224 = vpop.f32.mrb[0].mxu0
  %1225 = vmatprep.mubr.bf16.mxu0 0
  %1226 = vmatmul.mubr.bf16.gmra.mrb[0].mxu0 %v322
  %v1227 = vpop.f32.mrb[0].mxu0
  %v1228 = vadd.f32 0.0, %v1227
  %v1229 = vpop.f32.mrb[0].mxu0
  %v1230 = vpop.f32.mrb[0].mxu0
  %v1231 = vadd.f32 0.0, %v1230
  %v1232 = vpop.f32.mrb[0].mxu0
  %1233 = vmatprep.mubr.bf16.mxu0 0
  %1234 = vmatmul.mubr.bf16.gmra.mrb[0].mxu0 %v323
  %v1235 = vpop.f32.mrb[0].mxu0
  %v1236 = vadd.f32 0.0, %v1235
  %v1237 = vpop.f32.mrb[0].mxu0
  %v1238 = vpop.f32.mrb[0].mxu0
  %v1239 = vadd.f32 0.0, %v1238
  %v1240 = vpop.f32.mrb[0].mxu0
  %1241 = vmatprep.mubr.bf16.mxu0 0
  %1242 = vmatmul.mubr.bf16.gmra.mrb[0].mxu0 %v324
  %v1243 = vpop.f32.mrb[0].mxu0
  %v1244 = vadd.f32 0.0, %v1243
  %v1245 = vpop.f32.mrb[0].mxu0
  %v1246 = vpop.f32.mrb[0].mxu0
  %v1247 = vadd.f32 0.0, %v1246
  %v1248 = vpop.f32.mrb[0].mxu0
  %1249 = vdwg.mxu0
  %v1266 = vunpack.c.l.b16 %v1072
  %v1267 = vunpack.c.l.b16 %v1073
  %v1268 = vunpack.c.l.b16 %v1074
  %v1269 = vunpack.c.l.b16 %v1075
  %v1270 = vunpack.c.l.b16 %v1076
  %v1271 = vunpack.c.l.b16 %v1077
  %v1272 = vunpack.c.l.b16 %v1078
  %v1273 = vunpack.c.l.b16 %v1079
  %v1274 = vunpack.c.l.b16 %v1080
  %v1275 = vunpack.c.l.b16 %v1081
  %v1276 = vunpack.c.l.b16 %v1082
  %v1277 = vunpack.c.l.b16 %v1083
  %v1278 = vunpack.c.l.b16 %v1084
  %v1279 = vunpack.c.l.b16 %v1085
  %v1280 = vunpack.c.l.b16 %v1086
  %v1281 = vunpack.c.l.b16 %v1087
  %v1282 = vpack.c.b16 %v1267, %v1266
  %v1283 = vpack.c.b16 %v1269, %v1268
  %v1284 = vpack.c.b16 %v1271, %v1270
  %v1285 = vpack.c.b16 %v1273, %v1272
  %v1286 = vpack.c.b16 %v1275, %v1274
  %v1287 = vpack.c.b16 %v1277, %v1276
  %v1288 = vpack.c.b16 %v1279, %v1278
  %v1289 = vpack.c.b16 %v1281, %v1280
  %1298 = vmatprep.subr.bf16.mxu0 0
  %1299 = vmatpush1.bf16.msra.mxu0 %v1282
  %1300 = vmatprep.subr.bf16.mxu0 0
  %1301 = vmatpush1.bf16.msra.mxu0 %v1283
  %1302 = vmatprep.subr.bf16.mxu0 0
  %1303 = vmatpush1.bf16.msra.mxu0 %v1284
  %1304 = vmatprep.subr.bf16.mxu0 0
  %1305 = vmatpush1.bf16.msra.mxu0 %v1285
  %1306 = vmatprep.subr.bf16.mxu0 0
  %1307 = vmatpush1.bf16.msra.mxu0 %v1286
  %1308 = vmatprep.subr.bf16.mxu0 0
  %1309 = vmatpush1.bf16.msra.mxu0 %v1287
  %1310 = vmatprep.subr.bf16.mxu0 0
  %1311 = vmatpush1.bf16.msra.mxu0 %v1288
  %1312 = vmatprep.subr.bf16.mxu0 0
  %1313 = vmatpush1.bf16.msra.mxu0 %v1289
  %1314 = vmatprep.subr.bf16.mxu0 0
  %1315 = vmatpush1.bf16.msra.mxu0 0
  %1316 = vmatprep.subr.bf16.mxu0 0
  %1317 = vmatpush1.bf16.msra.mxu0 0
  %1318 = vmatprep.subr.bf16.mxu0 0
  %1319 = vmatpush1.bf16.msra.mxu0 0
  %1320 = vmatprep.subr.bf16.mxu0 0
  %1321 = vmatpush1.bf16.msra.mxu0 0
  %1322 = vmatprep.subr.bf16.mxu0 0
  %1323 = vmatpush1.bf16.msra.mxu0 0
  %1324 = vmatprep.subr.bf16.mxu0 0
  %1325 = vmatpush1.bf16.msra.mxu0 0
  %1326 = vmatprep.subr.bf16.mxu0 0
  %1327 = vmatpush1.bf16.msra.mxu0 0
  %1328 = vmatprep.subr.bf16.mxu0 0
  %1329 = vmatpush1.bf16.msra.mxu0 0
  %1330 = vmatprep.mubr.bf16.mxu0 0
  %1331 = vmatmul.mubr.bf16.gmra.mrb[0].mxu0 %v510
  %v1332 = vpop.f32.mrb[0].mxu0
  %v1333 = vadd.f32 %v1188, %v1332
  %v1334 = vpop.f32.mrb[0].mxu0
  %v1335 = vpop.f32.mrb[0].mxu0
  %v1336 = vadd.f32 %v1191, %v1335
  %v1337 = vpop.f32.mrb[0].mxu0
  %1338 = vmatprep.mubr.bf16.mxu0 0
  %1339 = vmatmul.mubr.bf16.gmra.mrb[0].mxu0 %v511
  %v1340 = vpop.f32.mrb[0].mxu0
  %v1341 = vadd.f32 %v1196, %v1340
  %v1342 = vpop.f32.mrb[0].mxu0
  %v1343 = vpop.f32.mrb[0].mxu0
  %v1344 = vadd.f32 %v1199, %v1343
  %v1345 = vpop.f32.mrb[0].mxu0
  %1346 = vmatprep.mubr.bf16.mxu0 0
  %1347 = vmatmul.mubr.bf16.gmra.mrb[0].mxu0 %v512
  %v1348 = vpop.f32.mrb[0].mxu0
  %v1349 = vadd.f32 %v1204, %v1348
  %v1350 = vpop.f32.mrb[0].mxu0
  %v1351 = vpop.f32.mrb[0].mxu0
  %v1352 = vadd.f32 %v1207, %v1351
  %v1353 = vpop.f32.mrb[0].mxu0
  %1354 = vmatprep.mubr.bf16.mxu0 0
  %1355 = vmatmul.mubr.bf16.gmra.mrb[0].mxu0 %v513
  %v1356 = vpop.f32.mrb[0].mxu0
  %v1357 = vadd.f32 %v1212, %v1356
  %v1358 = vpop.f32.mrb[0].mxu0
  %v1359 = vpop.f32.mrb[0].mxu0
  %v1360 = vadd.f32 %v1215, %v1359
  %v1361 = vpop.f32.mrb[0].mxu0
  %1362 = vmatprep.mubr.bf16.mxu0 0
  %1363 = vmatmul.mubr.bf16.gmra.mrb[0].mxu0 %v514
  %v1364 = vpop.f32.mrb[0].mxu0
  %v1365 = vadd.f32 %v1220, %v1364
  %v1366 = vpop.f32.mrb[0].mxu0
  %v1367 = vpop.f32.mrb[0].mxu0
  %v1368 = vadd.f32 %v1223, %v1367
  %v1369 = vpop.f32.mrb[0].mxu0
  %1370 = vmatprep.mubr.bf16.mxu0 0
  %1371 = vmatmul.mubr.bf16.gmra.mrb[0].mxu0 %v515
  %v1372 = vpop.f32.mrb[0].mxu0
  %v1373 = vadd.f32 %v1228, %v1372
  %v1374 = vpop.f32.mrb[0].mxu0
  %v1375 = vpop.f32.mrb[0].mxu0
  %v1376 = vadd.f32 %v1231, %v1375
  %v1377 = vpop.f32.mrb[0].mxu0
  %1378 = vmatprep.mubr.bf16.mxu0 0
  %1379 = vmatmul.mubr.bf16.gmra.mrb[0].mxu0 %v516
  %v1380 = vpop.f32.mrb[0].mxu0
  %v1381 = vadd.f32 %v1236, %v1380
  %v1382 = vpop.f32.mrb[0].mxu0
  %v1383 = vpop.f32.mrb[0].mxu0
  %v1384 = vadd.f32 %v1239, %v1383
  %v1385 = vpop.f32.mrb[0].mxu0
  %1386 = vmatprep.mubr.bf16.mxu0 0
  %1387 = vmatmul.mubr.bf16.gmra.mrb[0].mxu0 %v517
  %v1388 = vpop.f32.mrb[0].mxu0
  %v1389 = vadd.f32 %v1244, %v1388
  %v1390 = vpop.f32.mrb[0].mxu0
  %v1391 = vpop.f32.mrb[0].mxu0
  %v1392 = vadd.f32 %v1247, %v1391
  %v1393 = vpop.f32.mrb[0].mxu0
  %1394 = vdwg.mxu0
  %s1395 = scalar_lea.vmem %s3, 128
  %v1396 = vld [vmem:[%s1395] sm:$0xf]
  %v1397 = vld [vmem:[%s1395 + $0x4] sm:$0xf]
  %v1398 = vld [vmem:[%s1395 + $0x8] sm:$0xf]
  %v1399 = vld [vmem:[%s1395 + $0xc] sm:$0xf]
  %v1400 = vld [vmem:[%s1395 + $0x10] sm:$0xf]
  %v1401 = vld [vmem:[%s1395 + $0x14] sm:$0xf]
  %v1402 = vld [vmem:[%s1395 + $0x18] sm:$0xf]
  %v1403 = vld [vmem:[%s1395 + $0x1c] sm:$0xf]
  %v1404 = vld [vmem:[%s1395 + $0x20] sm:$0xf]
  %v1405 = vld [vmem:[%s1395 + $0x24] sm:$0xf]
  %v1406 = vld [vmem:[%s1395 + $0x28] sm:$0xf]
  %v1407 = vld [vmem:[%s1395 + $0x2c] sm:$0xf]
  %v1408 = vld [vmem:[%s1395 + $0x30] sm:$0xf]
  %v1409 = vld [vmem:[%s1395 + $0x34] sm:$0xf]
  %v1410 = vld [vmem:[%s1395 + $0x38] sm:$0xf]
  %v1411 = vld [vmem:[%s1395 + $0x3c] sm:$0xf]
  %v1428 = vunpack.c.l.b16 %v1396
  %v1429 = vunpack.c.l.b16 %v1397
  %v1430 = vunpack.c.l.b16 %v1398
  %v1431 = vunpack.c.l.b16 %v1399
  %v1432 = vunpack.c.l.b16 %v1400
  %v1433 = vunpack.c.l.b16 %v1401
  %v1434 = vunpack.c.l.b16 %v1402
  %v1435 = vunpack.c.l.b16 %v1403
  %v1436 = vunpack.c.l.b16 %v1404
  %v1437 = vunpack.c.l.b16 %v1405
  %v1438 = vunpack.c.l.b16 %v1406
  %v1439 = vunpack.c.l.b16 %v1407
  %v1440 = vunpack.c.l.b16 %v1408
  %v1441 = vunpack.c.l.b16 %v1409
  %v1442 = vunpack.c.l.b16 %v1410
  %v1443 = vunpack.c.l.b16 %v1411
  %v1444 = vpack.c.b16 %v1429, %v1428
  %v1445 = vpack.c.b16 %v1431, %v1430
  %v1446 = vpack.c.b16 %v1433, %v1432
  %v1447 = vpack.c.b16 %v1435, %v1434
  %v1448 = vpack.c.b16 %v1437, %v1436
  %v1449 = vpack.c.b16 %v1439, %v1438
  %v1450 = vpack.c.b16 %v1441, %v1440
  %v1451 = vpack.c.b16 %v1443, %v1442
  %1460 = vmatprep.subr.bf16.mxu0 0
  %1461 = vmatpush1.bf16.msra.mxu0 %v1444
  %1462 = vmatprep.subr.bf16.mxu0 0
  %1463 = vmatpush1.bf16.msra.mxu0 %v1445
  %1464 = vmatprep.subr.bf16.mxu0 0
  %1465 = vmatpush1.bf16.msra.mxu0 %v1446
  %1466 = vmatprep.subr.bf16.mxu0 0
  %1467 = vmatpush1.bf16.msra.mxu0 %v1447
  %1468 = vmatprep.subr.bf16.mxu0 0
  %1469 = vmatpush1.bf16.msra.mxu0 %v1448
  %1470 = vmatprep.subr.bf16.mxu0 0
  %1471 = vmatpush1.bf16.msra.mxu0 %v1449
  %1472 = vmatprep.subr.bf16.mxu0 0
  %1473 = vmatpush1.bf16.msra.mxu0 %v1450
  %1474 = vmatprep.subr.bf16.mxu0 0
  %1475 = vmatpush1.bf16.msra.mxu0 %v1451
  %1476 = vmatprep.subr.bf16.mxu0 0
  %1477 = vmatpush1.bf16.msra.mxu0 0
  %1478 = vmatprep.subr.bf16.mxu0 0
  %1479 = vmatpush1.bf16.msra.mxu0 0
  %1480 = vmatprep.subr.bf16.mxu0 0
  %1481 = vmatpush1.bf16.msra.mxu0 0
  %1482 = vmatprep.subr.bf16.mxu0 0
  %1483 = vmatpush1.bf16.msra.mxu0 0
  %1484 = vmatprep.subr.bf16.mxu0 0
  %1485 = vmatpush1.bf16.msra.mxu0 0
  %1486 = vmatprep.subr.bf16.mxu0 0
  %1487 = vmatpush1.bf16.msra.mxu0 0
  %1488 = vmatprep.subr.bf16.mxu0 0
  %1489 = vmatpush1.bf16.msra.mxu0 0
  %1490 = vmatprep.subr.bf16.mxu0 0
  %1491 = vmatpush1.bf16.msra.mxu0 0
  %1492 = vmatprep.mubr.bf16.mxu0 0
  %1493 = vmatmul.mubr.bf16.gmra.mrb[0].mxu0 %v795
  %v1494 = vpop.f32.mrb[0].mxu0
  %v1495 = vadd.f32 0.0, %v1494
  %v1496 = vpop.f32.mrb[0].mxu0
  %v1497 = vpop.f32.mrb[0].mxu0
  %v1498 = vadd.f32 0.0, %v1497
  %v1499 = vpop.f32.mrb[0].mxu0
  %1500 = vmatprep.mubr.bf16.mxu0 0
  %1501 = vmatmul.mubr.bf16.gmra.mrb[0].mxu0 %v796
  %v1502 = vpop.f32.mrb[0].mxu0
  %v1503 = vadd.f32 0.0, %v1502
  %v1504 = vpop.f32.mrb[0].mxu0
  %v1505 = vpop.f32.mrb[0].mxu0
  %v1506 = vadd.f32 0.0, %v1505
  %v1507 = vpop.f32.mrb[0].mxu0
  %1508 = vmatprep.mubr.bf16.mxu0 0
  %1509 = vmatmul.mubr.bf16.gmra.mrb[0].mxu0 %v797
  %v1510 = vpop.f32.mrb[0].mxu0
  %v1511 = vadd.f32 0.0, %v1510
  %v1512 = vpop.f32.mrb[0].mxu0
  %v1513 = vpop.f32.mrb[0].mxu0
  %v1514 = vadd.f32 0.0, %v1513
  %v1515 = vpop.f32.mrb[0].mxu0
  %1516 = vmatprep.mubr.bf16.mxu0 0
  %1517 = vmatmul.mubr.bf16.gmra.mrb[0].mxu0 %v798
  %v1518 = vpop.f32.mrb[0].mxu0
  %v1519 = vadd.f32 0.0, %v1518
  %v1520 = vpop.f32.mrb[0].mxu0
  %v1521 = vpop.f32.mrb[0].mxu0
  %v1522 = vadd.f32 0.0, %v1521
  %v1523 = vpop.f32.mrb[0].mxu0
  %1524 = vmatprep.mubr.bf16.mxu0 0
  %1525 = vmatmul.mubr.bf16.gmra.mrb[0].mxu0 %v799
  %v1526 = vpop.f32.mrb[0].mxu0
  %v1527 = vadd.f32 0.0, %v1526
  %v1528 = vpop.f32.mrb[0].mxu0
  %v1529 = vpop.f32.mrb[0].mxu0
  %v1530 = vadd.f32 0.0, %v1529
  %v1531 = vpop.f32.mrb[0].mxu0
  %1532 = vmatprep.mubr.bf16.mxu0 0
  %1533 = vmatmul.mubr.bf16.gmra.mrb[0].mxu0 %v800
  %v1534 = vpop.f32.mrb[0].mxu0
  %v1535 = vadd.f32 0.0, %v1534
  %v1536 = vpop.f32.mrb[0].mxu0
  %v1537 = vpop.f32.mrb[0].mxu0
  %v1538 = vadd.f32 0.0, %v1537
  %v1539 = vpop.f32.mrb[0].mxu0
  %1540 = vmatprep.mubr.bf16.mxu0 0
  %1541 = vmatmul.mubr.bf16.gmra.mrb[0].mxu0 %v801
  %v1542 = vpop.f32.mrb[0].mxu0
  %v1543 = vadd.f32 0.0, %v1542
  %v1544 = vpop.f32.mrb[0].mxu0
  %v1545 = vpop.f32.mrb[0].mxu0
  %v1546 = vadd.f32 0.0, %v1545
  %v1547 = vpop.f32.mrb[0].mxu0
  %1548 = vmatprep.mubr.bf16.mxu0 0
  %1549 = vmatmul.mubr.bf16.gmra.mrb[0].mxu0 %v802
  %v1550 = vpop.f32.mrb[0].mxu0
  %v1551 = vadd.f32 0.0, %v1550
  %v1552 = vpop.f32.mrb[0].mxu0
  %v1553 = vpop.f32.mrb[0].mxu0
  %v1554 = vadd.f32 0.0, %v1553
  %v1555 = vpop.f32.mrb[0].mxu0
  %1556 = vdwg.mxu0
  %v1557 = vadd.f32 %v1333, %v1495
  %v1558 = vadd.f32 %v1336, %v1498
  %v1559 = vadd.f32 %v1341, %v1503
  %v1560 = vadd.f32 %v1344, %v1506
  %v1561 = vadd.f32 %v1349, %v1511
  %v1562 = vadd.f32 %v1352, %v1514
  %v1563 = vadd.f32 %v1357, %v1519
  %v1564 = vadd.f32 %v1360, %v1522
  %v1565 = vadd.f32 %v1365, %v1527
  %v1566 = vadd.f32 %v1368, %v1530
  %v1567 = vadd.f32 %v1373, %v1535
  %v1568 = vadd.f32 %v1376, %v1538
  %v1569 = vadd.f32 %v1381, %v1543
  %v1570 = vadd.f32 %v1384, %v1546
  %v1571 = vadd.f32 %v1389, %v1551
  %v1572 = vadd.f32 %v1392, %v1554
  %v1573 = vld [vmem:[%s0 + $0x8] sm:$0x3]
  %v1574 = vld [vmem:[%s0 + $0x14] sm:$0x3]
  %v1575 = vld [vmem:[%s0 + $0x20] sm:$0x3]
  %v1576 = vld [vmem:[%s0 + $0x2c] sm:$0x3]
  %v1577 = vld [vmem:[%s0 + $0x38] sm:$0x3]
  %v1578 = vld [vmem:[%s0 + $0x44] sm:$0x3]
  %v1579 = vld [vmem:[%s0 + $0x50] sm:$0x3]
  %v1580 = vld [vmem:[%s0 + $0x5c] sm:$0x3]
  %vm1581 = vsmask.f32 2304
  %vm1582 = vsmask.f32 6416
  %vm1583 = vmor %vm1581, %vm1582
  %v1585 = vshrl.u32 %v671, 16
  %v1587 = vrot.slane %v1585, 5
  %v1588 = vshll.u32 %v671, 16
  %v1590 = vrot.slane %v1588, 6
  %v1591 = vor.u32 %v1587, %v1590
  %v1592 = vrot.slane %v1591, 4
  %v1593 = vrot.slane %v106, 5
  %v1594 = vrot.slane %v102, 6
  %v1595 = vor.u32 %v1593, %v1594
  %v1596 = vsel %vm1583, %v1592, %v1595
  %v1597 = vrot.slane %v1595, 4
  %v1599 = vshrl.u32 %v1573, 16
  %v1601 = vrot.slane %v1599, 5
  %v1602 = vshll.u32 %v1573, 16
  %v1604 = vrot.slane %v1602, 6
  %v1605 = vor.u32 %v1601, %v1604
  %v1606 = vsel %vm1583, %v1597, %v1605
  %v1608 = vshrl.u32 %v672, 16
  %v1610 = vrot.slane %v1608, 5
  %v1611 = vshll.u32 %v672, 16
  %v1613 = vrot.slane %v1611, 6
  %v1614 = vor.u32 %v1610, %v1613
  %v1615 = vrot.slane %v1614, 4
  %v1616 = vrot.slane %v130, 5
  %v1617 = vrot.slane %v126, 6
  %v1618 = vor.u32 %v1616, %v1617
  %v1619 = vsel %vm1583, %v1615, %v1618
  %v1620 = vrot.slane %v1618, 4
  %v1622 = vshrl.u32 %v1574, 16
  %v1624 = vrot.slane %v1622, 5
  %v1625 = vshll.u32 %v1574, 16
  %v1627 = vrot.slane %v1625, 6
  %v1628 = vor.u32 %v1624, %v1627
  %v1629 = vsel %vm1583, %v1620, %v1628
  %v1631 = vshrl.u32 %v673, 16
  %v1633 = vrot.slane %v1631, 5
  %v1634 = vshll.u32 %v673, 16
  %v1636 = vrot.slane %v1634, 6
  %v1637 = vor.u32 %v1633, %v1636
  %v1638 = vrot.slane %v1637, 4
  %v1639 = vrot.slane %v154, 5
  %v1640 = vrot.slane %v150, 6
  %v1641 = vor.u32 %v1639, %v1640
  %v1642 = vsel %vm1583, %v1638, %v1641
  %v1643 = vrot.slane %v1641, 4
  %v1645 = vshrl.u32 %v1575, 16
  %v1647 = vrot.slane %v1645, 5
  %v1648 = vshll.u32 %v1575, 16
  %v1650 = vrot.slane %v1648, 6
  %v1651 = vor.u32 %v1647, %v1650
  %v1652 = vsel %vm1583, %v1643, %v1651
  %v1654 = vshrl.u32 %v674, 16
  %v1656 = vrot.slane %v1654, 5
  %v1657 = vshll.u32 %v674, 16
  %v1659 = vrot.slane %v1657, 6
  %v1660 = vor.u32 %v1656, %v1659
  %v1661 = vrot.slane %v1660, 4
  %v1662 = vrot.slane %v178, 5
  %v1663 = vrot.slane %v174, 6
  %v1664 = vor.u32 %v1662, %v1663
  %v1665 = vsel %vm1583, %v1661, %v1664
  %v1666 = vrot.slane %v1664, 4
  %v1668 = vshrl.u32 %v1576, 16
  %v1670 = vrot.slane %v1668, 5
  %v1671 = vshll.u32 %v1576, 16
  %v1673 = vrot.slane %v1671, 6
  %v1674 = vor.u32 %v1670, %v1673
  %v1675 = vsel %vm1583, %v1666, %v1674
  %v1677 = vshrl.u32 %v675, 16
  %v1679 = vrot.slane %v1677, 5
  %v1680 = vshll.u32 %v675, 16
  %v1682 = vrot.slane %v1680, 6
  %v1683 = vor.u32 %v1679, %v1682
  %v1684 = vrot.slane %v1683, 4
  %v1685 = vrot.slane %v202, 5
  %v1686 = vrot.slane %v198, 6
  %v1687 = vor.u32 %v1685, %v1686
  %v1688 = vsel %vm1583, %v1684, %v1687
  %v1689 = vrot.slane %v1687, 4
  %v1691 = vshrl.u32 %v1577, 16
  %v1693 = vrot.slane %v1691, 5
  %v1694 = vshll.u32 %v1577, 16
  %v1696 = vrot.slane %v1694, 6
  %v1697 = vor.u32 %v1693, %v1696
  %v1698 = vsel %vm1583, %v1689, %v1697
  %v1700 = vshrl.u32 %v676, 16
  %v1702 = vrot.slane %v1700, 5
  %v1703 = vshll.u32 %v676, 16
  %v1705 = vrot.slane %v1703, 6
  %v1706 = vor.u32 %v1702, %v1705
  %v1707 = vrot.slane %v1706, 4
  %v1708 = vrot.slane %v226, 5
  %v1709 = vrot.slane %v222, 6
  %v1710 = vor.u32 %v1708, %v1709
  %v1711 = vsel %vm1583, %v1707, %v1710
  %v1712 = vrot.slane %v1710, 4
  %v1714 = vshrl.u32 %v1578, 16
  %v1716 = vrot.slane %v1714, 5
  %v1717 = vshll.u32 %v1578, 16
  %v1719 = vrot.slane %v1717, 6
  %v1720 = vor.u32 %v1716, %v1719
  %v1721 = vsel %vm1583, %v1712, %v1720
  %v1723 = vshrl.u32 %v677, 16
  %v1725 = vrot.slane %v1723, 5
  %v1726 = vshll.u32 %v677, 16
  %v1728 = vrot.slane %v1726, 6
  %v1729 = vor.u32 %v1725, %v1728
  %v1730 = vrot.slane %v1729, 4
  %v1731 = vrot.slane %v250, 5
  %v1732 = vrot.slane %v246, 6
  %v1733 = vor.u32 %v1731, %v1732
  %v1734 = vsel %vm1583, %v1730, %v1733
  %v1735 = vrot.slane %v1733, 4
  %v1737 = vshrl.u32 %v1579, 16
  %v1739 = vrot.slane %v1737, 5
  %v1740 = vshll.u32 %v1579, 16
  %v1742 = vrot.slane %v1740, 6
  %v1743 = vor.u32 %v1739, %v1742
  %v1744 = vsel %vm1583, %v1735, %v1743
  %v1746 = vshrl.u32 %v678, 16
  %v1748 = vrot.slane %v1746, 5
  %v1749 = vshll.u32 %v678, 16
  %v1751 = vrot.slane %v1749, 6
  %v1752 = vor.u32 %v1748, %v1751
  %v1753 = vrot.slane %v1752, 4
  %v1754 = vrot.slane %v274, 5
  %v1755 = vrot.slane %v270, 6
  %v1756 = vor.u32 %v1754, %v1755
  %v1757 = vsel %vm1583, %v1753, %v1756
  %v1758 = vrot.slane %v1756, 4
  %v1760 = vshrl.u32 %v1580, 16
  %v1762 = vrot.slane %v1760, 5
  %v1763 = vshll.u32 %v1580, 16
  %v1765 = vrot.slane %v1763, 6
  %v1766 = vor.u32 %v1762, %v1765
  %v1767 = vsel %vm1583, %v1758, %v1766
  %s1768 = scalar_lea.vmem %s3, 192
  %v1769 = vld [vmem:[%s1768] sm:$0xf]
  %v1770 = vld [vmem:[%s1768 + $0x4] sm:$0xf]
  %v1771 = vld [vmem:[%s1768 + $0x8] sm:$0xf]
  %v1772 = vld [vmem:[%s1768 + $0xc] sm:$0xf]
  %v1773 = vld [vmem:[%s1768 + $0x10] sm:$0xf]
  %v1774 = vld [vmem:[%s1768 + $0x14] sm:$0xf]
  %v1775 = vld [vmem:[%s1768 + $0x18] sm:$0xf]
  %v1776 = vld [vmem:[%s1768 + $0x1c] sm:$0xf]
  %v1777 = vld [vmem:[%s1768 + $0x20] sm:$0xf]
  %v1778 = vld [vmem:[%s1768 + $0x24] sm:$0xf]
  %v1779 = vld [vmem:[%s1768 + $0x28] sm:$0xf]
  %v1780 = vld [vmem:[%s1768 + $0x2c] sm:$0xf]
  %v1781 = vld [vmem:[%s1768 + $0x30] sm:$0xf]
  %v1782 = vld [vmem:[%s1768 + $0x34] sm:$0xf]
  %v1783 = vld [vmem:[%s1768 + $0x38] sm:$0xf]
  %v1784 = vld [vmem:[%s1768 + $0x3c] sm:$0xf]
  %v1785 = vunpack.c.l.b16 %v1596
  %v1786 = vunpack.c.l.b16 %v1606
  %v1787 = vunpack.c.l.b16 %v1619
  %v1788 = vunpack.c.l.b16 %v1629
  %v1789 = vunpack.c.l.b16 %v1642
  %v1790 = vunpack.c.l.b16 %v1652
  %v1791 = vunpack.c.l.b16 %v1665
  %v1792 = vunpack.c.l.b16 %v1675
  %v1793 = vunpack.c.l.b16 %v1688
  %v1794 = vunpack.c.l.b16 %v1698
  %v1795 = vunpack.c.l.b16 %v1711
  %v1796 = vunpack.c.l.b16 %v1721
  %v1797 = vunpack.c.l.b16 %v1734
  %v1798 = vunpack.c.l.b16 %v1744
  %v1799 = vunpack.c.l.b16 %v1757
  %v1800 = vunpack.c.l.b16 %v1767
  %v1801 = vpack.c.b16 %v1786, %v1785
  %v1802 = vpack.c.b16 %v1788, %v1787
  %v1803 = vpack.c.b16 %v1790, %v1789
  %v1804 = vpack.c.b16 %v1792, %v1791
  %v1805 = vpack.c.b16 %v1794, %v1793
  %v1806 = vpack.c.b16 %v1796, %v1795
  %v1807 = vpack.c.b16 %v1798, %v1797
  %v1808 = vpack.c.b16 %v1800, %v1799
  %v1833 = vunpack.c.l.b16 %v1769
  %v1834 = vunpack.c.l.b16 %v1770
  %v1835 = vunpack.c.l.b16 %v1771
  %v1836 = vunpack.c.l.b16 %v1772
  %v1837 = vunpack.c.l.b16 %v1773
  %v1838 = vunpack.c.l.b16 %v1774
  %v1839 = vunpack.c.l.b16 %v1775
  %v1840 = vunpack.c.l.b16 %v1776
  %v1841 = vunpack.c.l.b16 %v1777
  %v1842 = vunpack.c.l.b16 %v1778
  %v1843 = vunpack.c.l.b16 %v1779
  %v1844 = vunpack.c.l.b16 %v1780
  %v1845 = vunpack.c.l.b16 %v1781
  %v1846 = vunpack.c.l.b16 %v1782
  %v1847 = vunpack.c.l.b16 %v1783
  %v1848 = vunpack.c.l.b16 %v1784
  %v1849 = vpack.c.b16 %v1834, %v1833
  %v1850 = vpack.c.b16 %v1836, %v1835
  %v1851 = vpack.c.b16 %v1838, %v1837
  %v1852 = vpack.c.b16 %v1840, %v1839
  %v1853 = vpack.c.b16 %v1842, %v1841
  %v1854 = vpack.c.b16 %v1844, %v1843
  %v1855 = vpack.c.b16 %v1846, %v1845
  %v1856 = vpack.c.b16 %v1848, %v1847
  %1865 = vmatprep.subr.bf16.mxu0 0
  %1866 = vmatpush1.bf16.msra.mxu0 %v1849
  %1867 = vmatprep.subr.bf16.mxu0 0
  %1868 = vmatpush1.bf16.msra.mxu0 %v1850
  %1869 = vmatprep.subr.bf16.mxu0 0
  %1870 = vmatpush1.bf16.msra.mxu0 %v1851
  %1871 = vmatprep.subr.bf16.mxu0 0
  %1872 = vmatpush1.bf16.msra.mxu0 %v1852
  %1873 = vmatprep.subr.bf16.mxu0 0
  %1874 = vmatpush1.bf16.msra.mxu0 %v1853
  %1875 = vmatprep.subr.bf16.mxu0 0
  %1876 = vmatpush1.bf16.msra.mxu0 %v1854
  %1877 = vmatprep.subr.bf16.mxu0 0
  %1878 = vmatpush1.bf16.msra.mxu0 %v1855
  %1879 = vmatprep.subr.bf16.mxu0 0
  %1880 = vmatpush1.bf16.msra.mxu0 %v1856
  %1881 = vmatprep.subr.bf16.mxu0 0
  %1882 = vmatpush1.bf16.msra.mxu0 0
  %1883 = vmatprep.subr.bf16.mxu0 0
  %1884 = vmatpush1.bf16.msra.mxu0 0
  %1885 = vmatprep.subr.bf16.mxu0 0
  %1886 = vmatpush1.bf16.msra.mxu0 0
  %1887 = vmatprep.subr.bf16.mxu0 0
  %1888 = vmatpush1.bf16.msra.mxu0 0
  %1889 = vmatprep.subr.bf16.mxu0 0
  %1890 = vmatpush1.bf16.msra.mxu0 0
  %1891 = vmatprep.subr.bf16.mxu0 0
  %1892 = vmatpush1.bf16.msra.mxu0 0
  %1893 = vmatprep.subr.bf16.mxu0 0
  %1894 = vmatpush1.bf16.msra.mxu0 0
  %1895 = vmatprep.subr.bf16.mxu0 0
  %1896 = vmatpush1.bf16.msra.mxu0 0
  %1897 = vmatprep.mubr.bf16.mxu0 0
  %1898 = vmatmul.mubr.bf16.gmra.mrb[0].mxu0 %v1801
  %v1899 = vpop.f32.mrb[0].mxu0
  %v1900 = vadd.f32 0.0, %v1899
  %v1901 = vpop.f32.mrb[0].mxu0
  %v1902 = vpop.f32.mrb[0].mxu0
  %v1903 = vadd.f32 0.0, %v1902
  %v1904 = vpop.f32.mrb[0].mxu0
  %1905 = vmatprep.mubr.bf16.mxu0 0
  %1906 = vmatmul.mubr.bf16.gmra.mrb[0].mxu0 %v1802
  %v1907 = vpop.f32.mrb[0].mxu0
  %v1908 = vadd.f32 0.0, %v1907
  %v1909 = vpop.f32.mrb[0].mxu0
  %v1910 = vpop.f32.mrb[0].mxu0
  %v1911 = vadd.f32 0.0, %v1910
  %v1912 = vpop.f32.mrb[0].mxu0
  %1913 = vmatprep.mubr.bf16.mxu0 0
  %1914 = vmatmul.mubr.bf16.gmra.mrb[0].mxu0 %v1803
  %v1915 = vpop.f32.mrb[0].mxu0
  %v1916 = vadd.f32 0.0, %v1915
  %v1917 = vpop.f32.mrb[0].mxu0
  %v1918 = vpop.f32.mrb[0].mxu0
  %v1919 = vadd.f32 0.0, %v1918
  %v1920 = vpop.f32.mrb[0].mxu0
  %1921 = vmatprep.mubr.bf16.mxu0 0
  %1922 = vmatmul.mubr.bf16.gmra.mrb[0].mxu0 %v1804
  %v1923 = vpop.f32.mrb[0].mxu0
  %v1924 = vadd.f32 0.0, %v1923
  %v1925 = vpop.f32.mrb[0].mxu0
  %v1926 = vpop.f32.mrb[0].mxu0
  %v1927 = vadd.f32 0.0, %v1926
  %v1928 = vpop.f32.mrb[0].mxu0
  %1929 = vmatprep.mubr.bf16.mxu0 0
  %1930 = vmatmul.mubr.bf16.gmra.mrb[0].mxu0 %v1805
  %v1931 = vpop.f32.mrb[0].mxu0
  %v1932 = vadd.f32 0.0, %v1931
  %v1933 = vpop.f32.mrb[0].mxu0
  %v1934 = vpop.f32.mrb[0].mxu0
  %v1935 = vadd.f32 0.0, %v1934
  %v1936 = vpop.f32.mrb[0].mxu0
  %1937 = vmatprep.mubr.bf16.mxu0 0
  %1938 = vmatmul.mubr.bf16.gmra.mrb[0].mxu0 %v1806
  %v1939 = vpop.f32.mrb[0].mxu0
  %v1940 = vadd.f32 0.0, %v1939
  %v1941 = vpop.f32.mrb[0].mxu0
  %v1942 = vpop.f32.mrb[0].mxu0
  %v1943 = vadd.f32 0.0, %v1942
  %v1944 = vpop.f32.mrb[0].mxu0
  %1945 = vmatprep.mubr.bf16.mxu0 0
  %1946 = vmatmul.mubr.bf16.gmra.mrb[0].mxu0 %v1807
  %v1947 = vpop.f32.mrb[0].mxu0
  %v1948 = vadd.f32 0.0, %v1947
  %v1949 = vpop.f32.mrb[0].mxu0
  %v1950 = vpop.f32.mrb[0].mxu0
  %v1951 = vadd.f32 0.0, %v1950
  %v1952 = vpop.f32.mrb[0].mxu0
  %1953 = vmatprep.mubr.bf16.mxu0 0
  %1954 = vmatmul.mubr.bf16.gmra.mrb[0].mxu0 %v1808
  %v1955 = vpop.f32.mrb[0].mxu0
  %v1956 = vadd.f32 0.0, %v1955
  %v1957 = vpop.f32.mrb[0].mxu0
  %v1958 = vpop.f32.mrb[0].mxu0
  %v1959 = vadd.f32 0.0, %v1958
  %v1960 = vpop.f32.mrb[0].mxu0
  %1961 = vdwg.mxu0
  %v1962 = vadd.f32 %v1557, %v1900
  %v1963 = vadd.f32 %v1558, %v1903
  %v1964 = vadd.f32 %v1559, %v1908
  %v1965 = vadd.f32 %v1560, %v1911
  %v1966 = vadd.f32 %v1561, %v1916
  %v1967 = vadd.f32 %v1562, %v1919
  %v1968 = vadd.f32 %v1563, %v1924
  %v1969 = vadd.f32 %v1564, %v1927
  %v1970 = vadd.f32 %v1565, %v1932
  %v1971 = vadd.f32 %v1566, %v1935
  %v1972 = vadd.f32 %v1567, %v1940
  %v1973 = vadd.f32 %v1568, %v1943
  %v1974 = vadd.f32 %v1569, %v1948
  %v1975 = vadd.f32 %v1570, %v1951
  %v1976 = vadd.f32 %v1571, %v1956
  %v1977 = vadd.f32 %v1572, %v1959
  %vm1978 = vcmp.lt.s32.totalorder %v973, 13
  %vm1979 = vcmp.lt.s32.totalorder %v974, 13
  %v1980 = vsel %vm1978, %v1962, -inf
  %v1981 = vsel %vm1979, %v1963, -inf
  %v1982 = vsel %vm1978, %v1964, -inf
  %v1983 = vsel %vm1979, %v1965, -inf
  %v1984 = vsel %vm1978, %v1966, -inf
  %v1985 = vsel %vm1979, %v1967, -inf
  %v1986 = vsel %vm1978, %v1968, -inf
  %v1987 = vsel %vm1979, %v1969, -inf
  %v1988 = vsel %vm1978, %v1970, -inf
  %v1989 = vsel %vm1979, %v1971, -inf
  %v1990 = vsel %vm1978, %v1972, -inf
  %v1991 = vsel %vm1979, %v1973, -inf
  %v1992 = vsel %vm1978, %v1974, -inf
  %v1993 = vsel %vm1979, %v1975, -inf
  %v1994 = vsel %vm1978, %v1976, -inf
  %v1995 = vsel %vm1979, %v1977, -inf
  %v1996 = vmax.f32 %v1980, %v1981
  %v1997 = vrot.slane %v1996, 4
  %v1998 = vmax.f32 %v1996, %v1997
  %v1999 = vrot.slane %v1998, 2
  %v2000 = vmax.f32 %v1998, %v1999
  %v2001 = vrot.slane %v2000, 1
  %v2002 = vmax.f32 %v2000, %v2001
  %v2003 = vmax.f32 %v1982, %v1983
  %v2004 = vrot.slane %v2003, 4
  %v2005 = vmax.f32 %v2003, %v2004
  %v2006 = vrot.slane %v2005, 2
  %v2007 = vmax.f32 %v2005, %v2006
  %v2008 = vrot.slane %v2007, 1
  %v2009 = vmax.f32 %v2007, %v2008
  %v2010 = vmax.f32 %v1984, %v1985
  %v2011 = vrot.slane %v2010, 4
  %v2012 = vmax.f32 %v2010, %v2011
  %v2013 = vrot.slane %v2012, 2
  %v2014 = vmax.f32 %v2012, %v2013
  %v2015 = vrot.slane %v2014, 1
  %v2016 = vmax.f32 %v2014, %v2015
  %v2017 = vmax.f32 %v1986, %v1987
  %v2018 = vrot.slane %v2017, 4
  %v2019 = vmax.f32 %v2017, %v2018
  %v2020 = vrot.slane %v2019, 2
  %v2021 = vmax.f32 %v2019, %v2020
  %v2022 = vrot.slane %v2021, 1
  %v2023 = vmax.f32 %v2021, %v2022
  %v2024 = vmax.f32 %v1988, %v1989
  %v2025 = vrot.slane %v2024, 4
  %v2026 = vmax.f32 %v2024, %v2025
  %v2027 = vrot.slane %v2026, 2
  %v2028 = vmax.f32 %v2026, %v2027
  %v2029 = vrot.slane %v2028, 1
  %v2030 = vmax.f32 %v2028, %v2029
  %v2031 = vmax.f32 %v1990, %v1991
  %v2032 = vrot.slane %v2031, 4
  %v2033 = vmax.f32 %v2031, %v2032
  %v2034 = vrot.slane %v2033, 2
  %v2035 = vmax.f32 %v2033, %v2034
  %v2036 = vrot.slane %v2035, 1
  %v2037 = vmax.f32 %v2035, %v2036
  %v2038 = vmax.f32 %v1992, %v1993
  %v2039 = vrot.slane %v2038, 4
  %v2040 = vmax.f32 %v2038, %v2039
  %v2041 = vrot.slane %v2040, 2
  %v2042 = vmax.f32 %v2040, %v2041
  %v2043 = vrot.slane %v2042, 1
  %v2044 = vmax.f32 %v2042, %v2043
  %v2045 = vmax.f32 %v1994, %v1995
  %v2046 = vrot.slane %v2045, 4
  %v2047 = vmax.f32 %v2045, %v2046
  %v2048 = vrot.slane %v2047, 2
  %v2049 = vmax.f32 %v2047, %v2048
  %v2050 = vrot.slane %v2049, 1
  %v2051 = vmax.f32 %v2049, %v2050
  %v2052 = vld [vmem:[%s4] sm:$0x1]
  %v2054 = vlaneseq
  %v2055 = vshrl.u32 %v2054, 7
  %v2056 = vsub.s32 0, %v2055
  %v2057 = vrot.slane %v2052, %v2056
  %v2059 = vadd.f32 %v2002, %v2057
  %v2060 = vadd.f32 %v2009, %v2057
  %v2061 = vadd.f32 %v2016, %v2057
  %v2062 = vadd.f32 %v2023, %v2057
  %v2063 = vadd.f32 %v2030, %v2057
  %v2064 = vadd.f32 %v2037, %v2057
  %v2065 = vadd.f32 %v2044, %v2057
  %v2066 = vadd.f32 %v2051, %v2057
  %v2067 = vmax.f32 %v2059, 0.0
  %v2068 = vmax.f32 %v2060, 0.0
  %v2069 = vmax.f32 %v2061, 0.0
  %v2070 = vmax.f32 %v2062, 0.0
  %v2071 = vmax.f32 %v2063, 0.0
  %v2072 = vmax.f32 %v2064, 0.0
  %v2073 = vmax.f32 %v2065, 0.0
  %v2074 = vmax.f32 %v2066, 0.0
  %v2075 = vld [vmem:[%s5] sm:$0xf]
  %v2076 = vld [vmem:[%s5 + $0x4] sm:$0xf]
  %v2077 = vld [vmem:[%s5 + $0x8] sm:$0xf]
  %v2078 = vld [vmem:[%s5 + $0xc] sm:$0xf]
  %v2079 = vld [vmem:[%s5 + $0x10] sm:$0xf]
  %v2080 = vld [vmem:[%s5 + $0x14] sm:$0xf]
  %v2081 = vld [vmem:[%s5 + $0x18] sm:$0xf]
  %v2082 = vld [vmem:[%s5 + $0x1c] sm:$0xf]
  %v2083 = vld [vmem:[%s5 + $0x20] sm:$0xf]
  %v2084 = vld [vmem:[%s5 + $0x24] sm:$0xf]
  %v2085 = vld [vmem:[%s5 + $0x28] sm:$0xf]
  %v2086 = vld [vmem:[%s5 + $0x2c] sm:$0xf]
  %v2087 = vld [vmem:[%s5 + $0x30] sm:$0xf]
  %v2088 = vld [vmem:[%s5 + $0x34] sm:$0xf]
  %v2089 = vld [vmem:[%s5 + $0x38] sm:$0xf]
  %v2090 = vld [vmem:[%s5 + $0x3c] sm:$0xf]
  %s2091 = scalar_lea.vmem %s5, 64
  %v2092 = vld [vmem:[%s2091] sm:$0xf]
  %v2093 = vld [vmem:[%s2091 + $0x4] sm:$0xf]
  %v2094 = vld [vmem:[%s2091 + $0x8] sm:$0xf]
  %v2095 = vld [vmem:[%s2091 + $0xc] sm:$0xf]
  %v2096 = vld [vmem:[%s2091 + $0x10] sm:$0xf]
  %v2097 = vld [vmem:[%s2091 + $0x14] sm:$0xf]
  %v2098 = vld [vmem:[%s2091 + $0x18] sm:$0xf]
  %v2099 = vld [vmem:[%s2091 + $0x1c] sm:$0xf]
  %v2100 = vld [vmem:[%s2091 + $0x20] sm:$0xf]
  %v2101 = vld [vmem:[%s2091 + $0x24] sm:$0xf]
  %v2102 = vld [vmem:[%s2091 + $0x28] sm:$0xf]
  %v2103 = vld [vmem:[%s2091 + $0x2c] sm:$0xf]
  %v2104 = vld [vmem:[%s2091 + $0x30] sm:$0xf]
  %v2105 = vld [vmem:[%s2091 + $0x34] sm:$0xf]
  %v2106 = vld [vmem:[%s2091 + $0x38] sm:$0xf]
  %v2107 = vld [vmem:[%s2091 + $0x3c] sm:$0xf]
  %v2124 = vunpack.c.l.b16 %v2092
  %v2125 = vunpack.c.l.b16 %v2093
  %v2126 = vunpack.c.l.b16 %v2094
  %v2127 = vunpack.c.l.b16 %v2095
  %v2128 = vunpack.c.l.b16 %v2096
  %v2129 = vunpack.c.l.b16 %v2097
  %v2130 = vunpack.c.l.b16 %v2098
  %v2131 = vunpack.c.l.b16 %v2099
  %v2132 = vunpack.c.l.b16 %v2100
  %v2133 = vunpack.c.l.b16 %v2101
  %v2134 = vunpack.c.l.b16 %v2102
  %v2135 = vunpack.c.l.b16 %v2103
  %v2136 = vunpack.c.l.b16 %v2104
  %v2137 = vunpack.c.l.b16 %v2105
  %v2138 = vunpack.c.l.b16 %v2106
  %v2139 = vunpack.c.l.b16 %v2107
  %v2140 = vpack.c.b16 %v2125, %v2124
  %v2141 = vpack.c.b16 %v2127, %v2126
  %v2142 = vpack.c.b16 %v2129, %v2128
  %v2143 = vpack.c.b16 %v2131, %v2130
  %v2144 = vpack.c.b16 %v2133, %v2132
  %v2145 = vpack.c.b16 %v2135, %v2134
  %v2146 = vpack.c.b16 %v2137, %v2136
  %v2147 = vpack.c.b16 %v2139, %v2138
  %2156 = vmatprep.subr.bf16.mxu0 0
  %2157 = vmatpush1.bf16.msra.mxu0 %v2140
  %2158 = vmatprep.subr.bf16.mxu0 0
  %2159 = vmatpush1.bf16.msra.mxu0 %v2141
  %2160 = vmatprep.subr.bf16.mxu0 0
  %2161 = vmatpush1.bf16.msra.mxu0 %v2142
  %2162 = vmatprep.subr.bf16.mxu0 0
  %2163 = vmatpush1.bf16.msra.mxu0 %v2143
  %2164 = vmatprep.subr.bf16.mxu0 0
  %2165 = vmatpush1.bf16.msra.mxu0 %v2144
  %2166 = vmatprep.subr.bf16.mxu0 0
  %2167 = vmatpush1.bf16.msra.mxu0 %v2145
  %2168 = vmatprep.subr.bf16.mxu0 0
  %2169 = vmatpush1.bf16.msra.mxu0 %v2146
  %2170 = vmatprep.subr.bf16.mxu0 0
  %2171 = vmatpush1.bf16.msra.mxu0 %v2147
  %2172 = vmatprep.subr.bf16.mxu0 0
  %2173 = vmatpush1.bf16.msra.mxu0 0
  %2174 = vmatprep.subr.bf16.mxu0 0
  %2175 = vmatpush1.bf16.msra.mxu0 0
  %2176 = vmatprep.subr.bf16.mxu0 0
  %2177 = vmatpush1.bf16.msra.mxu0 0
  %2178 = vmatprep.subr.bf16.mxu0 0
  %2179 = vmatpush1.bf16.msra.mxu0 0
  %2180 = vmatprep.subr.bf16.mxu0 0
  %2181 = vmatpush1.bf16.msra.mxu0 0
  %2182 = vmatprep.subr.bf16.mxu0 0
  %2183 = vmatpush1.bf16.msra.mxu0 0
  %2184 = vmatprep.subr.bf16.mxu0 0
  %2185 = vmatpush1.bf16.msra.mxu0 0
  %2186 = vmatprep.subr.bf16.mxu0 0
  %2187 = vmatpush1.bf16.msra.mxu0 0
  %2188 = vmatprep.mubr.bf16.mxu0 0
  %2189 = vmatmul.mubr.bf16.gmra.mrb[0].mxu0 %v317
  %v2190 = vpop.f32.mrb[0].mxu0
  %v2191 = vadd.f32 0.0, %v2190
  %v2192 = vpop.f32.mrb[0].mxu0
  %v2193 = vpop.f32.mrb[0].mxu0
  %v2194 = vadd.f32 0.0, %v2193
  %v2195 = vpop.f32.mrb[0].mxu0
  %2196 = vmatprep.mubr.bf16.mxu0 0
  %2197 = vmatmul.mubr.bf16.gmra.mrb[0].mxu0 %v318
  %v2198 = vpop.f32.mrb[0].mxu0
  %v2199 = vadd.f32 0.0, %v2198
  %v2200 = vpop.f32.mrb[0].mxu0
  %v2201 = vpop.f32.mrb[0].mxu0
  %v2202 = vadd.f32 0.0, %v2201
  %v2203 = vpop.f32.mrb[0].mxu0
  %2204 = vmatprep.mubr.bf16.mxu0 0
  %2205 = vmatmul.mubr.bf16.gmra.mrb[0].mxu0 %v319
  %v2206 = vpop.f32.mrb[0].mxu0
  %v2207 = vadd.f32 0.0, %v2206
  %v2208 = vpop.f32.mrb[0].mxu0
  %v2209 = vpop.f32.mrb[0].mxu0
  %v2210 = vadd.f32 0.0, %v2209
  %v2211 = vpop.f32.mrb[0].mxu0
  %2212 = vmatprep.mubr.bf16.mxu0 0
  %2213 = vmatmul.mubr.bf16.gmra.mrb[0].mxu0 %v320
  %v2214 = vpop.f32.mrb[0].mxu0
  %v2215 = vadd.f32 0.0, %v2214
  %v2216 = vpop.f32.mrb[0].mxu0
  %v2217 = vpop.f32.mrb[0].mxu0
  %v2218 = vadd.f32 0.0, %v2217
  %v2219 = vpop.f32.mrb[0].mxu0
  %2220 = vmatprep.mubr.bf16.mxu0 0
  %2221 = vmatmul.mubr.bf16.gmra.mrb[0].mxu0 %v321
  %v2222 = vpop.f32.mrb[0].mxu0
  %v2223 = vadd.f32 0.0, %v2222
  %v2224 = vpop.f32.mrb[0].mxu0
  %v2225 = vpop.f32.mrb[0].mxu0
  %v2226 = vadd.f32 0.0, %v2225
  %v2227 = vpop.f32.mrb[0].mxu0
  %2228 = vmatprep.mubr.bf16.mxu0 0
  %2229 = vmatmul.mubr.bf16.gmra.mrb[0].mxu0 %v322
  %v2230 = vpop.f32.mrb[0].mxu0
  %v2231 = vadd.f32 0.0, %v2230
  %v2232 = vpop.f32.mrb[0].mxu0
  %v2233 = vpop.f32.mrb[0].mxu0
  %v2234 = vadd.f32 0.0, %v2233
  %v2235 = vpop.f32.mrb[0].mxu0
  %2236 = vmatprep.mubr.bf16.mxu0 0
  %2237 = vmatmul.mubr.bf16.gmra.mrb[0].mxu0 %v323
  %v2238 = vpop.f32.mrb[0].mxu0
  %v2239 = vadd.f32 0.0, %v2238
  %v2240 = vpop.f32.mrb[0].mxu0
  %v2241 = vpop.f32.mrb[0].mxu0
  %v2242 = vadd.f32 0.0, %v2241
  %v2243 = vpop.f32.mrb[0].mxu0
  %2244 = vmatprep.mubr.bf16.mxu0 0
  %2245 = vmatmul.mubr.bf16.gmra.mrb[0].mxu0 %v324
  %v2246 = vpop.f32.mrb[0].mxu0
  %v2247 = vadd.f32 0.0, %v2246
  %v2248 = vpop.f32.mrb[0].mxu0
  %v2249 = vpop.f32.mrb[0].mxu0
  %v2250 = vadd.f32 0.0, %v2249
  %v2251 = vpop.f32.mrb[0].mxu0
  %2252 = vdwg.mxu0
  %v2269 = vunpack.c.l.b16 %v2075
  %v2270 = vunpack.c.l.b16 %v2076
  %v2271 = vunpack.c.l.b16 %v2077
  %v2272 = vunpack.c.l.b16 %v2078
  %v2273 = vunpack.c.l.b16 %v2079
  %v2274 = vunpack.c.l.b16 %v2080
  %v2275 = vunpack.c.l.b16 %v2081
  %v2276 = vunpack.c.l.b16 %v2082
  %v2277 = vunpack.c.l.b16 %v2083
  %v2278 = vunpack.c.l.b16 %v2084
  %v2279 = vunpack.c.l.b16 %v2085
  %v2280 = vunpack.c.l.b16 %v2086
  %v2281 = vunpack.c.l.b16 %v2087
  %v2282 = vunpack.c.l.b16 %v2088
  %v2283 = vunpack.c.l.b16 %v2089
  %v2284 = vunpack.c.l.b16 %v2090
  %v2285 = vpack.c.b16 %v2270, %v2269
  %v2286 = vpack.c.b16 %v2272, %v2271
  %v2287 = vpack.c.b16 %v2274, %v2273
  %v2288 = vpack.c.b16 %v2276, %v2275
  %v2289 = vpack.c.b16 %v2278, %v2277
  %v2290 = vpack.c.b16 %v2280, %v2279
  %v2291 = vpack.c.b16 %v2282, %v2281
  %v2292 = vpack.c.b16 %v2284, %v2283
  %2301 = vmatprep.subr.bf16.mxu0 0
  %2302 = vmatpush1.bf16.msra.mxu0 %v2285
  %2303 = vmatprep.subr.bf16.mxu0 0
  %2304 = vmatpush1.bf16.msra.mxu0 %v2286
  %2305 = vmatprep.subr.bf16.mxu0 0
  %2306 = vmatpush1.bf16.msra.mxu0 %v2287
  %2307 = vmatprep.subr.bf16.mxu0 0
  %2308 = vmatpush1.bf16.msra.mxu0 %v2288
  %2309 = vmatprep.subr.bf16.mxu0 0
  %2310 = vmatpush1.bf16.msra.mxu0 %v2289
  %2311 = vmatprep.subr.bf16.mxu0 0
  %2312 = vmatpush1.bf16.msra.mxu0 %v2290
  %2313 = vmatprep.subr.bf16.mxu0 0
  %2314 = vmatpush1.bf16.msra.mxu0 %v2291
  %2315 = vmatprep.subr.bf16.mxu0 0
  %2316 = vmatpush1.bf16.msra.mxu0 %v2292
  %2317 = vmatprep.subr.bf16.mxu0 0
  %2318 = vmatpush1.bf16.msra.mxu0 0
  %2319 = vmatprep.subr.bf16.mxu0 0
  %2320 = vmatpush1.bf16.msra.mxu0 0
  %2321 = vmatprep.subr.bf16.mxu0 0
  %2322 = vmatpush1.bf16.msra.mxu0 0
  %2323 = vmatprep.subr.bf16.mxu0 0
  %2324 = vmatpush1.bf16.msra.mxu0 0
  %2325 = vmatprep.subr.bf16.mxu0 0
  %2326 = vmatpush1.bf16.msra.mxu0 0
  %2327 = vmatprep.subr.bf16.mxu0 0
  %2328 = vmatpush1.bf16.msra.mxu0 0
  %2329 = vmatprep.subr.bf16.mxu0 0
  %2330 = vmatpush1.bf16.msra.mxu0 0
  %2331 = vmatprep.subr.bf16.mxu0 0
  %2332 = vmatpush1.bf16.msra.mxu0 0
  %2333 = vmatprep.mubr.bf16.mxu0 0
  %2334 = vmatmul.mubr.bf16.gmra.mrb[0].mxu0 %v510
  %v2335 = vpop.f32.mrb[0].mxu0
  %v2336 = vadd.f32 %v2191, %v2335
  %v2337 = vpop.f32.mrb[0].mxu0
  %v2338 = vpop.f32.mrb[0].mxu0
  %v2339 = vadd.f32 %v2194, %v2338
  %v2340 = vpop.f32.mrb[0].mxu0
  %2341 = vmatprep.mubr.bf16.mxu0 0
  %2342 = vmatmul.mubr.bf16.gmra.mrb[0].mxu0 %v511
  %v2343 = vpop.f32.mrb[0].mxu0
  %v2344 = vadd.f32 %v2199, %v2343
  %v2345 = vpop.f32.mrb[0].mxu0
  %v2346 = vpop.f32.mrb[0].mxu0
  %v2347 = vadd.f32 %v2202, %v2346
  %v2348 = vpop.f32.mrb[0].mxu0
  %2349 = vmatprep.mubr.bf16.mxu0 0
  %2350 = vmatmul.mubr.bf16.gmra.mrb[0].mxu0 %v512
  %v2351 = vpop.f32.mrb[0].mxu0
  %v2352 = vadd.f32 %v2207, %v2351
  %v2353 = vpop.f32.mrb[0].mxu0
  %v2354 = vpop.f32.mrb[0].mxu0
  %v2355 = vadd.f32 %v2210, %v2354
  %v2356 = vpop.f32.mrb[0].mxu0
  %2357 = vmatprep.mubr.bf16.mxu0 0
  %2358 = vmatmul.mubr.bf16.gmra.mrb[0].mxu0 %v513
  %v2359 = vpop.f32.mrb[0].mxu0
  %v2360 = vadd.f32 %v2215, %v2359
  %v2361 = vpop.f32.mrb[0].mxu0
  %v2362 = vpop.f32.mrb[0].mxu0
  %v2363 = vadd.f32 %v2218, %v2362
  %v2364 = vpop.f32.mrb[0].mxu0
  %2365 = vmatprep.mubr.bf16.mxu0 0
  %2366 = vmatmul.mubr.bf16.gmra.mrb[0].mxu0 %v514
  %v2367 = vpop.f32.mrb[0].mxu0
  %v2368 = vadd.f32 %v2223, %v2367
  %v2369 = vpop.f32.mrb[0].mxu0
  %v2370 = vpop.f32.mrb[0].mxu0
  %v2371 = vadd.f32 %v2226, %v2370
  %v2372 = vpop.f32.mrb[0].mxu0
  %2373 = vmatprep.mubr.bf16.mxu0 0
  %2374 = vmatmul.mubr.bf16.gmra.mrb[0].mxu0 %v515
  %v2375 = vpop.f32.mrb[0].mxu0
  %v2376 = vadd.f32 %v2231, %v2375
  %v2377 = vpop.f32.mrb[0].mxu0
  %v2378 = vpop.f32.mrb[0].mxu0
  %v2379 = vadd.f32 %v2234, %v2378
  %v2380 = vpop.f32.mrb[0].mxu0
  %2381 = vmatprep.mubr.bf16.mxu0 0
  %2382 = vmatmul.mubr.bf16.gmra.mrb[0].mxu0 %v516
  %v2383 = vpop.f32.mrb[0].mxu0
  %v2384 = vadd.f32 %v2239, %v2383
  %v2385 = vpop.f32.mrb[0].mxu0
  %v2386 = vpop.f32.mrb[0].mxu0
  %v2387 = vadd.f32 %v2242, %v2386
  %v2388 = vpop.f32.mrb[0].mxu0
  %2389 = vmatprep.mubr.bf16.mxu0 0
  %2390 = vmatmul.mubr.bf16.gmra.mrb[0].mxu0 %v517
  %v2391 = vpop.f32.mrb[0].mxu0
  %v2392 = vadd.f32 %v2247, %v2391
  %v2393 = vpop.f32.mrb[0].mxu0
  %v2394 = vpop.f32.mrb[0].mxu0
  %v2395 = vadd.f32 %v2250, %v2394
  %v2396 = vpop.f32.mrb[0].mxu0
  %2397 = vdwg.mxu0
  %s2398 = scalar_lea.vmem %s5, 128
  %v2399 = vld [vmem:[%s2398] sm:$0xf]
  %v2400 = vld [vmem:[%s2398 + $0x4] sm:$0xf]
  %v2401 = vld [vmem:[%s2398 + $0x8] sm:$0xf]
  %v2402 = vld [vmem:[%s2398 + $0xc] sm:$0xf]
  %v2403 = vld [vmem:[%s2398 + $0x10] sm:$0xf]
  %v2404 = vld [vmem:[%s2398 + $0x14] sm:$0xf]
  %v2405 = vld [vmem:[%s2398 + $0x18] sm:$0xf]
  %v2406 = vld [vmem:[%s2398 + $0x1c] sm:$0xf]
  %v2407 = vld [vmem:[%s2398 + $0x20] sm:$0xf]
  %v2408 = vld [vmem:[%s2398 + $0x24] sm:$0xf]
  %v2409 = vld [vmem:[%s2398 + $0x28] sm:$0xf]
  %v2410 = vld [vmem:[%s2398 + $0x2c] sm:$0xf]
  %v2411 = vld [vmem:[%s2398 + $0x30] sm:$0xf]
  %v2412 = vld [vmem:[%s2398 + $0x34] sm:$0xf]
  %v2413 = vld [vmem:[%s2398 + $0x38] sm:$0xf]
  %v2414 = vld [vmem:[%s2398 + $0x3c] sm:$0xf]
  %v2431 = vunpack.c.l.b16 %v2399
  %v2432 = vunpack.c.l.b16 %v2400
  %v2433 = vunpack.c.l.b16 %v2401
  %v2434 = vunpack.c.l.b16 %v2402
  %v2435 = vunpack.c.l.b16 %v2403
  %v2436 = vunpack.c.l.b16 %v2404
  %v2437 = vunpack.c.l.b16 %v2405
  %v2438 = vunpack.c.l.b16 %v2406
  %v2439 = vunpack.c.l.b16 %v2407
  %v2440 = vunpack.c.l.b16 %v2408
  %v2441 = vunpack.c.l.b16 %v2409
  %v2442 = vunpack.c.l.b16 %v2410
  %v2443 = vunpack.c.l.b16 %v2411
  %v2444 = vunpack.c.l.b16 %v2412
  %v2445 = vunpack.c.l.b16 %v2413
  %v2446 = vunpack.c.l.b16 %v2414
  %v2447 = vpack.c.b16 %v2432, %v2431
  %v2448 = vpack.c.b16 %v2434, %v2433
  %v2449 = vpack.c.b16 %v2436, %v2435
  %v2450 = vpack.c.b16 %v2438, %v2437
  %v2451 = vpack.c.b16 %v2440, %v2439
  %v2452 = vpack.c.b16 %v2442, %v2441
  %v2453 = vpack.c.b16 %v2444, %v2443
  %v2454 = vpack.c.b16 %v2446, %v2445
  %2463 = vmatprep.subr.bf16.mxu0 0
  %2464 = vmatpush1.bf16.msra.mxu0 %v2447
  %2465 = vmatprep.subr.bf16.mxu0 0
  %2466 = vmatpush1.bf16.msra.mxu0 %v2448
  %2467 = vmatprep.subr.bf16.mxu0 0
  %2468 = vmatpush1.bf16.msra.mxu0 %v2449
  %2469 = vmatprep.subr.bf16.mxu0 0
  %2470 = vmatpush1.bf16.msra.mxu0 %v2450
  %2471 = vmatprep.subr.bf16.mxu0 0
  %2472 = vmatpush1.bf16.msra.mxu0 %v2451
  %2473 = vmatprep.subr.bf16.mxu0 0
  %2474 = vmatpush1.bf16.msra.mxu0 %v2452
  %2475 = vmatprep.subr.bf16.mxu0 0
  %2476 = vmatpush1.bf16.msra.mxu0 %v2453
  %2477 = vmatprep.subr.bf16.mxu0 0
  %2478 = vmatpush1.bf16.msra.mxu0 %v2454
  %2479 = vmatprep.subr.bf16.mxu0 0
  %2480 = vmatpush1.bf16.msra.mxu0 0
  %2481 = vmatprep.subr.bf16.mxu0 0
  %2482 = vmatpush1.bf16.msra.mxu0 0
  %2483 = vmatprep.subr.bf16.mxu0 0
  %2484 = vmatpush1.bf16.msra.mxu0 0
  %2485 = vmatprep.subr.bf16.mxu0 0
  %2486 = vmatpush1.bf16.msra.mxu0 0
  %2487 = vmatprep.subr.bf16.mxu0 0
  %2488 = vmatpush1.bf16.msra.mxu0 0
  %2489 = vmatprep.subr.bf16.mxu0 0
  %2490 = vmatpush1.bf16.msra.mxu0 0
  %2491 = vmatprep.subr.bf16.mxu0 0
  %2492 = vmatpush1.bf16.msra.mxu0 0
  %2493 = vmatprep.subr.bf16.mxu0 0
  %2494 = vmatpush1.bf16.msra.mxu0 0
  %2495 = vmatprep.mubr.bf16.mxu0 0
  %2496 = vmatmul.mubr.bf16.gmra.mrb[0].mxu0 %v795
  %v2497 = vpop.f32.mrb[0].mxu0
  %v2498 = vadd.f32 0.0, %v2497
  %v2499 = vpop.f32.mrb[0].mxu0
  %v2500 = vpop.f32.mrb[0].mxu0
  %v2501 = vadd.f32 0.0, %v2500
  %v2502 = vpop.f32.mrb[0].mxu0
  %2503 = vmatprep.mubr.bf16.mxu0 0
  %2504 = vmatmul.mubr.bf16.gmra.mrb[0].mxu0 %v796
  %v2505 = vpop.f32.mrb[0].mxu0
  %v2506 = vadd.f32 0.0, %v2505
  %v2507 = vpop.f32.mrb[0].mxu0
  %v2508 = vpop.f32.mrb[0].mxu0
  %v2509 = vadd.f32 0.0, %v2508
  %v2510 = vpop.f32.mrb[0].mxu0
  %2511 = vmatprep.mubr.bf16.mxu0 0
  %2512 = vmatmul.mubr.bf16.gmra.mrb[0].mxu0 %v797
  %v2513 = vpop.f32.mrb[0].mxu0
  %v2514 = vadd.f32 0.0, %v2513
  %v2515 = vpop.f32.mrb[0].mxu0
  %v2516 = vpop.f32.mrb[0].mxu0
  %v2517 = vadd.f32 0.0, %v2516
  %v2518 = vpop.f32.mrb[0].mxu0
  %2519 = vmatprep.mubr.bf16.mxu0 0
  %2520 = vmatmul.mubr.bf16.gmra.mrb[0].mxu0 %v798
  %v2521 = vpop.f32.mrb[0].mxu0
  %v2522 = vadd.f32 0.0, %v2521
  %v2523 = vpop.f32.mrb[0].mxu0
  %v2524 = vpop.f32.mrb[0].mxu0
  %v2525 = vadd.f32 0.0, %v2524
  %v2526 = vpop.f32.mrb[0].mxu0
  %2527 = vmatprep.mubr.bf16.mxu0 0
  %2528 = vmatmul.mubr.bf16.gmra.mrb[0].mxu0 %v799
  %v2529 = vpop.f32.mrb[0].mxu0
  %v2530 = vadd.f32 0.0, %v2529
  %v2531 = vpop.f32.mrb[0].mxu0
  %v2532 = vpop.f32.mrb[0].mxu0
  %v2533 = vadd.f32 0.0, %v2532
  %v2534 = vpop.f32.mrb[0].mxu0
  %2535 = vmatprep.mubr.bf16.mxu0 0
  %2536 = vmatmul.mubr.bf16.gmra.mrb[0].mxu0 %v800
  %v2537 = vpop.f32.mrb[0].mxu0
  %v2538 = vadd.f32 0.0, %v2537
  %v2539 = vpop.f32.mrb[0].mxu0
  %v2540 = vpop.f32.mrb[0].mxu0
  %v2541 = vadd.f32 0.0, %v2540
  %v2542 = vpop.f32.mrb[0].mxu0
  %2543 = vmatprep.mubr.bf16.mxu0 0
  %2544 = vmatmul.mubr.bf16.gmra.mrb[0].mxu0 %v801
  %v2545 = vpop.f32.mrb[0].mxu0
  %v2546 = vadd.f32 0.0, %v2545
  %v2547 = vpop.f32.mrb[0].mxu0
  %v2548 = vpop.f32.mrb[0].mxu0
  %v2549 = vadd.f32 0.0, %v2548
  %v2550 = vpop.f32.mrb[0].mxu0
  %2551 = vmatprep.mubr.bf16.mxu0 0
  %2552 = vmatmul.mubr.bf16.gmra.mrb[0].mxu0 %v802
  %v2553 = vpop.f32.mrb[0].mxu0
  %v2554 = vadd.f32 0.0, %v2553
  %v2555 = vpop.f32.mrb[0].mxu0
  %v2556 = vpop.f32.mrb[0].mxu0
  %v2557 = vadd.f32 0.0, %v2556
  %v2558 = vpop.f32.mrb[0].mxu0
  %2559 = vdwg.mxu0
  %v2560 = vadd.f32 %v2336, %v2498
  %v2561 = vadd.f32 %v2339, %v2501
  %v2562 = vadd.f32 %v2344, %v2506
  %v2563 = vadd.f32 %v2347, %v2509
  %v2564 = vadd.f32 %v2352, %v2514
  %v2565 = vadd.f32 %v2355, %v2517
  %v2566 = vadd.f32 %v2360, %v2522
  %v2567 = vadd.f32 %v2363, %v2525
  %v2568 = vadd.f32 %v2368, %v2530
  %v2569 = vadd.f32 %v2371, %v2533
  %v2570 = vadd.f32 %v2376, %v2538
  %v2571 = vadd.f32 %v2379, %v2541
  %v2572 = vadd.f32 %v2384, %v2546
  %v2573 = vadd.f32 %v2387, %v2549
  %v2574 = vadd.f32 %v2392, %v2554
  %v2575 = vadd.f32 %v2395, %v2557
  %s2576 = scalar_lea.vmem %s5, 192
  %v2577 = vld [vmem:[%s2576] sm:$0xf]
  %v2578 = vld [vmem:[%s2576 + $0x4] sm:$0xf]
  %v2579 = vld [vmem:[%s2576 + $0x8] sm:$0xf]
  %v2580 = vld [vmem:[%s2576 + $0xc] sm:$0xf]
  %v2581 = vld [vmem:[%s2576 + $0x10] sm:$0xf]
  %v2582 = vld [vmem:[%s2576 + $0x14] sm:$0xf]
  %v2583 = vld [vmem:[%s2576 + $0x18] sm:$0xf]
  %v2584 = vld [vmem:[%s2576 + $0x1c] sm:$0xf]
  %v2585 = vld [vmem:[%s2576 + $0x20] sm:$0xf]
  %v2586 = vld [vmem:[%s2576 + $0x24] sm:$0xf]
  %v2587 = vld [vmem:[%s2576 + $0x28] sm:$0xf]
  %v2588 = vld [vmem:[%s2576 + $0x2c] sm:$0xf]
  %v2589 = vld [vmem:[%s2576 + $0x30] sm:$0xf]
  %v2590 = vld [vmem:[%s2576 + $0x34] sm:$0xf]
  %v2591 = vld [vmem:[%s2576 + $0x38] sm:$0xf]
  %v2592 = vld [vmem:[%s2576 + $0x3c] sm:$0xf]
  %v2609 = vunpack.c.l.b16 %v2577
  %v2610 = vunpack.c.l.b16 %v2578
  %v2611 = vunpack.c.l.b16 %v2579
  %v2612 = vunpack.c.l.b16 %v2580
  %v2613 = vunpack.c.l.b16 %v2581
  %v2614 = vunpack.c.l.b16 %v2582
  %v2615 = vunpack.c.l.b16 %v2583
  %v2616 = vunpack.c.l.b16 %v2584
  %v2617 = vunpack.c.l.b16 %v2585
  %v2618 = vunpack.c.l.b16 %v2586
  %v2619 = vunpack.c.l.b16 %v2587
  %v2620 = vunpack.c.l.b16 %v2588
  %v2621 = vunpack.c.l.b16 %v2589
  %v2622 = vunpack.c.l.b16 %v2590
  %v2623 = vunpack.c.l.b16 %v2591
  %v2624 = vunpack.c.l.b16 %v2592
  %v2625 = vpack.c.b16 %v2610, %v2609
  %v2626 = vpack.c.b16 %v2612, %v2611
  %v2627 = vpack.c.b16 %v2614, %v2613
  %v2628 = vpack.c.b16 %v2616, %v2615
  %v2629 = vpack.c.b16 %v2618, %v2617
  %v2630 = vpack.c.b16 %v2620, %v2619
  %v2631 = vpack.c.b16 %v2622, %v2621
  %v2632 = vpack.c.b16 %v2624, %v2623
  %2641 = vmatprep.subr.bf16.mxu0 0
  %2642 = vmatpush1.bf16.msra.mxu0 %v2625
  %2643 = vmatprep.subr.bf16.mxu0 0
  %2644 = vmatpush1.bf16.msra.mxu0 %v2626
  %2645 = vmatprep.subr.bf16.mxu0 0
  %2646 = vmatpush1.bf16.msra.mxu0 %v2627
  %2647 = vmatprep.subr.bf16.mxu0 0
  %2648 = vmatpush1.bf16.msra.mxu0 %v2628
  %2649 = vmatprep.subr.bf16.mxu0 0
  %2650 = vmatpush1.bf16.msra.mxu0 %v2629
  %2651 = vmatprep.subr.bf16.mxu0 0
  %2652 = vmatpush1.bf16.msra.mxu0 %v2630
  %2653 = vmatprep.subr.bf16.mxu0 0
  %2654 = vmatpush1.bf16.msra.mxu0 %v2631
  %2655 = vmatprep.subr.bf16.mxu0 0
  %2656 = vmatpush1.bf16.msra.mxu0 %v2632
  %2657 = vmatprep.subr.bf16.mxu0 0
  %2658 = vmatpush1.bf16.msra.mxu0 0
  %2659 = vmatprep.subr.bf16.mxu0 0
  %2660 = vmatpush1.bf16.msra.mxu0 0
  %2661 = vmatprep.subr.bf16.mxu0 0
  %2662 = vmatpush1.bf16.msra.mxu0 0
  %2663 = vmatprep.subr.bf16.mxu0 0
  %2664 = vmatpush1.bf16.msra.mxu0 0
  %2665 = vmatprep.subr.bf16.mxu0 0
  %2666 = vmatpush1.bf16.msra.mxu0 0
  %2667 = vmatprep.subr.bf16.mxu0 0
  %2668 = vmatpush1.bf16.msra.mxu0 0
  %2669 = vmatprep.subr.bf16.mxu0 0
  %2670 = vmatpush1.bf16.msra.mxu0 0
  %2671 = vmatprep.subr.bf16.mxu0 0
  %2672 = vmatpush1.bf16.msra.mxu0 0
  %2673 = vmatprep.mubr.bf16.mxu0 0
  %2674 = vmatmul.mubr.bf16.gmra.mrb[0].mxu0 %v1801
  %v2675 = vpop.f32.mrb[0].mxu0
  %v2676 = vadd.f32 0.0, %v2675
  %v2677 = vpop.f32.mrb[0].mxu0
  %v2678 = vpop.f32.mrb[0].mxu0
  %v2679 = vadd.f32 0.0, %v2678
  %v2680 = vpop.f32.mrb[0].mxu0
  %2681 = vmatprep.mubr.bf16.mxu0 0
  %2682 = vmatmul.mubr.bf16.gmra.mrb[0].mxu0 %v1802
  %v2683 = vpop.f32.mrb[0].mxu0
  %v2684 = vadd.f32 0.0, %v2683
  %v2685 = vpop.f32.mrb[0].mxu0
  %v2686 = vpop.f32.mrb[0].mxu0
  %v2687 = vadd.f32 0.0, %v2686
  %v2688 = vpop.f32.mrb[0].mxu0
  %2689 = vmatprep.mubr.bf16.mxu0 0
  %2690 = vmatmul.mubr.bf16.gmra.mrb[0].mxu0 %v1803
  %v2691 = vpop.f32.mrb[0].mxu0
  %v2692 = vadd.f32 0.0, %v2691
  %v2693 = vpop.f32.mrb[0].mxu0
  %v2694 = vpop.f32.mrb[0].mxu0
  %v2695 = vadd.f32 0.0, %v2694
  %v2696 = vpop.f32.mrb[0].mxu0
  %2697 = vmatprep.mubr.bf16.mxu0 0
  %2698 = vmatmul.mubr.bf16.gmra.mrb[0].mxu0 %v1804
  %v2699 = vpop.f32.mrb[0].mxu0
  %v2700 = vadd.f32 0.0, %v2699
  %v2701 = vpop.f32.mrb[0].mxu0
  %v2702 = vpop.f32.mrb[0].mxu0
  %v2703 = vadd.f32 0.0, %v2702
  %v2704 = vpop.f32.mrb[0].mxu0
  %2705 = vmatprep.mubr.bf16.mxu0 0
  %2706 = vmatmul.mubr.bf16.gmra.mrb[0].mxu0 %v1805
  %v2707 = vpop.f32.mrb[0].mxu0
  %v2708 = vadd.f32 0.0, %v2707
  %v2709 = vpop.f32.mrb[0].mxu0
  %v2710 = vpop.f32.mrb[0].mxu0
  %v2711 = vadd.f32 0.0, %v2710
  %v2712 = vpop.f32.mrb[0].mxu0
  %2713 = vmatprep.mubr.bf16.mxu0 0
  %2714 = vmatmul.mubr.bf16.gmra.mrb[0].mxu0 %v1806
  %v2715 = vpop.f32.mrb[0].mxu0
  %v2716 = vadd.f32 0.0, %v2715
  %v2717 = vpop.f32.mrb[0].mxu0
  %v2718 = vpop.f32.mrb[0].mxu0
  %v2719 = vadd.f32 0.0, %v2718
  %v2720 = vpop.f32.mrb[0].mxu0
  %2721 = vmatprep.mubr.bf16.mxu0 0
  %2722 = vmatmul.mubr.bf16.gmra.mrb[0].mxu0 %v1807
  %v2723 = vpop.f32.mrb[0].mxu0
  %v2724 = vadd.f32 0.0, %v2723
  %v2725 = vpop.f32.mrb[0].mxu0
  %v2726 = vpop.f32.mrb[0].mxu0
  %v2727 = vadd.f32 0.0, %v2726
  %v2728 = vpop.f32.mrb[0].mxu0
  %2729 = vmatprep.mubr.bf16.mxu0 0
  %2730 = vmatmul.mubr.bf16.gmra.mrb[0].mxu0 %v1808
  %v2731 = vpop.f32.mrb[0].mxu0
  %v2732 = vadd.f32 0.0, %v2731
  %v2733 = vpop.f32.mrb[0].mxu0
  %v2734 = vpop.f32.mrb[0].mxu0
  %v2735 = vadd.f32 0.0, %v2734
  %v2736 = vpop.f32.mrb[0].mxu0
  %2737 = vdwg.mxu0
  %v2738 = vadd.f32 %v2560, %v2676
  %v2739 = vadd.f32 %v2561, %v2679
  %v2740 = vadd.f32 %v2562, %v2684
  %v2741 = vadd.f32 %v2563, %v2687
  %v2742 = vadd.f32 %v2564, %v2692
  %v2743 = vadd.f32 %v2565, %v2695
  %v2744 = vadd.f32 %v2566, %v2700
  %v2745 = vadd.f32 %v2567, %v2703
  %v2746 = vadd.f32 %v2568, %v2708
  %v2747 = vadd.f32 %v2569, %v2711
  %v2748 = vadd.f32 %v2570, %v2716
  %v2749 = vadd.f32 %v2571, %v2719
  %v2750 = vadd.f32 %v2572, %v2724
  %v2751 = vadd.f32 %v2573, %v2727
  %v2752 = vadd.f32 %v2574, %v2732
  %v2753 = vadd.f32 %v2575, %v2735
  %v2754 = vld [vmem:[%s0] sm:$0xc]
  %v2755 = vld [vmem:[%s0 + $0xc] sm:$0xc]
  %v2756 = vld [vmem:[%s0 + $0x18] sm:$0xc]
  %v2757 = vld [vmem:[%s0 + $0x24] sm:$0xc]
  %v2758 = vld [vmem:[%s0 + $0x30] sm:$0xc]
  %v2759 = vld [vmem:[%s0 + $0x3c] sm:$0xc]
  %v2760 = vld [vmem:[%s0 + $0x48] sm:$0xc]
  %v2761 = vld [vmem:[%s0 + $0x54] sm:$0xc]
  %vm2778 = vcmask 1041408
  %vm2779 = vcmask 1045508
  %vm2780 = vmor %vm2778, %vm2779
  %v2781 = vrot.slane %v2754, 6
  %v2782 = vrot.slane %v2781, 4
  %v2783 = vrot.slane %v66, 6
  %v2784 = vsel %vm2780, %v2782, %v2783
  %v2785 = vrot.slane %v2783, 4
  %v2786 = vrot.slane %v1573, 6
  %v2787 = vsel %vm2780, %v2785, %v2786
  %v2788 = vrot.slane %v2755, 6
  %v2789 = vrot.slane %v2788, 4
  %v2790 = vrot.slane %v69, 6
  %v2791 = vsel %vm2780, %v2789, %v2790
  %v2792 = vrot.slane %v2790, 4
  %v2793 = vrot.slane %v1574, 6
  %v2794 = vsel %vm2780, %v2792, %v2793
  %v2795 = vrot.slane %v2756, 6
  %v2796 = vrot.slane %v2795, 4
  %v2797 = vrot.slane %v72, 6
  %v2798 = vsel %vm2780, %v2796, %v2797
  %v2799 = vrot.slane %v2797, 4
  %v2800 = vrot.slane %v1575, 6
  %v2801 = vsel %vm2780, %v2799, %v2800
  %v2802 = vrot.slane %v2757, 6
  %v2803 = vrot.slane %v2802, 4
  %v2804 = vrot.slane %v75, 6
  %v2805 = vsel %vm2780, %v2803, %v2804
  %v2806 = vrot.slane %v2804, 4
  %v2807 = vrot.slane %v1576, 6
  %v2808 = vsel %vm2780, %v2806, %v2807
  %v2809 = vrot.slane %v2758, 6
  %v2810 = vrot.slane %v2809, 4
  %v2811 = vrot.slane %v78, 6
  %v2812 = vsel %vm2780, %v2810, %v2811
  %v2813 = vrot.slane %v2811, 4
  %v2814 = vrot.slane %v1577, 6
  %v2815 = vsel %vm2780, %v2813, %v2814
  %v2816 = vrot.slane %v2759, 6
  %v2817 = vrot.slane %v2816, 4
  %v2818 = vrot.slane %v81, 6
  %v2819 = vsel %vm2780, %v2817, %v2818
  %v2820 = vrot.slane %v2818, 4
  %v2821 = vrot.slane %v1578, 6
  %v2822 = vsel %vm2780, %v2820, %v2821
  %v2823 = vrot.slane %v2760, 6
  %v2824 = vrot.slane %v2823, 4
  %v2825 = vrot.slane %v84, 6
  %v2826 = vsel %vm2780, %v2824, %v2825
  %v2827 = vrot.slane %v2825, 4
  %v2828 = vrot.slane %v1579, 6
  %v2829 = vsel %vm2780, %v2827, %v2828
  %v2830 = vrot.slane %v2761, 6
  %v2831 = vrot.slane %v2830, 4
  %v2832 = vrot.slane %v87, 6
  %v2833 = vsel %vm2780, %v2831, %v2832
  %v2834 = vrot.slane %v2832, 4
  %v2835 = vrot.slane %v1580, 6
  %v2836 = vsel %vm2780, %v2834, %v2835
  %s2837 = scalar_lea.vmem %s5, 256
  %v2838 = vld [vmem:[%s2837] sm:$0xf]
  %v2839 = vld [vmem:[%s2837 + $0x4] sm:$0xf]
  %v2840 = vld [vmem:[%s2837 + $0x8] sm:$0xf]
  %v2841 = vld [vmem:[%s2837 + $0xc] sm:$0xf]
  %v2842 = vld [vmem:[%s2837 + $0x10] sm:$0xf]
  %v2843 = vld [vmem:[%s2837 + $0x14] sm:$0xf]
  %v2844 = vld [vmem:[%s2837 + $0x18] sm:$0xf]
  %v2845 = vld [vmem:[%s2837 + $0x1c] sm:$0xf]
  %v2846 = vld [vmem:[%s2837 + $0x20] sm:$0xf]
  %v2847 = vld [vmem:[%s2837 + $0x24] sm:$0xf]
  %v2848 = vld [vmem:[%s2837 + $0x28] sm:$0xf]
  %v2849 = vld [vmem:[%s2837 + $0x2c] sm:$0xf]
  %v2850 = vld [vmem:[%s2837 + $0x30] sm:$0xf]
  %v2851 = vld [vmem:[%s2837 + $0x34] sm:$0xf]
  %v2852 = vld [vmem:[%s2837 + $0x38] sm:$0xf]
  %v2853 = vld [vmem:[%s2837 + $0x3c] sm:$0xf]
  %v2854 = vunpack.c.l.b16 %v2784
  %v2855 = vunpack.c.l.b16 %v2787
  %v2856 = vunpack.c.l.b16 %v2791
  %v2857 = vunpack.c.l.b16 %v2794
  %v2858 = vunpack.c.l.b16 %v2798
  %v2859 = vunpack.c.l.b16 %v2801
  %v2860 = vunpack.c.l.b16 %v2805
  %v2861 = vunpack.c.l.b16 %v2808
  %v2862 = vunpack.c.l.b16 %v2812
  %v2863 = vunpack.c.l.b16 %v2815
  %v2864 = vunpack.c.l.b16 %v2819
  %v2865 = vunpack.c.l.b16 %v2822
  %v2866 = vunpack.c.l.b16 %v2826
  %v2867 = vunpack.c.l.b16 %v2829
  %v2868 = vunpack.c.l.b16 %v2833
  %v2869 = vunpack.c.l.b16 %v2836
  %v2870 = vpack.c.b16 %v2855, %v2854
  %v2871 = vpack.c.b16 %v2857, %v2856
  %v2872 = vpack.c.b16 %v2859, %v2858
  %v2873 = vpack.c.b16 %v2861, %v2860
  %v2874 = vpack.c.b16 %v2863, %v2862
  %v2875 = vpack.c.b16 %v2865, %v2864
  %v2876 = vpack.c.b16 %v2867, %v2866
  %v2877 = vpack.c.b16 %v2869, %v2868
  %v2902 = vunpack.c.l.b16 %v2838
  %v2903 = vunpack.c.l.b16 %v2839
  %v2904 = vunpack.c.l.b16 %v2840
  %v2905 = vunpack.c.l.b16 %v2841
  %v2906 = vunpack.c.l.b16 %v2842
  %v2907 = vunpack.c.l.b16 %v2843
  %v2908 = vunpack.c.l.b16 %v2844
  %v2909 = vunpack.c.l.b16 %v2845
  %v2910 = vunpack.c.l.b16 %v2846
  %v2911 = vunpack.c.l.b16 %v2847
  %v2912 = vunpack.c.l.b16 %v2848
  %v2913 = vunpack.c.l.b16 %v2849
  %v2914 = vunpack.c.l.b16 %v2850
  %v2915 = vunpack.c.l.b16 %v2851
  %v2916 = vunpack.c.l.b16 %v2852
  %v2917 = vunpack.c.l.b16 %v2853
  %v2918 = vpack.c.b16 %v2903, %v2902
  %v2919 = vpack.c.b16 %v2905, %v2904
  %v2920 = vpack.c.b16 %v2907, %v2906
  %v2921 = vpack.c.b16 %v2909, %v2908
  %v2922 = vpack.c.b16 %v2911, %v2910
  %v2923 = vpack.c.b16 %v2913, %v2912
  %v2924 = vpack.c.b16 %v2915, %v2914
  %v2925 = vpack.c.b16 %v2917, %v2916
  %2934 = vmatprep.subr.bf16.mxu0 0
  %2935 = vmatpush1.bf16.msra.mxu0 %v2918
  %2936 = vmatprep.subr.bf16.mxu0 0
  %2937 = vmatpush1.bf16.msra.mxu0 %v2919
  %2938 = vmatprep.subr.bf16.mxu0 0
  %2939 = vmatpush1.bf16.msra.mxu0 %v2920
  %2940 = vmatprep.subr.bf16.mxu0 0
  %2941 = vmatpush1.bf16.msra.mxu0 %v2921
  %2942 = vmatprep.subr.bf16.mxu0 0
  %2943 = vmatpush1.bf16.msra.mxu0 %v2922
  %2944 = vmatprep.subr.bf16.mxu0 0
  %2945 = vmatpush1.bf16.msra.mxu0 %v2923
  %2946 = vmatprep.subr.bf16.mxu0 0
  %2947 = vmatpush1.bf16.msra.mxu0 %v2924
  %2948 = vmatprep.subr.bf16.mxu0 0
  %2949 = vmatpush1.bf16.msra.mxu0 %v2925
  %2950 = vmatprep.subr.bf16.mxu0 0
  %2951 = vmatpush1.bf16.msra.mxu0 0
  %2952 = vmatprep.subr.bf16.mxu0 0
  %2953 = vmatpush1.bf16.msra.mxu0 0
  %2954 = vmatprep.subr.bf16.mxu0 0
  %2955 = vmatpush1.bf16.msra.mxu0 0
  %2956 = vmatprep.subr.bf16.mxu0 0
  %2957 = vmatpush1.bf16.msra.mxu0 0
  %2958 = vmatprep.subr.bf16.mxu0 0
  %2959 = vmatpush1.bf16.msra.mxu0 0
  %2960 = vmatprep.subr.bf16.mxu0 0
  %2961 = vmatpush1.bf16.msra.mxu0 0
  %2962 = vmatprep.subr.bf16.mxu0 0
  %2963 = vmatpush1.bf16.msra.mxu0 0
  %2964 = vmatprep.subr.bf16.mxu0 0
  %2965 = vmatpush1.bf16.msra.mxu0 0
  %2966 = vmatprep.mubr.bf16.mxu0 0
  %2967 = vmatmul.mubr.bf16.gmra.mrb[0].mxu0 %v2870
  %v2968 = vpop.f32.mrb[0].mxu0
  %v2969 = vadd.f32 0.0, %v2968
  %v2970 = vpop.f32.mrb[0].mxu0
  %v2971 = vpop.f32.mrb[0].mxu0
  %v2972 = vadd.f32 0.0, %v2971
  %v2973 = vpop.f32.mrb[0].mxu0
  %2974 = vmatprep.mubr.bf16.mxu0 0
  %2975 = vmatmul.mubr.bf16.gmra.mrb[0].mxu0 %v2871
  %v2976 = vpop.f32.mrb[0].mxu0
  %v2977 = vadd.f32 0.0, %v2976
  %v2978 = vpop.f32.mrb[0].mxu0
  %v2979 = vpop.f32.mrb[0].mxu0
  %v2980 = vadd.f32 0.0, %v2979
  %v2981 = vpop.f32.mrb[0].mxu0
  %2982 = vmatprep.mubr.bf16.mxu0 0
  %2983 = vmatmul.mubr.bf16.gmra.mrb[0].mxu0 %v2872
  %v2984 = vpop.f32.mrb[0].mxu0
  %v2985 = vadd.f32 0.0, %v2984
  %v2986 = vpop.f32.mrb[0].mxu0
  %v2987 = vpop.f32.mrb[0].mxu0
  %v2988 = vadd.f32 0.0, %v2987
  %v2989 = vpop.f32.mrb[0].mxu0
  %2990 = vmatprep.mubr.bf16.mxu0 0
  %2991 = vmatmul.mubr.bf16.gmra.mrb[0].mxu0 %v2873
  %v2992 = vpop.f32.mrb[0].mxu0
  %v2993 = vadd.f32 0.0, %v2992
  %v2994 = vpop.f32.mrb[0].mxu0
  %v2995 = vpop.f32.mrb[0].mxu0
  %v2996 = vadd.f32 0.0, %v2995
  %v2997 = vpop.f32.mrb[0].mxu0
  %2998 = vmatprep.mubr.bf16.mxu0 0
  %2999 = vmatmul.mubr.bf16.gmra.mrb[0].mxu0 %v2874
  %v3000 = vpop.f32.mrb[0].mxu0
  %v3001 = vadd.f32 0.0, %v3000
  %v3002 = vpop.f32.mrb[0].mxu0
  %v3003 = vpop.f32.mrb[0].mxu0
  %v3004 = vadd.f32 0.0, %v3003
  %v3005 = vpop.f32.mrb[0].mxu0
  %3006 = vmatprep.mubr.bf16.mxu0 0
  %3007 = vmatmul.mubr.bf16.gmra.mrb[0].mxu0 %v2875
  %v3008 = vpop.f32.mrb[0].mxu0
  %v3009 = vadd.f32 0.0, %v3008
  %v3010 = vpop.f32.mrb[0].mxu0
  %v3011 = vpop.f32.mrb[0].mxu0
  %v3012 = vadd.f32 0.0, %v3011
  %v3013 = vpop.f32.mrb[0].mxu0
  %3014 = vmatprep.mubr.bf16.mxu0 0
  %3015 = vmatmul.mubr.bf16.gmra.mrb[0].mxu0 %v2876
  %v3016 = vpop.f32.mrb[0].mxu0
  %v3017 = vadd.f32 0.0, %v3016
  %v3018 = vpop.f32.mrb[0].mxu0
  %v3019 = vpop.f32.mrb[0].mxu0
  %v3020 = vadd.f32 0.0, %v3019
  %v3021 = vpop.f32.mrb[0].mxu0
  %3022 = vmatprep.mubr.bf16.mxu0 0
  %3023 = vmatmul.mubr.bf16.gmra.mrb[0].mxu0 %v2877
  %v3024 = vpop.f32.mrb[0].mxu0
  %v3025 = vadd.f32 0.0, %v3024
  %v3026 = vpop.f32.mrb[0].mxu0
  %v3027 = vpop.f32.mrb[0].mxu0
  %v3028 = vadd.f32 0.0, %v3027
  %v3029 = vpop.f32.mrb[0].mxu0
  %3030 = vdwg.mxu0
  %v3031 = vadd.f32 %v2738, %v2969
  %v3032 = vadd.f32 %v2739, %v2972
  %v3033 = vadd.f32 %v2740, %v2977
  %v3034 = vadd.f32 %v2741, %v2980
  %v3035 = vadd.f32 %v2742, %v2985
  %v3036 = vadd.f32 %v2743, %v2988
  %v3037 = vadd.f32 %v2744, %v2993
  %v3038 = vadd.f32 %v2745, %v2996
  %v3039 = vadd.f32 %v2746, %v3001
  %v3040 = vadd.f32 %v2747, %v3004
  %v3041 = vadd.f32 %v2748, %v3009
  %v3042 = vadd.f32 %v2749, %v3012
  %v3043 = vadd.f32 %v2750, %v3017
  %v3044 = vadd.f32 %v2751, %v3020
  %v3045 = vadd.f32 %v2752, %v3025
  %v3046 = vadd.f32 %v2753, %v3028
  %vm3047 = vcmp.lt.s32.totalorder %v973, 12
  %vm3048 = vcmp.lt.s32.totalorder %v974, 12
  %v3049 = vsel %vm3047, %v3031, -inf
  %v3050 = vsel %vm3048, %v3032, -inf
  %v3051 = vsel %vm3047, %v3033, -inf
  %v3052 = vsel %vm3048, %v3034, -inf
  %v3053 = vsel %vm3047, %v3035, -inf
  %v3054 = vsel %vm3048, %v3036, -inf
  %v3055 = vsel %vm3047, %v3037, -inf
  %v3056 = vsel %vm3048, %v3038, -inf
  %v3057 = vsel %vm3047, %v3039, -inf
  %v3058 = vsel %vm3048, %v3040, -inf
  %v3059 = vsel %vm3047, %v3041, -inf
  %v3060 = vsel %vm3048, %v3042, -inf
  %v3061 = vsel %vm3047, %v3043, -inf
  %v3062 = vsel %vm3048, %v3044, -inf
  %v3063 = vsel %vm3047, %v3045, -inf
  %v3064 = vsel %vm3048, %v3046, -inf
  %v3065 = vmax.f32 %v3049, %v3050
  %v3066 = vrot.slane %v3065, 4
  %v3067 = vmax.f32 %v3065, %v3066
  %v3068 = vrot.slane %v3067, 2
  %v3069 = vmax.f32 %v3067, %v3068
  %v3070 = vrot.slane %v3069, 1
  %v3071 = vmax.f32 %v3069, %v3070
  %v3072 = vmax.f32 %v3051, %v3052
  %v3073 = vrot.slane %v3072, 4
  %v3074 = vmax.f32 %v3072, %v3073
  %v3075 = vrot.slane %v3074, 2
  %v3076 = vmax.f32 %v3074, %v3075
  %v3077 = vrot.slane %v3076, 1
  %v3078 = vmax.f32 %v3076, %v3077
  %v3079 = vmax.f32 %v3053, %v3054
  %v3080 = vrot.slane %v3079, 4
  %v3081 = vmax.f32 %v3079, %v3080
  %v3082 = vrot.slane %v3081, 2
  %v3083 = vmax.f32 %v3081, %v3082
  %v3084 = vrot.slane %v3083, 1
  %v3085 = vmax.f32 %v3083, %v3084
  %v3086 = vmax.f32 %v3055, %v3056
  %v3087 = vrot.slane %v3086, 4
  %v3088 = vmax.f32 %v3086, %v3087
  %v3089 = vrot.slane %v3088, 2
  %v3090 = vmax.f32 %v3088, %v3089
  %v3091 = vrot.slane %v3090, 1
  %v3092 = vmax.f32 %v3090, %v3091
  %v3093 = vmax.f32 %v3057, %v3058
  %v3094 = vrot.slane %v3093, 4
  %v3095 = vmax.f32 %v3093, %v3094
  %v3096 = vrot.slane %v3095, 2
  %v3097 = vmax.f32 %v3095, %v3096
  %v3098 = vrot.slane %v3097, 1
  %v3099 = vmax.f32 %v3097, %v3098
  %v3100 = vmax.f32 %v3059, %v3060
  %v3101 = vrot.slane %v3100, 4
  %v3102 = vmax.f32 %v3100, %v3101
  %v3103 = vrot.slane %v3102, 2
  %v3104 = vmax.f32 %v3102, %v3103
  %v3105 = vrot.slane %v3104, 1
  %v3106 = vmax.f32 %v3104, %v3105
  %v3107 = vmax.f32 %v3061, %v3062
  %v3108 = vrot.slane %v3107, 4
  %v3109 = vmax.f32 %v3107, %v3108
  %v3110 = vrot.slane %v3109, 2
  %v3111 = vmax.f32 %v3109, %v3110
  %v3112 = vrot.slane %v3111, 1
  %v3113 = vmax.f32 %v3111, %v3112
  %v3114 = vmax.f32 %v3063, %v3064
  %v3115 = vrot.slane %v3114, 4
  %v3116 = vmax.f32 %v3114, %v3115
  %v3117 = vrot.slane %v3116, 2
  %v3118 = vmax.f32 %v3116, %v3117
  %v3119 = vrot.slane %v3118, 1
  %v3120 = vmax.f32 %v3118, %v3119
  %v3121 = vld [vmem:[%s6] sm:$0x1]
  %v3123 = vlaneseq
  %v3124 = vshrl.u32 %v3123, 7
  %v3125 = vsub.s32 0, %v3124
  %v3126 = vrot.slane %v3121, %v3125
  %v3128 = vadd.f32 %v3071, %v3126
  %v3129 = vadd.f32 %v3078, %v3126
  %v3130 = vadd.f32 %v3085, %v3126
  %v3131 = vadd.f32 %v3092, %v3126
  %v3132 = vadd.f32 %v3099, %v3126
  %v3133 = vadd.f32 %v3106, %v3126
  %v3134 = vadd.f32 %v3113, %v3126
  %v3135 = vadd.f32 %v3120, %v3126
  %v3136 = vmax.f32 %v3128, 0.0
  %v3137 = vmax.f32 %v3129, 0.0
  %v3138 = vmax.f32 %v3130, 0.0
  %v3139 = vmax.f32 %v3131, 0.0
  %v3140 = vmax.f32 %v3132, 0.0
  %v3141 = vmax.f32 %v3133, 0.0
  %v3142 = vmax.f32 %v3134, 0.0
  %v3143 = vmax.f32 %v3135, 0.0
  %v3152 = vrot.slane %v1065, 7
  %vm3153 = vcmask 1041409
  %v3154 = vsel %vm3153, %v3152, %v1064
  %v3155 = vrot.slane %v1066, 6
  %vm3156 = vcmask 1042434
  %v3157 = vsel %vm3156, %v3155, %v3154
  %v3158 = vrot.slane %v1067, 5
  %vm3159 = vcmask 1043459
  %v3160 = vsel %vm3159, %v3158, %v3157
  %v3161 = vrot.slane %v1068, 4
  %vm3162 = vcmask 1044484
  %v3163 = vsel %vm3162, %v3161, %v3160
  %v3164 = vrot.slane %v1069, 3
  %vm3165 = vcmask 1045509
  %v3166 = vsel %vm3165, %v3164, %v3163
  %v3167 = vrot.slane %v1070, 2
  %vm3168 = vcmask 1046534
  %v3169 = vsel %vm3168, %v3167, %v3166
  %v3170 = vrot.slane %v1071, 1
  %vm3171 = vcmask 1047559
  %v3172 = vsel %vm3171, %v3170, %v3169
  %v3182 = vrot.slane %v2068, 7
  %v3183 = vsel %vm3153, %v3182, %v2067
  %v3184 = vrot.slane %v2069, 6
  %v3185 = vsel %vm3156, %v3184, %v3183
  %v3186 = vrot.slane %v2070, 5
  %v3187 = vsel %vm3159, %v3186, %v3185
  %v3188 = vrot.slane %v2071, 4
  %v3189 = vsel %vm3162, %v3188, %v3187
  %v3190 = vrot.slane %v2072, 3
  %v3191 = vsel %vm3165, %v3190, %v3189
  %v3192 = vrot.slane %v2073, 2
  %v3193 = vsel %vm3168, %v3192, %v3191
  %v3194 = vrot.slane %v2074, 1
  %v3195 = vsel %vm3171, %v3194, %v3193
  %v3205 = vrot.slane %v3137, 7
  %v3206 = vsel %vm3153, %v3205, %v3136
  %v3207 = vrot.slane %v3138, 6
  %v3208 = vsel %vm3156, %v3207, %v3206
  %v3209 = vrot.slane %v3139, 5
  %v3210 = vsel %vm3159, %v3209, %v3208
  %v3211 = vrot.slane %v3140, 4
  %v3212 = vsel %vm3162, %v3211, %v3210
  %v3213 = vrot.slane %v3141, 3
  %v3214 = vsel %vm3165, %v3213, %v3212
  %v3215 = vrot.slane %v3142, 2
  %v3216 = vsel %vm3168, %v3215, %v3214
  %v3217 = vrot.slane %v3143, 1
  %v3218 = vsel %vm3171, %v3217, %v3216
  %v3220 = vpack.c.bf16 %v3172, %v3172
  %v3221 = vpack.c.bf16 %v3195, %v3195
  %v3222 = vpack.c.bf16 %v3218, %v3218
  %v3223 = vld [vmem:[%s7] sm:$0xf]
  %v3224 = vld [vmem:[%s7 + $0x4] sm:$0xf]
  %v3225 = vld [vmem:[%s7 + $0x8] sm:$0xf]
  %v3226 = vld [vmem:[%s7 + $0xc] sm:$0xf]
  %v3227 = vld [vmem:[%s7 + $0x10] sm:$0xf]
  %v3228 = vld [vmem:[%s7 + $0x14] sm:$0xf]
  %v3229 = vld [vmem:[%s7 + $0x18] sm:$0xf]
  %v3230 = vld [vmem:[%s7 + $0x1c] sm:$0xf]
  %v3231 = vld [vmem:[%s7 + $0x20] sm:$0xf]
  %v3232 = vld [vmem:[%s7 + $0x24] sm:$0xf]
  %v3233 = vld [vmem:[%s7 + $0x28] sm:$0xf]
  %v3234 = vld [vmem:[%s7 + $0x2c] sm:$0xf]
  %v3235 = vld [vmem:[%s7 + $0x30] sm:$0xf]
  %v3236 = vld [vmem:[%s7 + $0x34] sm:$0xf]
  %v3237 = vld [vmem:[%s7 + $0x38] sm:$0xf]
  %v3238 = vld [vmem:[%s7 + $0x3c] sm:$0xf]
  %v3239 = vld [vmem:[%s7 + $0x40] sm:$0xf]
  %v3240 = vld [vmem:[%s7 + $0x44] sm:$0xf]
  %v3241 = vld [vmem:[%s7 + $0x48] sm:$0xf]
  %v3242 = vld [vmem:[%s7 + $0x4c] sm:$0xf]
  %v3243 = vld [vmem:[%s7 + $0x50] sm:$0xf]
  %v3244 = vld [vmem:[%s7 + $0x54] sm:$0xf]
  %v3245 = vld [vmem:[%s7 + $0x58] sm:$0xf]
  %v3246 = vld [vmem:[%s7 + $0x5c] sm:$0xf]
  %v3247 = vld [vmem:[%s7 + $0x60] sm:$0xf]
  %v3248 = vld [vmem:[%s7 + $0x64] sm:$0xf]
  %v3249 = vld [vmem:[%s7 + $0x68] sm:$0xf]
  %v3250 = vld [vmem:[%s7 + $0x6c] sm:$0xf]
  %v3251 = vld [vmem:[%s7 + $0x70] sm:$0xf]
  %v3252 = vld [vmem:[%s7 + $0x74] sm:$0xf]
  %v3253 = vld [vmem:[%s7 + $0x78] sm:$0xf]
  %v3254 = vld [vmem:[%s7 + $0x7c] sm:$0xf]
  %v3255 = vld [vmem:[%s7 + $0x80] sm:$0xf]
  %v3256 = vld [vmem:[%s7 + $0x84] sm:$0xf]
  %v3257 = vld [vmem:[%s7 + $0x88] sm:$0xf]
  %v3258 = vld [vmem:[%s7 + $0x8c] sm:$0xf]
  %v3259 = vld [vmem:[%s7 + $0x90] sm:$0xf]
  %v3260 = vld [vmem:[%s7 + $0x94] sm:$0xf]
  %v3261 = vld [vmem:[%s7 + $0x98] sm:$0xf]
  %v3262 = vld [vmem:[%s7 + $0x9c] sm:$0xf]
  %v3263 = vld [vmem:[%s7 + $0xa0] sm:$0xf]
  %v3264 = vld [vmem:[%s7 + $0xa4] sm:$0xf]
  %v3265 = vld [vmem:[%s7 + $0xa8] sm:$0xf]
  %v3266 = vld [vmem:[%s7 + $0xac] sm:$0xf]
  %v3267 = vld [vmem:[%s7 + $0xb0] sm:$0xf]
  %v3268 = vld [vmem:[%s7 + $0xb4] sm:$0xf]
  %v3269 = vld [vmem:[%s7 + $0xb8] sm:$0xf]
  %v3270 = vld [vmem:[%s7 + $0xbc] sm:$0xf]
  %v3271 = vld [vmem:[%s8] sm:$0xff]
  %v3320 = vunpack.c.l.b16 %v3223
  %v3321 = vunpack.c.l.b16 %v3224
  %v3322 = vunpack.c.l.b16 %v3225
  %v3323 = vunpack.c.l.b16 %v3226
  %v3324 = vunpack.c.l.b16 %v3227
  %v3325 = vunpack.c.l.b16 %v3228
  %v3326 = vunpack.c.l.b16 %v3229
  %v3327 = vunpack.c.l.b16 %v3230
  %v3328 = vunpack.c.l.b16 %v3231
  %v3329 = vunpack.c.l.b16 %v3232
  %v3330 = vunpack.c.l.b16 %v3233
  %v3331 = vunpack.c.l.b16 %v3234
  %v3332 = vunpack.c.l.b16 %v3235
  %v3333 = vunpack.c.l.b16 %v3236
  %v3334 = vunpack.c.l.b16 %v3237
  %v3335 = vunpack.c.l.b16 %v3238
  %v3336 = vunpack.c.l.b16 %v3239
  %v3337 = vunpack.c.l.b16 %v3240
  %v3338 = vunpack.c.l.b16 %v3241
  %v3339 = vunpack.c.l.b16 %v3242
  %v3340 = vunpack.c.l.b16 %v3243
  %v3341 = vunpack.c.l.b16 %v3244
  %v3342 = vunpack.c.l.b16 %v3245
  %v3343 = vunpack.c.l.b16 %v3246
  %v3344 = vunpack.c.l.b16 %v3247
  %v3345 = vunpack.c.l.b16 %v3248
  %v3346 = vunpack.c.l.b16 %v3249
  %v3347 = vunpack.c.l.b16 %v3250
  %v3348 = vunpack.c.l.b16 %v3251
  %v3349 = vunpack.c.l.b16 %v3252
  %v3350 = vunpack.c.l.b16 %v3253
  %v3351 = vunpack.c.l.b16 %v3254
  %v3352 = vunpack.c.l.b16 %v3255
  %v3353 = vunpack.c.l.b16 %v3256
  %v3354 = vunpack.c.l.b16 %v3257
  %v3355 = vunpack.c.l.b16 %v3258
  %v3356 = vunpack.c.l.b16 %v3259
  %v3357 = vunpack.c.l.b16 %v3260
  %v3358 = vunpack.c.l.b16 %v3261
  %v3359 = vunpack.c.l.b16 %v3262
  %v3360 = vunpack.c.l.b16 %v3263
  %v3361 = vunpack.c.l.b16 %v3264
  %v3362 = vunpack.c.l.b16 %v3265
  %v3363 = vunpack.c.l.b16 %v3266
  %v3364 = vunpack.c.l.b16 %v3267
  %v3365 = vunpack.c.l.b16 %v3268
  %v3366 = vunpack.c.l.b16 %v3269
  %v3367 = vunpack.c.l.b16 %v3270
  %v3368 = vpack.c.b16 %v3321, %v3320
  %v3369 = vpack.c.b16 %v3323, %v3322
  %v3370 = vpack.c.b16 %v3325, %v3324
  %v3371 = vpack.c.b16 %v3327, %v3326
  %v3372 = vpack.c.b16 %v3329, %v3328
  %v3373 = vpack.c.b16 %v3331, %v3330
  %v3374 = vpack.c.b16 %v3333, %v3332
  %v3375 = vpack.c.b16 %v3335, %v3334
  %v3376 = vpack.c.b16 %v3337, %v3336
  %v3377 = vpack.c.b16 %v3339, %v3338
  %v3378 = vpack.c.b16 %v3341, %v3340
  %v3379 = vpack.c.b16 %v3343, %v3342
  %v3380 = vpack.c.b16 %v3345, %v3344
  %v3381 = vpack.c.b16 %v3347, %v3346
  %v3382 = vpack.c.b16 %v3349, %v3348
  %v3383 = vpack.c.b16 %v3351, %v3350
  %v3384 = vpack.c.b16 %v3353, %v3352
  %v3385 = vpack.c.b16 %v3355, %v3354
  %v3386 = vpack.c.b16 %v3357, %v3356
  %v3387 = vpack.c.b16 %v3359, %v3358
  %v3388 = vpack.c.b16 %v3361, %v3360
  %v3389 = vpack.c.b16 %v3363, %v3362
  %v3390 = vpack.c.b16 %v3365, %v3364
  %v3391 = vpack.c.b16 %v3367, %v3366
  %3416 = vmatprep.subr.bf16.mxu0 0
  %3417 = vmatpush1.bf16.msra.mxu0 %v3368
  %3418 = vmatprep.subr.bf16.mxu0 0
  %3419 = vmatpush1.bf16.msra.mxu0 %v3369
  %3420 = vmatprep.subr.bf16.mxu0 0
  %3421 = vmatpush1.bf16.msra.mxu0 %v3370
  %3422 = vmatprep.subr.bf16.mxu0 0
  %3423 = vmatpush1.bf16.msra.mxu0 %v3371
  %3424 = vmatprep.subr.bf16.mxu0 0
  %3425 = vmatpush1.bf16.msra.mxu0 %v3372
  %3426 = vmatprep.subr.bf16.mxu0 0
  %3427 = vmatpush1.bf16.msra.mxu0 %v3373
  %3428 = vmatprep.subr.bf16.mxu0 0
  %3429 = vmatpush1.bf16.msra.mxu0 %v3374
  %3430 = vmatprep.subr.bf16.mxu0 0
  %3431 = vmatpush1.bf16.msra.mxu0 %v3375
  %3432 = vmatprep.subr.bf16.mxu0 0
  %3433 = vmatpush1.bf16.msra.mxu0 %v3376
  %3434 = vmatprep.subr.bf16.mxu0 0
  %3435 = vmatpush1.bf16.msra.mxu0 %v3377
  %3436 = vmatprep.subr.bf16.mxu0 0
  %3437 = vmatpush1.bf16.msra.mxu0 %v3378
  %3438 = vmatprep.subr.bf16.mxu0 0
  %3439 = vmatpush1.bf16.msra.mxu0 %v3379
  %3440 = vmatprep.subr.bf16.mxu0 0
  %3441 = vmatpush1.bf16.msra.mxu0 %v3380
  %3442 = vmatprep.subr.bf16.mxu0 0
  %3443 = vmatpush1.bf16.msra.mxu0 %v3381
  %3444 = vmatprep.subr.bf16.mxu0 0
  %3445 = vmatpush1.bf16.msra.mxu0 %v3382
  %3446 = vmatprep.subr.bf16.mxu0 0
  %3447 = vmatpush1.bf16.msra.mxu0 %v3383
  %3448 = vmatprep.mubr.bf16.mxu0 %v3221
  %3449 = vmatmul.mubr.bf16.gmra.mrb[0].mxu0 %v3220
  %v3450 = vpop.f32.mrb[0].mxu0
  %v3451 = vadd.f32 %v3271, %v3450
  %v3452 = vpop.f32.mrb[0].mxu0
  %v3453 = vpop.f32.mrb[0].mxu0
  %v3454 = vpop.f32.mrb[0].mxu0
  %3455 = vdwg.mxu0
  %3456 = vmatprep.subr.bf16.mxu0 0
  %3457 = vmatpush1.bf16.msra.mxu0 %v3384
  %3458 = vmatprep.subr.bf16.mxu0 0
  %3459 = vmatpush1.bf16.msra.mxu0 %v3385
  %3460 = vmatprep.subr.bf16.mxu0 0
  %3461 = vmatpush1.bf16.msra.mxu0 %v3386
  %3462 = vmatprep.subr.bf16.mxu0 0
  %3463 = vmatpush1.bf16.msra.mxu0 %v3387
  %3464 = vmatprep.subr.bf16.mxu0 0
  %3465 = vmatpush1.bf16.msra.mxu0 %v3388
  %3466 = vmatprep.subr.bf16.mxu0 0
  %3467 = vmatpush1.bf16.msra.mxu0 %v3389
  %3468 = vmatprep.subr.bf16.mxu0 0
  %3469 = vmatpush1.bf16.msra.mxu0 %v3390
  %3470 = vmatprep.subr.bf16.mxu0 0
  %3471 = vmatpush1.bf16.msra.mxu0 %v3391
  %3472 = vmatprep.subr.bf16.mxu0 0
  %3473 = vmatpush1.bf16.msra.mxu0 0
  %3474 = vmatprep.subr.bf16.mxu0 0
  %3475 = vmatpush1.bf16.msra.mxu0 0
  %3476 = vmatprep.subr.bf16.mxu0 0
  %3477 = vmatpush1.bf16.msra.mxu0 0
  %3478 = vmatprep.subr.bf16.mxu0 0
  %3479 = vmatpush1.bf16.msra.mxu0 0
  %3480 = vmatprep.subr.bf16.mxu0 0
  %3481 = vmatpush1.bf16.msra.mxu0 0
  %3482 = vmatprep.subr.bf16.mxu0 0
  %3483 = vmatpush1.bf16.msra.mxu0 0
  %3484 = vmatprep.subr.bf16.mxu0 0
  %3485 = vmatpush1.bf16.msra.mxu0 0
  %3486 = vmatprep.subr.bf16.mxu0 0
  %3487 = vmatpush1.bf16.msra.mxu0 0
  %3488 = vmatprep.mubr.bf16.mxu0 0
  %3489 = vmatmul.mubr.bf16.gmra.mrb[0].mxu0 %v3222
  %v3490 = vpop.f32.mrb[0].mxu0
  %v3491 = vadd.f32 %v3451, %v3490
  %v3492 = vpop.f32.mrb[0].mxu0
  %v3493 = vpop.f32.mrb[0].mxu0
  %v3494 = vpop.f32.mrb[0].mxu0
  %3495 = vdwg.mxu0
  %3496 = vst [vmem:[%s9] sm:$0xff] %v3491
  // Predicated region
  $region38: #{textcnn_forward.1} parent=0 // pred_check
    _
  $region39: #{textcnn_forward.1} parent=0 // pred_check_branch
    %3498 = sbr.rel (0) target = $region41
  $region40: #{textcnn_forward.1} parent=0 // pred_region
    _
  $region41: #{textcnn_forward.1} parent=0 // pred_fallthru
    _
  // Predicated region
  $region42: #{textcnn_forward.1} parent=0 // pred_check
    _
  $region43: #{textcnn_forward.1} parent=0 // pred_check_branch
    %3500 = sbr.rel (0) target = $region45
  $region44: #{textcnn_forward.1} parent=0 // pred_region
    _
  $region45: #{textcnn_forward.1} parent=0 // pred_fallthru
    _

</llo_original>
